<compile_context>
chip_gen: v5e
topology: v5e:2x2
jax: 0.10.0
libtpu: 0.0.40
codegen_flags: <defaults>
</compile_context>

<pallas_src>
import numpy as np
import jax
import jax.numpy as jnp
from jax.experimental import pallas as pl
from jax.experimental.pallas import tpu as pltpu


# ---------------------------------------------------------------------------
# helpers
# ---------------------------------------------------------------------------

def _fs(shape):
    """Full-array BlockSpec for a grid=(1,) pallas_call."""
    nd = len(shape)
    return pl.BlockSpec(shape, lambda *_: (0,) * nd)


def _make_tap_masks(N, H, W):
    """[9, M] float masks: mask[kh*3+kw, m] = 1 iff tap (kh-1, kw-1) of output
    position m is inside the image (zero-padding semantics)."""
    M = N * H * W
    m = np.arange(M)
    w = m % W
    h = (m // W) % H
    masks = np.zeros((9, M), np.float32)
    for kh in range(3):
        for kw in range(3):
            dh, dw = kh - 1, kw - 1
            ok = (h + dh >= 0) & (h + dh < H) & (w + dw >= 0) & (w + dw < W)
            masks[kh * 3 + kw] = ok.astype(np.float32)
    return jnp.asarray(masks)


# ---------------------------------------------------------------------------
# Pallas kernels
# ---------------------------------------------------------------------------

def _deconv_kernel(x_ref, w_ref, b_ref, o_ref):
    # Sub-pixel ConvTranspose2d(k=3, s=3, p=0): [72, Cpre] @ [Cpre, Mpre] + bias, ReLU.
    y = jnp.dot(w_ref[...], x_ref[...], preferred_element_type=jnp.float32)
    o_ref[...] = jnp.maximum(y + b_ref[...], 0.0)


def _make_fused_kernel(H, W, M, P):
    """Fused kernel: both 3x3-conv branches, (cur-pre)^2, 3x3 conv, 1x1 conv,
    with bias/ReLU/BatchNorm epilogues, all on [C, M] lane-dense tiles."""

    def conv3x3(xpad, w_mat, masks):
        # xpad: [Cin, M + 2P] (data at columns [P, P+M)); w_mat: [Cout, 9*Cin].
        taps = []
        for kh in range(3):
            for kw in range(3):
                s = (kh - 1) * W + (kw - 1)
                x_sl = xpad[:, P + s: P + s + M]                  # shifted window
                t = kh * 3 + kw
                taps.append(x_sl * masks[t:t + 1, :])             # zero-pad mask
        cols = jnp.concatenate(taps, axis=0)                       # im2col in VMEM
        return jnp.dot(w_mat, cols, preferred_element_type=jnp.float32)

    def bn(x, g, b):
        # training-mode BatchNorm over the M = N*H*W axis, eps = 1e-5 (biased var)
        mean = jnp.mean(x, axis=1, keepdims=True)
        var = jnp.mean(jnp.square(x - mean), axis=1, keepdims=True)
        return (x - mean) * jax.lax.rsqrt(var + 1e-5) * g + b

    def kernel(masks_ref, pre_up_ref, cur_ref,
               w_pre2_ref, g_pre2_ref, b_pre2_ref,
               w_cur1_ref, bias_cur1_ref,
               w_cur2_ref, g_cur2_ref, b_cur2_ref,
               w_res1_ref, g_res1_ref, b_res1_ref,
               w_res2_ref, g_res2_ref, b_res2_ref,
               detail_ref, cur_out_ref, pre_out_ref):
        masks = masks_ref[...]

        # --- deconv branch tail: Conv2d(8->3, pad=1, no bias) + BN ---
        pre_out = bn(conv3x3(pre_up_ref[...], w_pre2_ref[...], masks),
                     g_pre2_ref[...], b_pre2_ref[...])
        pre_out_ref[...] = pre_out

        # --- conv_sub branch: Conv2d(Cin->8)+bias+ReLU ; Conv2d(8->3)+BN ---
        y = conv3x3(cur_ref[...], w_cur1_ref[...], masks)          # [8, M]
        y = jnp.maximum(y + bias_cur1_ref[...], 0.0)
        zpad8 = jnp.zeros((8, P), jnp.float32)
        ypad = jnp.concatenate([zpad8, y, zpad8], axis=1)          # [8, M+2P]
        cur_out = bn(conv3x3(ypad, w_cur2_ref[...], masks),
                     g_cur2_ref[...], b_cur2_ref[...])
        cur_out_ref[...] = cur_out

        # --- merge: (cur - pre)^2 ; Conv2d(3->3)+BN ; Conv2d(3->1, 1x1)+BN ---
        res = jnp.square(cur_out - pre_out)                        # [3, M]
        zpad3 = jnp.zeros((3, P), jnp.float32)
        rpad = jnp.concatenate([zpad3, res, zpad3], axis=1)
        d = bn(conv3x3(rpad, w_res1_ref[...], masks),
               g_res1_ref[...], b_res1_ref[...])                   # [3, M]
        d = jnp.sum(w_res2_ref[...] * d, axis=0, keepdims=True)    # 1x1 conv -> [1, M]
        detail_ref[...] = bn(d, g_res2_ref[...], b_res2_ref[...])

    return kernel


# ---------------------------------------------------------------------------
# params (pre-packed into matmul layouts once, at init)
# ---------------------------------------------------------------------------

def init_params(key, in_channels, down_scale):
    Cpre = in_channels * down_scale
    ks = jax.random.split(key, 8)

    def he(k, shape, fan_in):
        return jax.random.normal(k, shape, jnp.float32) * jnp.sqrt(2.0 / fan_in)

    # torch layouts
    wd = he(ks[0], (Cpre, 8, 3, 3), Cpre * 9)          # ConvTranspose2d [Cin, Cout, K, K]
    bd = jax.random.normal(ks[1], (8,), jnp.float32) * 0.1
    w_pre2 = he(ks[2], (3, 8, 3, 3), 8 * 9)
    w_cur1 = he(ks[3], (8, in_channels, 3, 3), in_channels * 9)
    b_cur1 = jax.random.normal(ks[4], (8,), jnp.float32) * 0.1
    w_cur2 = he(ks[5], (3, 8, 3, 3), 8 * 9)
    w_res1 = he(ks[6], (3, 3, 3, 3), 3 * 9)
    w_res2 = he(ks[7], (1, 3, 1, 1), 3)

    def pack_conv(w):
        # [Cout, Cin, K, K] -> [Cout, K*K*Cin], column = (kh*3+kw)*Cin + ci
        Cout, Cin, K, _ = w.shape
        return jnp.transpose(w, (0, 2, 3, 1)).reshape(Cout, K * K * Cin)

    return {
        # deconv: row = cout*9 + kh*3 + kw
        "wd_r": jnp.transpose(wd, (1, 2, 3, 0)).reshape(8 * 9, Cpre),
        "bd_r": jnp.repeat(bd, 9).reshape(8 * 9, 1),
        "w_pre2": pack_conv(w_pre2),
        "g_pre2": jnp.ones((3, 1), jnp.float32), "be_pre2": jnp.zeros((3, 1), jnp.float32),
        "w_cur1": pack_conv(w_cur1),
        "b_cur1": b_cur1.reshape(8, 1),
        "w_cur2": pack_conv(w_cur2),
        "g_cur2": jnp.ones((3, 1), jnp.float32), "be_cur2": jnp.zeros((3, 1), jnp.float32),
        "w_res1": pack_conv(w_res1),
        "g_res1": jnp.ones((3, 1), jnp.float32), "be_res1": jnp.zeros((3, 1), jnp.float32),
        "w_res2": w_res2.reshape(3, 1),
        "g_res2": jnp.ones((1, 1), jnp.float32), "be_res2": jnp.zeros((1, 1), jnp.float32),
    }


# ---------------------------------------------------------------------------
# forward
# ---------------------------------------------------------------------------

def generate_sparse_mask_forward(params, cur_fea, pre_fea):
    """cur_fea: [N, Cin, H, W], pre_fea: [N, Cin*down_scale, H/3, W/3] (NCHW)."""
    N, Cin, H, W = cur_fea.shape
    Np, Cpre, Hp, Wp = pre_fea.shape
    assert N == Np and H == 3 * Hp and W == 3 * Wp
    M = N * H * W
    Mpre = N * Hp * Wp
    P = W + 1  # flat padding so every tap shift stays in-bounds

    # ---- stage 1: ConvTranspose2d(k=3, s=3) as sub-pixel matmul + bias + ReLU ----
    pre_flat = jnp.transpose(pre_fea, (1, 0, 2, 3)).reshape(Cpre, Mpre)
    y1 = pl.pallas_call(
        _deconv_kernel,
        out_shape=jax.ShapeDtypeStruct((8 * 9, Mpre), jnp.float32),
        grid_spec=pltpu.PrefetchScalarGridSpec(
            num_scalar_prefetch=0, grid=(1,),
            in_specs=[_fs((Cpre, Mpre)), _fs((8 * 9, Cpre)), _fs((8 * 9, 1))],
            out_specs=_fs((8 * 9, Mpre))),
        compiler_params=pltpu.CompilerParams(dimension_semantics=("arbitrary",)),
    )(pre_flat, params["wd_r"], params["bd_r"])

    # depth-to-space (tiny host-side shuffle): [8*9, N*Hp*Wp] -> [8, N*H*W]
    up = (y1.reshape(8, 3, 3, N, Hp, Wp)
            .transpose(0, 3, 4, 1, 5, 2)
            .reshape(8, M))

    pre_up_pad = jnp.pad(up, ((0, 0), (P, P)))
    cur_flat = jnp.transpose(cur_fea, (1, 0, 2, 3)).reshape(Cin, M)
    cur_pad = jnp.pad(cur_flat, ((0, 0), (P, P)))
    masks = _make_tap_masks(N, H, W)

    ins = (masks, pre_up_pad, cur_pad,
           params["w_pre2"], params["g_pre2"], params["be_pre2"],
           params["w_cur1"], params["b_cur1"],
           params["w_cur2"], params["g_cur2"], params["be_cur2"],
           params["w_res1"], params["g_res1"], params["be_res1"],
           params["w_res2"], params["g_res2"], params["be_res2"])

    kernel = _make_fused_kernel(H=H, W=W, M=M, P=P)
    detail, cur_out, pre_out = pl.pallas_call(
        kernel,
        out_shape=(jax.ShapeDtypeStruct((1, M), jnp.float32),
                   jax.ShapeDtypeStruct((3, M), jnp.float32),
                   jax.ShapeDtypeStruct((3, M), jnp.float32)),
        grid_spec=pltpu.PrefetchScalarGridSpec(
            num_scalar_prefetch=0, grid=(1,),
            in_specs=[_fs(x.shape) for x in ins],
            out_specs=[_fs((1, M)), _fs((3, M)), _fs((3, M))]),
        compiler_params=pltpu.CompilerParams(dimension_semantics=("arbitrary",)),
    )(*ins)

    # back to PyTorch conventions only at the block boundary
    detail_nhw = detail.reshape(N, H, W)
    cur_nchw = jnp.transpose(cur_out.reshape(3, N, H, W), (1, 0, 2, 3))
    pre_nchw = jnp.transpose(pre_out.reshape(3, N, H, W), (1, 0, 2, 3))
    return detail_nhw, cur_nchw, pre_nchw


# ---------------------------------------------------------------------------
# main
# ---------------------------------------------------------------------------

if __name__ == "__main__":
    key = jax.random.PRNGKey(0)
    k_param, k_cur, k_pre = jax.random.split(key, 3)

    in_channels, down_scale = 4, 3
    N, Hp, Wp = 2, 8, 8                 # pre_fea spatial; deconv stride=3 -> 24x24
    H, W = 3 * Hp, 3 * Wp

    cur_fea = jax.random.normal(k_cur, (N, in_channels, H, W), jnp.float32)
    pre_fea = jax.random.normal(k_pre, (N, in_channels * down_scale, Hp, Wp),
                                jnp.float32)

    params = init_params(k_param, in_channels, down_scale)

    fwd = jax.jit(generate_sparse_mask_forward)
    detail, cur_out, pre_out = fwd(params, cur_fea, pre_fea)
    jax.block_until_ready((detail, cur_out, pre_out))

    assert detail.shape == (N, H, W)
    assert cur_out.shape == (N, 3, H, W)
    assert pre_out.shape == (N, 3, H, W)
    assert bool(jnp.isfinite(detail).all())
    assert bool(jnp.isfinite(cur_out).all())
    assert bool(jnp.isfinite(pre_out).all())
    print("KERNEL_OK")
</pallas_src>

<mosaic_0001>
module attributes {stable_mosaic.version = 11 : i64} {
  func.func @_deconv_kernel(%arg0: i32, %arg1: memref<12x128xf32, #tpu.memory_space<vmem>>, %arg2: memref<72x12xf32, #tpu.memory_space<vmem>>, %arg3: memref<72x1xf32, #tpu.memory_space<vmem>>, %arg4: memref<72x128xf32, #tpu.memory_space<vmem>>) attributes {dimension_semantics = [#tpu.dimension_semantics<arbitrary>], iteration_bounds = array<i64: 1>, scalar_prefetch = 0 : i64, scratch_operands = 0 : i64, tpu.core_type = #tpu.core_type<tc>, window_params = [{pipeline_mode = #tpu.pipeline_mode<synchronous>, transform_indices = @transform_0, window_bounds = array<i64: 12, 128>}, {pipeline_mode = #tpu.pipeline_mode<synchronous>, transform_indices = @transform_1, window_bounds = array<i64: 72, 12>}, {pipeline_mode = #tpu.pipeline_mode<synchronous>, transform_indices = @transform_2, window_bounds = array<i64: 72, 1>}, {pipeline_mode = #tpu.pipeline_mode<synchronous>, transform_indices = @transform_3, window_bounds = array<i64: 72, 128>}]} {
    %c0 = arith.constant 0 : index
    %c0_0 = arith.constant 0 : index
    %0 = vector.load %arg2[%c0, %c0_0] : memref<72x12xf32, #tpu.memory_space<vmem>>, vector<72x12xf32>
    %c0_1 = arith.constant 0 : index
    %c0_2 = arith.constant 0 : index
    %1 = vector.load %arg1[%c0_1, %c0_2] : memref<12x128xf32, #tpu.memory_space<vmem>>, vector<12x128xf32>
    %cst = arith.constant dense<0.000000e+00> : vector<72x128xf32>
    %2 = tpu.matmul %0, %1, %cst {dimension_numbers = #tpu.dot_dimension_numbers<[1], [0], [0], [1], [0, 0, 1, 1], [], []>} : vector<72x12xf32>, vector<12x128xf32>, vector<72x128xf32> -> vector<72x128xf32>
    %c0_3 = arith.constant 0 : index
    %c0_4 = arith.constant 0 : index
    %3 = vector.load %arg3[%c0_3, %c0_4] : memref<72x1xf32, #tpu.memory_space<vmem>>, vector<72x1xf32>
    %4 = vector.broadcast %3 : vector<72x1xf32> to vector<72x128xf32>
    %5 = arith.addf %2, %4 : vector<72x128xf32>
    %cst_5 = arith.constant 0.000000e+00 : f32
    %6 = vector.broadcast %cst_5 : f32 to vector<72x128xf32>
    %7 = arith.maximumf %5, %6 : vector<72x128xf32>
    %c0_6 = arith.constant 0 : index
    %c0_7 = arith.constant 0 : index
    %8 = vector.load %arg4[%c0_6, %c0_7] : memref<72x128xf32, #tpu.memory_space<vmem>>, vector<72x128xf32>
    tpu.vector_store %arg4[%c0_6, %c0_7], %7 {strides = array<i32>} : memref<72x128xf32, #tpu.memory_space<vmem>>, vector<72x128xf32>,
    return
  }
  func.func @transform_0(%arg0: i32) -> (i32, i32) {
    %c0_i32 = arith.constant 0 : i32
    %c0_i32_0 = arith.constant 0 : i32
    %c0_i32_1 = arith.constant 0 : i32
    return %c0_i32, %c0_i32_0 : i32, i32
  }
  func.func @transform_1(%arg0: i32) -> (i32, i32) {
    %c0_i32 = arith.constant 0 : i32
    %c0_i32_0 = arith.constant 0 : i32
    %c0_i32_1 = arith.constant 0 : i32
    return %c0_i32, %c0_i32_0 : i32, i32
  }
  func.func @transform_2(%arg0: i32) -> (i32, i32) {
    %c0_i32 = arith.constant 0 : i32
    %c0_i32_0 = arith.constant 0 : i32
    %c0_i32_1 = arith.constant 0 : i32
    return %c0_i32, %c0_i32_0 : i32, i32
  }
  func.func @transform_3(%arg0: i32) -> (i32, i32) {
    %c0_i32 = arith.constant 0 : i32
    %c0_i32_0 = arith.constant 0 : i32
    %c0_i32_1 = arith.constant 0 : i32
    return %c0_i32, %c0_i32_0 : i32, i32
  }
}

module attributes {stable_mosaic.version = 11 : i64} {
  func.func @kernel(%arg0: i32, %arg1: memref<9x1152xf32, #tpu.memory_space<vmem>>, %arg2: memref<8x1202xf32, #tpu.memory_space<vmem>>, %arg3: memref<4x1202xf32, #tpu.memory_space<vmem>>, %arg4: memref<3x72xf32, #tpu.memory_space<vmem>>, %arg5: memref<3x1xf32, #tpu.memory_space<vmem>>, %arg6: memref<3x1xf32, #tpu.memory_space<vmem>>, %arg7: memref<8x36xf32, #tpu.memory_space<vmem>>, %arg8: memref<8x1xf32, #tpu.memory_space<vmem>>, %arg9: memref<3x72xf32, #tpu.memory_space<vmem>>, %arg10: memref<3x1xf32, #tpu.memory_space<vmem>>, %arg11: memref<3x1xf32, #tpu.memory_space<vmem>>, %arg12: memref<3x27xf32, #tpu.memory_space<vmem>>, %arg13: memref<3x1xf32, #tpu.memory_space<vmem>>, %arg14: memref<3x1xf32, #tpu.memory_space<vmem>>, %arg15: memref<3x1xf32, #tpu.memory_space<vmem>>, %arg16: memref<1x1xf32, #tpu.memory_space<vmem>>, %arg17: memref<1x1xf32, #tpu.memory_space<vmem>>, %arg18: memref<1x1152xf32, #tpu.memory_space<vmem>>, %arg19: memref<3x1152xf32, #tpu.memory_space<vmem>>, %arg20: memref<3x1152xf32, #tpu.memory_space<vmem>>) attributes {dimension_semantics = [#tpu.dimension_semantics<arbitrary>], iteration_bounds = array<i64: 1>, scalar_prefetch = 0 : i64, scratch_operands = 0 : i64, tpu.core_type = #tpu.core_type<tc>, window_params = [{pipeline_mode = #tpu.pipeline_mode<synchronous>, transform_indices = @transform_0, window_bounds = array<i64: 9, 1152>}, {pipeline_mode = #tpu.pipeline_mode<synchronous>, transform_indices = @transform_1, window_bounds = array<i64: 8, 1202>}, {pipeline_mode = #tpu.pipeline_mode<synchronous>, transform_indices = @transform_2, window_bounds = array<i64: 4, 1202>}, {pipeline_mode = #tpu.pipeline_mode<synchronous>, transform_indices = @transform_3, window_bounds = array<i64: 3, 72>}, {pipeline_mode = #tpu.pipeline_mode<synchronous>, transform_indices = @transform_4, window_bounds = array<i64: 3, 1>}, {pipeline_mode = #tpu.pipeline_mode<synchronous>, transform_indices = @transform_5, window_bounds = array<i64: 3, 1>}, {pipeline_mode = #tpu.pipeline_mode<synchronous>, transform_indices = @transform_6, window_bounds = array<i64: 8, 36>}, {pipeline_mode = #tpu.pipeline_mode<synchronous>, transform_indices = @transform_7, window_bounds = array<i64: 8, 1>}, {pipeline_mode = #tpu.pipeline_mode<synchronous>, transform_indices = @transform_8, window_bounds = array<i64: 3, 72>}, {pipeline_mode = #tpu.pipeline_mode<synchronous>, transform_indices = @transform_9, window_bounds = array<i64: 3, 1>}, {pipeline_mode = #tpu.pipeline_mode<synchronous>, transform_indices = @transform_10, window_bounds = array<i64: 3, 1>}, {pipeline_mode = #tpu.pipeline_mode<synchronous>, transform_indices = @transform_11, window_bounds = array<i64: 3, 27>}, {pipeline_mode = #tpu.pipeline_mode<synchronous>, transform_indices = @transform_12, window_bounds = array<i64: 3, 1>}, {pipeline_mode = #tpu.pipeline_mode<synchronous>, transform_indices = @transform_13, window_bounds = array<i64: 3, 1>}, {pipeline_mode = #tpu.pipeline_mode<synchronous>, transform_indices = @transform_14, window_bounds = array<i64: 3, 1>}, {pipeline_mode = #tpu.pipeline_mode<synchronous>, transform_indices = @transform_15, window_bounds = array<i64: 1, 1>}, {pipeline_mode = #tpu.pipeline_mode<synchronous>, transform_indices = @transform_16, window_bounds = array<i64: 1, 1>}, {pipeline_mode = #tpu.pipeline_mode<synchronous>, transform_indices = @transform_17, window_bounds = array<i64: 1, 1152>}, {pipeline_mode = #tpu.pipeline_mode<synchronous>, transform_indices = @transform_18, window_bounds = array<i64: 3, 1152>}, {pipeline_mode = #tpu.pipeline_mode<synchronous>, transform_indices = @transform_19, window_bounds = array<i64: 3, 1152>}]} {
    %c0 = arith.constant 0 : index
    %c0_0 = arith.constant 0 : index
    %0 = vector.load %arg1[%c0, %c0_0] : memref<9x1152xf32, #tpu.memory_space<vmem>>, vector<9x1152xf32>
    %c0_1 = arith.constant 0 : index
    %c0_2 = arith.constant 0 : index
    %1 = vector.load %arg2[%c0_1, %c0_2] : memref<8x1202xf32, #tpu.memory_space<vmem>>, vector<8x1202xf32>
    %c0_3 = arith.constant 0 : index
    %c0_4 = arith.constant 0 : index
    %2 = vector.load %arg4[%c0_3, %c0_4] : memref<3x72xf32, #tpu.memory_space<vmem>>, vector<3x72xf32>
    %3 = vector.extract_strided_slice %1 {offsets = [0, 0], sizes = [8, 1152], strides = [1, 1]} : vector<8x1202xf32> to vector<8x1152xf32>
    %4 = vector.extract_strided_slice %0 {offsets = [0, 0], sizes = [1, 1152], strides = [1, 1]} : vector<9x1152xf32> to vector<1x1152xf32>
    %5 = vector.broadcast %4 : vector<1x1152xf32> to vector<8x1152xf32>
    %6 = arith.mulf %3, %5 : vector<8x1152xf32>
    %7 = vector.extract_strided_slice %1 {offsets = [0, 1], sizes = [8, 1152], strides = [1, 1]} : vector<8x1202xf32> to vector<8x1152xf32>
    %8 = vector.extract_strided_slice %0 {offsets = [1, 0], sizes = [1, 1152], strides = [1, 1]} : vector<9x1152xf32> to vector<1x1152xf32>
    %9 = vector.broadcast %8 : vector<1x1152xf32> to vector<8x1152xf32>
    %10 = arith.mulf %7, %9 : vector<8x1152xf32>
    %11 = vector.extract_strided_slice %1 {offsets = [0, 2], sizes = [8, 1152], strides = [1, 1]} : vector<8x1202xf32> to vector<8x1152xf32>
    %12 = vector.extract_strided_slice %0 {offsets = [2, 0], sizes = [1, 1152], strides = [1, 1]} : vector<9x1152xf32> to vector<1x1152xf32>
    %13 = vector.broadcast %12 : vector<1x1152xf32> to vector<8x1152xf32>
    %14 = arith.mulf %11, %13 : vector<8x1152xf32>
    %15 = vector.extract_strided_slice %1 {offsets = [0, 24], sizes = [8, 1152], strides = [1, 1]} : vector<8x1202xf32> to vector<8x1152xf32>
    %16 = vector.extract_strided_slice %0 {offsets = [3, 0], sizes = [1, 1152], strides = [1, 1]} : vector<9x1152xf32> to vector<1x1152xf32>
    %17 = vector.broadcast %16 : vector<1x1152xf32> to vector<8x1152xf32>
    %18 = arith.mulf %15, %17 : vector<8x1152xf32>
    %19 = vector.extract_strided_slice %1 {offsets = [0, 25], sizes = [8, 1152], strides = [1, 1]} : vector<8x1202xf32> to vector<8x1152xf32>
    %20 = vector.extract_strided_slice %0 {offsets = [4, 0], sizes = [1, 1152], strides = [1, 1]} : vector<9x1152xf32> to vector<1x1152xf32>
    %21 = vector.broadcast %20 : vector<1x1152xf32> to vector<8x1152xf32>
    %22 = arith.mulf %19, %21 : vector<8x1152xf32>
    %23 = vector.extract_strided_slice %1 {offsets = [0, 26], sizes = [8, 1152], strides = [1, 1]} : vector<8x1202xf32> to vector<8x1152xf32>
    %24 = vector.extract_strided_slice %0 {offsets = [5, 0], sizes = [1, 1152], strides = [1, 1]} : vector<9x1152xf32> to vector<1x1152xf32>
    %25 = vector.broadcast %24 : vector<1x1152xf32> to vector<8x1152xf32>
    %26 = arith.mulf %23, %25 : vector<8x1152xf32>
    %27 = vector.extract_strided_slice %1 {offsets = [0, 48], sizes = [8, 1152], strides = [1, 1]} : vector<8x1202xf32> to vector<8x1152xf32>
    %28 = vector.extract_strided_slice %0 {offsets = [6, 0], sizes = [1, 1152], strides = [1, 1]} : vector<9x1152xf32> to vector<1x1152xf32>
    %29 = vector.broadcast %28 : vector<1x1152xf32> to vector<8x1152xf32>
    %30 = arith.mulf %27, %29 : vector<8x1152xf32>
    %31 = vector.extract_strided_slice %1 {offsets = [0, 49], sizes = [8, 1152], strides = [1, 1]} : vector<8x1202xf32> to vector<8x1152xf32>
    %32 = vector.extract_strided_slice %0 {offsets = [7, 0], sizes = [1, 1152], strides = [1, 1]} : vector<9x1152xf32> to vector<1x1152xf32>
    %33 = vector.broadcast %32 : vector<1x1152xf32> to vector<8x1152xf32>
    %34 = arith.mulf %31, %33 : vector<8x1152xf32>
    %35 = vector.extract_strided_slice %1 {offsets = [0, 50], sizes = [8, 1152], strides = [1, 1]} : vector<8x1202xf32> to vector<8x1152xf32>
    %36 = vector.extract_strided_slice %0 {offsets = [8, 0], sizes = [1, 1152], strides = [1, 1]} : vector<9x1152xf32> to vector<1x1152xf32>
    %37 = vector.broadcast %36 : vector<1x1152xf32> to vector<8x1152xf32>
    %38 = arith.mulf %35, %37 : vector<8x1152xf32>
    %39 = tpu.concatenate %6, %10, %14, %18, %22, %26, %30, %34, %38 in 0 : vector<8x1152xf32>, vector<8x1152xf32>, vector<8x1152xf32>, vector<8x1152xf32>, vector<8x1152xf32>, vector<8x1152xf32>, vector<8x1152xf32>, vector<8x1152xf32>, vector<8x1152xf32> -> vector<72x1152xf32>
    %cst = arith.constant dense<0.000000e+00> : vector<3x1152xf32>
    %40 = tpu.matmul %2, %39, %cst {dimension_numbers = #tpu.dot_dimension_numbers<[1], [0], [0], [1], [0, 0, 1, 1], [], []>} : vector<3x72xf32>, vector<72x1152xf32>, vector<3x1152xf32> -> vector<3x1152xf32>
    %c0_5 = arith.constant 0 : index
    %c0_6 = arith.constant 0 : index
    %41 = vector.load %arg5[%c0_5, %c0_6] : memref<3x1xf32, #tpu.memory_space<vmem>>, vector<3x1xf32>
    %c0_7 = arith.constant 0 : index
    %c0_8 = arith.constant 0 : index
    %42 = vector.load %arg6[%c0_7, %c0_8] : memref<3x1xf32, #tpu.memory_space<vmem>>, vector<3x1xf32>
    %cst_9 = arith.constant dense<0.000000e+00> : vector<3xf32>
    %43 = vector.multi_reduction <add>, %40, %cst_9 [1] : vector<3x1152xf32> to vector<3xf32>
    %44 = vector.shape_cast %43 : vector<3xf32> to vector<3x1xf32>
    %cst_10 = arith.constant 1.152000e+03 : f32
    %45 = vector.broadcast %cst_10 : f32 to vector<3x1xf32>
    %46 = arith.divf %44, %45 : vector<3x1xf32>
    %47 = vector.broadcast %46 : vector<3x1xf32> to vector<3x1152xf32>
    %48 = arith.subf %40, %47 : vector<3x1152xf32>
    %49 = arith.mulf %48, %48 : vector<3x1152xf32>
    %cst_11 = arith.constant dense<0.000000e+00> : vector<3xf32>
    %50 = vector.multi_reduction <add>, %49, %cst_11 [1] : vector<3x1152xf32> to vector<3xf32>
    %51 = vector.shape_cast %50 : vector<3xf32> to vector<3x1xf32>
    %cst_12 = arith.constant 1.152000e+03 : f32
    %52 = vector.broadcast %cst_12 : f32 to vector<3x1xf32>
    %53 = arith.divf %51, %52 : vector<3x1xf32>
    %54 = vector.broadcast %46 : vector<3x1xf32> to vector<3x1152xf32>
    %55 = arith.subf %40, %54 : vector<3x1152xf32>
    %cst_13 = arith.constant 9.99999974E-6 : f32
    %56 = vector.broadcast %cst_13 : f32 to vector<3x1xf32>
    %57 = arith.addf %53, %56 : vector<3x1xf32>
    %58 = math.rsqrt %57 : vector<3x1xf32>
    %59 = vector.broadcast %58 : vector<3x1xf32> to vector<3x1152xf32>
    %60 = arith.mulf %55, %59 : vector<3x1152xf32>
    %61 = vector.broadcast %41 : vector<3x1xf32> to vector<3x1152xf32>
    %62 = arith.mulf %60, %61 : vector<3x1152xf32>
    %63 = vector.broadcast %42 : vector<3x1xf32> to vector<3x1152xf32>
    %64 = arith.addf %62, %63 : vector<3x1152xf32>
    %c0_14 = arith.constant 0 : index
    %c0_15 = arith.constant 0 : index
    %65 = vector.load %arg20[%c0_14, %c0_15] : memref<3x1152xf32, #tpu.memory_space<vmem>>, vector<3x1152xf32>
    tpu.vector_store %arg20[%c0_14, %c0_15], %64 {strides = array<i32>} : memref<3x1152xf32, #tpu.memory_space<vmem>>, vector<3x1152xf32>,
    %c0_16 = arith.constant 0 : index
    %c0_17 = arith.constant 0 : index
    %66 = vector.load %arg3[%c0_16, %c0_17] : memref<4x1202xf32, #tpu.memory_space<vmem>>, vector<4x1202xf32>
    %c0_18 = arith.constant 0 : index
    %c0_19 = arith.constant 0 : index
    %67 = vector.load %arg7[%c0_18, %c0_19] : memref<8x36xf32, #tpu.memory_space<vmem>>, vector<8x36xf32>
    %68 = vector.extract_strided_slice %66 {offsets = [0, 0], sizes = [4, 1152], strides = [1, 1]} : vector<4x1202xf32> to vector<4x1152xf32>
    %69 = vector.extract_strided_slice %0 {offsets = [0, 0], sizes = [1, 1152], strides = [1, 1]} : vector<9x1152xf32> to vector<1x1152xf32>
    %70 = vector.broadcast %69 : vector<1x1152xf32> to vector<4x1152xf32>
    %71 = arith.mulf %68, %70 : vector<4x1152xf32>
    %72 = vector.extract_strided_slice %66 {offsets = [0, 1], sizes = [4, 1152], strides = [1, 1]} : vector<4x1202xf32> to vector<4x1152xf32>
    %73 = vector.extract_strided_slice %0 {offsets = [1, 0], sizes = [1, 1152], strides = [1, 1]} : vector<9x1152xf32> to vector<1x1152xf32>
    %74 = vector.broadcast %73 : vector<1x1152xf32> to vector<4x1152xf32>
    %75 = arith.mulf %72, %74 : vector<4x1152xf32>
    %76 = vector.extract_strided_slice %66 {offsets = [0, 2], sizes = [4, 1152], strides = [1, 1]} : vector<4x1202xf32> to vector<4x1152xf32>
    %77 = vector.extract_strided_slice %0 {offsets = [2, 0], sizes = [1, 1152], strides = [1, 1]} : vector<9x1152xf32> to vector<1x1152xf32>
    %78 = vector.broadcast %77 : vector<1x1152xf32> to vector<4x1152xf32>
    %79 = arith.mulf %76, %78 : vector<4x1152xf32>
    %80 = vector.extract_strided_slice %66 {offsets = [0, 24], sizes = [4, 1152], strides = [1, 1]} : vector<4x1202xf32> to vector<4x1152xf32>
    %81 = vector.extract_strided_slice %0 {offsets = [3, 0], sizes = [1, 1152], strides = [1, 1]} : vector<9x1152xf32> to vector<1x1152xf32>
    %82 = vector.broadcast %81 : vector<1x1152xf32> to vector<4x1152xf32>
    %83 = arith.mulf %80, %82 : vector<4x1152xf32>
    %84 = vector.extract_strided_slice %66 {offsets = [0, 25], sizes = [4, 1152], strides = [1, 1]} : vector<4x1202xf32> to vector<4x1152xf32>
    %85 = vector.extract_strided_slice %0 {offsets = [4, 0], sizes = [1, 1152], strides = [1, 1]} : vector<9x1152xf32> to vector<1x1152xf32>
    %86 = vector.broadcast %85 : vector<1x1152xf32> to vector<4x1152xf32>
    %87 = arith.mulf %84, %86 : vector<4x1152xf32>
    %88 = vector.extract_strided_slice %66 {offsets = [0, 26], sizes = [4, 1152], strides = [1, 1]} : vector<4x1202xf32> to vector<4x1152xf32>
    %89 = vector.extract_strided_slice %0 {offsets = [5, 0], sizes = [1, 1152], strides = [1, 1]} : vector<9x1152xf32> to vector<1x1152xf32>
    %90 = vector.broadcast %89 : vector<1x1152xf32> to vector<4x1152xf32>
    %91 = arith.mulf %88, %90 : vector<4x1152xf32>
    %92 = vector.extract_strided_slice %66 {offsets = [0, 48], sizes = [4, 1152], strides = [1, 1]} : vector<4x1202xf32> to vector<4x1152xf32>
    %93 = vector.extract_strided_slice %0 {offsets = [6, 0], sizes = [1, 1152], strides = [1, 1]} : vector<9x1152xf32> to vector<1x1152xf32>
    %94 = vector.broadcast %93 : vector<1x1152xf32> to vector<4x1152xf32>
    %95 = arith.mulf %92, %94 : vector<4x1152xf32>
    %96 = vector.extract_strided_slice %66 {offsets = [0, 49], sizes = [4, 1152], strides = [1, 1]} : vector<4x1202xf32> to vector<4x1152xf32>
    %97 = vector.extract_strided_slice %0 {offsets = [7, 0], sizes = [1, 1152], strides = [1, 1]} : vector<9x1152xf32> to vector<1x1152xf32>
    %98 = vector.broadcast %97 : vector<1x1152xf32> to vector<4x1152xf32>
    %99 = arith.mulf %96, %98 : vector<4x1152xf32>
    %100 = vector.extract_strided_slice %66 {offsets = [0, 50], sizes = [4, 1152], strides = [1, 1]} : vector<4x1202xf32> to vector<4x1152xf32>
    %101 = vector.extract_strided_slice %0 {offsets = [8, 0], sizes = [1, 1152], strides = [1, 1]} : vector<9x1152xf32> to vector<1x1152xf32>
    %102 = vector.broadcast %101 : vector<1x1152xf32> to vector<4x1152xf32>
    %103 = arith.mulf %100, %102 : vector<4x1152xf32>
    %104 = tpu.concatenate %71, %75, %79, %83, %87, %91, %95, %99, %103 in 0 : vector<4x1152xf32>, vector<4x1152xf32>, vector<4x1152xf32>, vector<4x1152xf32>, vector<4x1152xf32>, vector<4x1152xf32>, vector<4x1152xf32>, vector<4x1152xf32>, vector<4x1152xf32> -> vector<36x1152xf32>
    %cst_20 = arith.constant dense<0.000000e+00> : vector<8x1152xf32>
    %105 = tpu.matmul %67, %104, %cst_20 {dimension_numbers = #tpu.dot_dimension_numbers<[1], [0], [0], [1], [0, 0, 1, 1], [], []>} : vector<8x36xf32>, vector<36x1152xf32>, vector<8x1152xf32> -> vector<8x1152xf32>
    %c0_21 = arith.constant 0 : index
    %c0_22 = arith.constant 0 : index
    %106 = vector.load %arg8[%c0_21, %c0_22] : memref<8x1xf32, #tpu.memory_space<vmem>>, vector<8x1xf32>
    %107 = vector.broadcast %106 : vector<8x1xf32> to vector<8x1152xf32>
    %108 = arith.addf %105, %107 : vector<8x1152xf32>
    %cst_23 = arith.constant 0.000000e+00 : f32
    %109 = vector.broadcast %cst_23 : f32 to vector<8x1152xf32>
    %110 = arith.maximumf %108, %109 : vector<8x1152xf32>
    %cst_24 = arith.constant 0.000000e+00 : f32
    %111 = vector.broadcast %cst_24 : f32 to vector<8x25xf32>
    %112 = tpu.concatenate %111, %110, %111 in 1 : vector<8x25xf32>, vector<8x1152xf32>, vector<8x25xf32> -> vector<8x1202xf32>
    %c0_25 = arith.constant 0 : index
    %c0_26 = arith.constant 0 : index
    %113 = vector.load %arg9[%c0_25, %c0_26] : memref<3x72xf32, #tpu.memory_space<vmem>>, vector<3x72xf32>
    %114 = vector.extract_strided_slice %112 {offsets = [0, 0], sizes = [8, 1152], strides = [1, 1]} : vector<8x1202xf32> to vector<8x1152xf32>
    %115 = vector.extract_strided_slice %0 {offsets = [0, 0], sizes = [1, 1152], strides = [1, 1]} : vector<9x1152xf32> to vector<1x1152xf32>
    %116 = vector.broadcast %115 : vector<1x1152xf32> to vector<8x1152xf32>
    %117 = arith.mulf %114, %116 : vector<8x1152xf32>
    %118 = vector.extract_strided_slice %112 {offsets = [0, 1], sizes = [8, 1152], strides = [1, 1]} : vector<8x1202xf32> to vector<8x1152xf32>
    %119 = vector.extract_strided_slice %0 {offsets = [1, 0], sizes = [1, 1152], strides = [1, 1]} : vector<9x1152xf32> to vector<1x1152xf32>
    %120 = vector.broadcast %119 : vector<1x1152xf32> to vector<8x1152xf32>
    %121 = arith.mulf %118, %120 : vector<8x1152xf32>
    %122 = vector.extract_strided_slice %112 {offsets = [0, 2], sizes = [8, 1152], strides = [1, 1]} : vector<8x1202xf32> to vector<8x1152xf32>
    %123 = vector.extract_strided_slice %0 {offsets = [2, 0], sizes = [1, 1152], strides = [1, 1]} : vector<9x1152xf32> to vector<1x1152xf32>
    %124 = vector.broadcast %123 : vector<1x1152xf32> to vector<8x1152xf32>
    %125 = arith.mulf %122, %124 : vector<8x1152xf32>
    %126 = vector.extract_strided_slice %112 {offsets = [0, 24], sizes = [8, 1152], strides = [1, 1]} : vector<8x1202xf32> to vector<8x1152xf32>
    %127 = vector.extract_strided_slice %0 {offsets = [3, 0], sizes = [1, 1152], strides = [1, 1]} : vector<9x1152xf32> to vector<1x1152xf32>
    %128 = vector.broadcast %127 : vector<1x1152xf32> to vector<8x1152xf32>
    %129 = arith.mulf %126, %128 : vector<8x1152xf32>
    %130 = vector.extract_strided_slice %112 {offsets = [0, 25], sizes = [8, 1152], strides = [1, 1]} : vector<8x1202xf32> to vector<8x1152xf32>
    %131 = vector.extract_strided_slice %0 {offsets = [4, 0], sizes = [1, 1152], strides = [1, 1]} : vector<9x1152xf32> to vector<1x1152xf32>
    %132 = vector.broadcast %131 : vector<1x1152xf32> to vector<8x1152xf32>
    %133 = arith.mulf %130, %132 : vector<8x1152xf32>
    %134 = vector.extract_strided_slice %112 {offsets = [0, 26], sizes = [8, 1152], strides = [1, 1]} : vector<8x1202xf32> to vector<8x1152xf32>
    %135 = vector.extract_strided_slice %0 {offsets = [5, 0], sizes = [1, 1152], strides = [1, 1]} : vector<9x1152xf32> to vector<1x1152xf32>
    %136 = vector.broadcast %135 : vector<1x1152xf32> to vector<8x1152xf32>
    %137 = arith.mulf %134, %136 : vector<8x1152xf32>
    %138 = vector.extract_strided_slice %112 {offsets = [0, 48], sizes = [8, 1152], strides = [1, 1]} : vector<8x1202xf32> to vector<8x1152xf32>
    %139 = vector.extract_strided_slice %0 {offsets = [6, 0], sizes = [1, 1152], strides = [1, 1]} : vector<9x1152xf32> to vector<1x1152xf32>
    %140 = vector.broadcast %139 : vector<1x1152xf32> to vector<8x1152xf32>
    %141 = arith.mulf %138, %140 : vector<8x1152xf32>
    %142 = vector.extract_strided_slice %112 {offsets = [0, 49], sizes = [8, 1152], strides = [1, 1]} : vector<8x1202xf32> to vector<8x1152xf32>
    %143 = vector.extract_strided_slice %0 {offsets = [7, 0], sizes = [1, 1152], strides = [1, 1]} : vector<9x1152xf32> to vector<1x1152xf32>
    %144 = vector.broadcast %143 : vector<1x1152xf32> to vector<8x1152xf32>
    %145 = arith.mulf %142, %144 : vector<8x1152xf32>
    %146 = vector.extract_strided_slice %112 {offsets = [0, 50], sizes = [8, 1152], strides = [1, 1]} : vector<8x1202xf32> to vector<8x1152xf32>
    %147 = vector.extract_strided_slice %0 {offsets = [8, 0], sizes = [1, 1152], strides = [1, 1]} : vector<9x1152xf32> to vector<1x1152xf32>
    %148 = vector.broadcast %147 : vector<1x1152xf32> to vector<8x1152xf32>
    %149 = arith.mulf %146, %148 : vector<8x1152xf32>
    %150 = tpu.concatenate %117, %121, %125, %129, %133, %137, %141, %145, %149 in 0 : vector<8x1152xf32>, vector<8x1152xf32>, vector<8x1152xf32>, vector<8x1152xf32>, vector<8x1152xf32>, vector<8x1152xf32>, vector<8x1152xf32>, vector<8x1152xf32>, vector<8x1152xf32> -> vector<72x1152xf32>
    %cst_27 = arith.constant dense<0.000000e+00> : vector<3x1152xf32>
    %151 = tpu.matmul %113, %150, %cst_27 {dimension_numbers = #tpu.dot_dimension_numbers<[1], [0], [0], [1], [0, 0, 1, 1], [], []>} : vector<3x72xf32>, vector<72x1152xf32>, vector<3x1152xf32> -> vector<3x1152xf32>
    %c0_28 = arith.constant 0 : index
    %c0_29 = arith.constant 0 : index
    %152 = vector.load %arg10[%c0_28, %c0_29] : memref<3x1xf32, #tpu.memory_space<vmem>>, vector<3x1xf32>
    %c0_30 = arith.constant 0 : index
    %c0_31 = arith.constant 0 : index
    %153 = vector.load %arg11[%c0_30, %c0_31] : memref<3x1xf32, #tpu.memory_space<vmem>>, vector<3x1xf32>
    %cst_32 = arith.constant dense<0.000000e+00> : vector<3xf32>
    %154 = vector.multi_reduction <add>, %151, %cst_32 [1] : vector<3x1152xf32> to vector<3xf32>
    %155 = vector.shape_cast %154 : vector<3xf32> to vector<3x1xf32>
    %cst_33 = arith.constant 1.152000e+03 : f32
    %156 = vector.broadcast %cst_33 : f32 to vector<3x1xf32>
    %157 = arith.divf %155, %156 : vector<3x1xf32>
    %158 = vector.broadcast %157 : vector<3x1xf32> to vector<3x1152xf32>
    %159 = arith.subf %151, %158 : vector<3x1152xf32>
    %160 = arith.mulf %159, %159 : vector<3x1152xf32>
    %cst_34 = arith.constant dense<0.000000e+00> : vector<3xf32>
    %161 = vector.multi_reduction <add>, %160, %cst_34 [1] : vector<3x1152xf32> to vector<3xf32>
    %162 = vector.shape_cast %161 : vector<3xf32> to vector<3x1xf32>
    %cst_35 = arith.constant 1.152000e+03 : f32
    %163 = vector.broadcast %cst_35 : f32 to vector<3x1xf32>
    %164 = arith.divf %162, %163 : vector<3x1xf32>
    %165 = vector.broadcast %157 : vector<3x1xf32> to vector<3x1152xf32>
    %166 = arith.subf %151, %165 : vector<3x1152xf32>
    %cst_36 = arith.constant 9.99999974E-6 : f32
    %167 = vector.broadcast %cst_36 : f32 to vector<3x1xf32>
    %168 = arith.addf %164, %167 : vector<3x1xf32>
    %169 = math.rsqrt %168 : vector<3x1xf32>
    %170 = vector.broadcast %169 : vector<3x1xf32> to vector<3x1152xf32>
    %171 = arith.mulf %166, %170 : vector<3x1152xf32>
    %172 = vector.broadcast %152 : vector<3x1xf32> to vector<3x1152xf32>
    %173 = arith.mulf %171, %172 : vector<3x1152xf32>
    %174 = vector.broadcast %153 : vector<3x1xf32> to vector<3x1152xf32>
    %175 = arith.addf %173, %174 : vector<3x1152xf32>
    %c0_37 = arith.constant 0 : index
    %c0_38 = arith.constant 0 : index
    %176 = vector.load %arg19[%c0_37, %c0_38] : memref<3x1152xf32, #tpu.memory_space<vmem>>, vector<3x1152xf32>
    tpu.vector_store %arg19[%c0_37, %c0_38], %175 {strides = array<i32>} : memref<3x1152xf32, #tpu.memory_space<vmem>>, vector<3x1152xf32>,
    %177 = arith.subf %175, %64 : vector<3x1152xf32>
    %178 = arith.mulf %177, %177 : vector<3x1152xf32>
    %cst_39 = arith.constant 0.000000e+00 : f32
    %179 = vector.broadcast %cst_39 : f32 to vector<3x25xf32>
    %180 = tpu.concatenate %179, %178, %179 in 1 : vector<3x25xf32>, vector<3x1152xf32>, vector<3x25xf32> -> vector<3x1202xf32>
    %c0_40 = arith.constant 0 : index
    %c0_41 = arith.constant 0 : index
    %181 = vector.load %arg12[%c0_40, %c0_41] : memref<3x27xf32, #tpu.memory_space<vmem>>, vector<3x27xf32>
    %182 = vector.extract_strided_slice %180 {offsets = [0, 0], sizes = [3, 1152], strides = [1, 1]} : vector<3x1202xf32> to vector<3x1152xf32>
    %183 = vector.extract_strided_slice %0 {offsets = [0, 0], sizes = [1, 1152], strides = [1, 1]} : vector<9x1152xf32> to vector<1x1152xf32>
    %184 = vector.broadcast %183 : vector<1x1152xf32> to vector<3x1152xf32>
    %185 = arith.mulf %182, %184 : vector<3x1152xf32>
    %186 = vector.extract_strided_slice %180 {offsets = [0, 1], sizes = [3, 1152], strides = [1, 1]} : vector<3x1202xf32> to vector<3x1152xf32>
    %187 = vector.extract_strided_slice %0 {offsets = [1, 0], sizes = [1, 1152], strides = [1, 1]} : vector<9x1152xf32> to vector<1x1152xf32>
    %188 = vector.broadcast %187 : vector<1x1152xf32> to vector<3x1152xf32>
    %189 = arith.mulf %186, %188 : vector<3x1152xf32>
    %190 = vector.extract_strided_slice %180 {offsets = [0, 2], sizes = [3, 1152], strides = [1, 1]} : vector<3x1202xf32> to vector<3x1152xf32>
    %191 = vector.extract_strided_slice %0 {offsets = [2, 0], sizes = [1, 1152], strides = [1, 1]} : vector<9x1152xf32> to vector<1x1152xf32>
    %192 = vector.broadcast %191 : vector<1x1152xf32> to vector<3x1152xf32>
    %193 = arith.mulf %190, %192 : vector<3x1152xf32>
    %194 = vector.extract_strided_slice %180 {offsets = [0, 24], sizes = [3, 1152], strides = [1, 1]} : vector<3x1202xf32> to vector<3x1152xf32>
    %195 = vector.extract_strided_slice %0 {offsets = [3, 0], sizes = [1, 1152], strides = [1, 1]} : vector<9x1152xf32> to vector<1x1152xf32>
    %196 = vector.broadcast %195 : vector<1x1152xf32> to vector<3x1152xf32>
    %197 = arith.mulf %194, %196 : vector<3x1152xf32>
    %198 = vector.extract_strided_slice %180 {offsets = [0, 25], sizes = [3, 1152], strides = [1, 1]} : vector<3x1202xf32> to vector<3x1152xf32>
    %199 = vector.extract_strided_slice %0 {offsets = [4, 0], sizes = [1, 1152], strides = [1, 1]} : vector<9x1152xf32> to vector<1x1152xf32>
    %200 = vector.broadcast %199 : vector<1x1152xf32> to vector<3x1152xf32>
    %201 = arith.mulf %198, %200 : vector<3x1152xf32>
    %202 = vector.extract_strided_slice %180 {offsets = [0, 26], sizes = [3, 1152], strides = [1, 1]} : vector<3x1202xf32> to vector<3x1152xf32>
    %203 = vector.extract_strided_slice %0 {offsets = [5, 0], sizes = [1, 1152], strides = [1, 1]} : vector<9x1152xf32> to vector<1x1152xf32>
    %204 = vector.broadcast %203 : vector<1x1152xf32> to vector<3x1152xf32>
    %205 = arith.mulf %202, %204 : vector<3x1152xf32>
    %206 = vector.extract_strided_slice %180 {offsets = [0, 48], sizes = [3, 1152], strides = [1, 1]} : vector<3x1202xf32> to vector<3x1152xf32>
    %207 = vector.extract_strided_slice %0 {offsets = [6, 0], sizes = [1, 1152], strides = [1, 1]} : vector<9x1152xf32> to vector<1x1152xf32>
    %208 = vector.broadcast %207 : vector<1x1152xf32> to vector<3x1152xf32>
    %209 = arith.mulf %206, %208 : vector<3x1152xf32>
    %210 = vector.extract_strided_slice %180 {offsets = [0, 49], sizes = [3, 1152], strides = [1, 1]} : vector<3x1202xf32> to vector<3x1152xf32>
    %211 = vector.extract_strided_slice %0 {offsets = [7, 0], sizes = [1, 1152], strides = [1, 1]} : vector<9x1152xf32> to vector<1x1152xf32>
    %212 = vector.broadcast %211 : vector<1x1152xf32> to vector<3x1152xf32>
    %213 = arith.mulf %210, %212 : vector<3x1152xf32>
    %214 = vector.extract_strided_slice %180 {offsets = [0, 50], sizes = [3, 1152], strides = [1, 1]} : vector<3x1202xf32> to vector<3x1152xf32>
    %215 = vector.extract_strided_slice %0 {offsets = [8, 0], sizes = [1, 1152], strides = [1, 1]} : vector<9x1152xf32> to vector<1x1152xf32>
    %216 = vector.broadcast %215 : vector<1x1152xf32> to vector<3x1152xf32>
    %217 = arith.mulf %214, %216 : vector<3x1152xf32>
    %218 = tpu.concatenate %185, %189, %193, %197, %201, %205, %209, %213, %217 in 0 : vector<3x1152xf32>, vector<3x1152xf32>, vector<3x1152xf32>, vector<3x1152xf32>, vector<3x1152xf32>, vector<3x1152xf32>, vector<3x1152xf32>, vector<3x1152xf32>, vector<3x1152xf32> -> vector<27x1152xf32>
    %cst_42 = arith.constant dense<0.000000e+00> : vector<3x1152xf32>
    %219 = tpu.matmul %181, %218, %cst_42 {dimension_numbers = #tpu.dot_dimension_numbers<[1], [0], [0], [1], [0, 0, 1, 1], [], []>} : vector<3x27xf32>, vector<27x1152xf32>, vector<3x1152xf32> -> vector<3x1152xf32>
    %c0_43 = arith.constant 0 : index
    %c0_44 = arith.constant 0 : index
    %220 = vector.load %arg13[%c0_43, %c0_44] : memref<3x1xf32, #tpu.memory_space<vmem>>, vector<3x1xf32>
    %c0_45 = arith.constant 0 : index
    %c0_46 = arith.constant 0 : index
    %221 = vector.load %arg14[%c0_45, %c0_46] : memref<3x1xf32, #tpu.memory_space<vmem>>, vector<3x1xf32>
    %cst_47 = arith.constant dense<0.000000e+00> : vector<3xf32>
    %222 = vector.multi_reduction <add>, %219, %cst_47 [1] : vector<3x1152xf32> to vector<3xf32>
    %223 = vector.shape_cast %222 : vector<3xf32> to vector<3x1xf32>
    %cst_48 = arith.constant 1.152000e+03 : f32
    %224 = vector.broadcast %cst_48 : f32 to vector<3x1xf32>
    %225 = arith.divf %223, %224 : vector<3x1xf32>
    %226 = vector.broadcast %225 : vector<3x1xf32> to vector<3x1152xf32>
    %227 = arith.subf %219, %226 : vector<3x1152xf32>
    %228 = arith.mulf %227, %227 : vector<3x1152xf32>
    %cst_49 = arith.constant dense<0.000000e+00> : vector<3xf32>
    %229 = vector.multi_reduction <add>, %228, %cst_49 [1] : vector<3x1152xf32> to vector<3xf32>
    %230 = vector.shape_cast %229 : vector<3xf32> to vector<3x1xf32>
    %cst_50 = arith.constant 1.152000e+03 : f32
    %231 = vector.broadcast %cst_50 : f32 to vector<3x1xf32>
    %232 = arith.divf %230, %231 : vector<3x1xf32>
    %233 = vector.broadcast %225 : vector<3x1xf32> to vector<3x1152xf32>
    %234 = arith.subf %219, %233 : vector<3x1152xf32>
    %cst_51 = arith.constant 9.99999974E-6 : f32
    %235 = vector.broadcast %cst_51 : f32 to vector<3x1xf32>
    %236 = arith.addf %232, %235 : vector<3x1xf32>
    %237 = math.rsqrt %236 : vector<3x1xf32>
    %238 = vector.broadcast %237 : vector<3x1xf32> to vector<3x1152xf32>
    %239 = arith.mulf %234, %238 : vector<3x1152xf32>
    %240 = vector.broadcast %220 : vector<3x1xf32> to vector<3x1152xf32>
    %241 = arith.mulf %239, %240 : vector<3x1152xf32>
    %242 = vector.broadcast %221 : vector<3x1xf32> to vector<3x1152xf32>
    %243 = arith.addf %241, %242 : vector<3x1152xf32>
    %c0_52 = arith.constant 0 : index
    %c0_53 = arith.constant 0 : index
    %244 = vector.load %arg15[%c0_52, %c0_53] : memref<3x1xf32, #tpu.memory_space<vmem>>, vector<3x1xf32>
    %245 = vector.broadcast %244 : vector<3x1xf32> to vector<3x1152xf32>
    %246 = arith.mulf %245, %243 : vector<3x1152xf32>
    %cst_54 = arith.constant dense<0.000000e+00> : vector<1152xf32>
    %247 = vector.multi_reduction <add>, %246, %cst_54 [0] : vector<3x1152xf32> to vector<1152xf32>
    %248 = vector.shape_cast %247 : vector<1152xf32> to vector<1x1152xf32>
    %c0_55 = arith.constant 0 : index
    %c0_56 = arith.constant 0 : index
    %249 = vector.load %arg16[%c0_55, %c0_56] : memref<1x1xf32, #tpu.memory_space<vmem>>, vector<1x1xf32>
    %c0_57 = arith.constant 0 : index
    %c0_58 = arith.constant 0 : index
    %250 = vector.load %arg17[%c0_57, %c0_58] : memref<1x1xf32, #tpu.memory_space<vmem>>, vector<1x1xf32>
    %cst_59 = arith.constant dense<0.000000e+00> : vector<1xf32>
    %251 = vector.multi_reduction <add>, %248, %cst_59 [1] : vector<1x1152xf32> to vector<1xf32>
    %252 = vector.shape_cast %251 : vector<1xf32> to vector<1x1xf32>
    %cst_60 = arith.constant 1.152000e+03 : f32
    %253 = vector.broadcast %cst_60 : f32 to vector<1x1xf32>
    %254 = arith.divf %252, %253 : vector<1x1xf32>
    %255 = vector.broadcast %254 : vector<1x1xf32> to vector<1x1152xf32>
    %256 = arith.subf %248, %255 : vector<1x1152xf32>
    %257 = arith.mulf %256, %256 : vector<1x1152xf32>
    %cst_61 = arith.constant dense<0.000000e+00> : vector<1xf32>
    %258 = vector.multi_reduction <add>, %257, %cst_61 [1] : vector<1x1152xf32> to vector<1xf32>
    %259 = vector.shape_cast %258 : vector<1xf32> to vector<1x1xf32>
    %cst_62 = arith.constant 1.152000e+03 : f32
    %260 = vector.broadcast %cst_62 : f32 to vector<1x1xf32>
    %261 = arith.divf %259, %260 : vector<1x1xf32>
    %262 = vector.broadcast %254 : vector<1x1xf32> to vector<1x1152xf32>
    %263 = arith.subf %248, %262 : vector<1x1152xf32>
    %cst_63 = arith.constant 9.99999974E-6 : f32
    %264 = vector.broadcast %cst_63 : f32 to vector<1x1xf32>
    %265 = arith.addf %261, %264 : vector<1x1xf32>
    %266 = math.rsqrt %265 : vector<1x1xf32>
    %267 = vector.broadcast %266 : vector<1x1xf32> to vector<1x1152xf32>
    %268 = arith.mulf %263, %267 : vector<1x1152xf32>
    %269 = vector.broadcast %249 : vector<1x1xf32> to vector<1x1152xf32>
    %270 = arith.mulf %268, %269 : vector<1x1152xf32>
    %271 = vector.broadcast %250 : vector<1x1xf32> to vector<1x1152xf32>
    %272 = arith.addf %270, %271 : vector<1x1152xf32>
    %c0_64 = arith.constant 0 : index
    %c0_65 = arith.constant 0 : index
    %273 = vector.load %arg18[%c0_64, %c0_65] : memref<1x1152xf32, #tpu.memory_space<vmem>>, vector<1x1152xf32>
    tpu.vector_store %arg18[%c0_64, %c0_65], %272 {strides = array<i32>} : memref<1x1152xf32, #tpu.memory_space<vmem>>, vector<1x1152xf32>,
    return
  }
  func.func @transform_0(%arg0: i32) -> (i32, i32) {
    %c0_i32 = arith.constant 0 : i32
    %c0_i32_0 = arith.constant 0 : i32
    %c0_i32_1 = arith.constant 0 : i32
    return %c0_i32, %c0_i32_0 : i32, i32
  }
  func.func @transform_1(%arg0: i32) -> (i32, i32) {
    %c0_i32 = arith.constant 0 : i32
    %c0_i32_0 = arith.constant 0 : i32
    %c0_i32_1 = arith.constant 0 : i32
    return %c0_i32, %c0_i32_0 : i32, i32
  }
  func.func @transform_2(%arg0: i32) -> (i32, i32) {
    %c0_i32 = arith.constant 0 : i32
    %c0_i32_0 = arith.constant 0 : i32
    %c0_i32_1 = arith.constant 0 : i32
    return %c0_i32, %c0_i32_0 : i32, i32
  }
  func.func @transform_3(%arg0: i32) -> (i32, i32) {
    %c0_i32 = arith.constant 0 : i32
    %c0_i32_0 = arith.constant 0 : i32
    %c0_i32_1 = arith.constant 0 : i32
    return %c0_i32, %c0_i32_0 : i32, i32
  }
  func.func @transform_4(%arg0: i32) -> (i32, i32) {
    %c0_i32 = arith.constant 0 : i32
    %c0_i32_0 = arith.constant 0 : i32
    %c0_i32_1 = arith.constant 0 : i32
    return %c0_i32, %c0_i32_0 : i32, i32
  }
  func.func @transform_5(%arg0: i32) -> (i32, i32) {
    %c0_i32 = arith.constant 0 : i32
    %c0_i32_0 = arith.constant 0 : i32
    %c0_i32_1 = arith.constant 0 : i32
    return %c0_i32, %c0_i32_0 : i32, i32
  }
  func.func @transform_6(%arg0: i32) -> (i32, i32) {
    %c0_i32 = arith.constant 0 : i32
    %c0_i32_0 = arith.constant 0 : i32
    %c0_i32_1 = arith.constant 0 : i32
    return %c0_i32, %c0_i32_0 : i32, i32
  }
  func.func @transform_7(%arg0: i32) -> (i32, i32) {
    %c0_i32 = arith.constant 0 : i32
    %c0_i32_0 = arith.constant 0 : i32
    %c0_i32_1 = arith.constant 0 : i32
    return %c0_i32, %c0_i32_0 : i32, i32
  }
  func.func @transform_8(%arg0: i32) -> (i32, i32) {
    %c0_i32 = arith.constant 0 : i32
    %c0_i32_0 = arith.constant 0 : i32
    %c0_i32_1 = arith.constant 0 : i32
    return %c0_i32, %c0_i32_0 : i32, i32
  }
  func.func @transform_9(%arg0: i32) -> (i32, i32) {
    %c0_i32 = arith.constant 0 : i32
    %c0_i32_0 = arith.constant 0 : i32
    %c0_i32_1 = arith.constant 0 : i32
    return %c0_i32, %c0_i32_0 : i32, i32
  }
  func.func @transform_10(%arg0: i32) -> (i32, i32) {
    %c0_i32 = arith.constant 0 : i32
    %c0_i32_0 = arith.constant 0 : i32
    %c0_i32_1 = arith.constant 0 : i32
    return %c0_i32, %c0_i32_0 : i32, i32
  }
  func.func @transform_11(%arg0: i32) -> (i32, i32) {
    %c0_i32 = arith.constant 0 : i32
    %c0_i32_0 = arith.constant 0 : i32
    %c0_i32_1 = arith.constant 0 : i32
    return %c0_i32, %c0_i32_0 : i32, i32
  }
  func.func @transform_12(%arg0: i32) -> (i32, i32) {
    %c0_i32 = arith.constant 0 : i32
    %c0_i32_0 = arith.constant 0 : i32
    %c0_i32_1 = arith.constant 0 : i32
    return %c0_i32, %c0_i32_0 : i32, i32
  }
  func.func @transform_13(%arg0: i32) -> (i32, i32) {
    %c0_i32 = arith.constant 0 : i32
    %c0_i32_0 = arith.constant 0 : i32
    %c0_i32_1 = arith.constant 0 : i32
    return %c0_i32, %c0_i32_0 : i32, i32
  }
  func.func @transform_14(%arg0: i32) -> (i32, i32) {
    %c0_i32 = arith.constant 0 : i32
    %c0_i32_0 = arith.constant 0 : i32
    %c0_i32_1 = arith.constant 0 : i32
    return %c0_i32, %c0_i32_0 : i32, i32
  }
  func.func @transform_15(%arg0: i32) -> (i32, i32) {
    %c0_i32 = arith.constant 0 : i32
    %c0_i32_0 = arith.constant 0 : i32
    %c0_i32_1 = arith.constant 0 : i32
    return %c0_i32, %c0_i32_0 : i32, i32
  }
  func.func @transform_16(%arg0: i32) -> (i32, i32) {
    %c0_i32 = arith.constant 0 : i32
    %c0_i32_0 = arith.constant 0 : i32
    %c0_i32_1 = arith.constant 0 : i32
    return %c0_i32, %c0_i32_0 : i32, i32
  }
  func.func @transform_17(%arg0: i32) -> (i32, i32) {
    %c0_i32 = arith.constant 0 : i32
    %c0_i32_0 = arith.constant 0 : i32
    %c0_i32_1 = arith.constant 0 : i32
    return %c0_i32, %c0_i32_0 : i32, i32
  }
  func.func @transform_18(%arg0: i32) -> (i32, i32) {
    %c0_i32 = arith.constant 0 : i32
    %c0_i32_0 = arith.constant 0 : i32
    %c0_i32_1 = arith.constant 0 : i32
    return %c0_i32, %c0_i32_0 : i32, i32
  }
  func.func @transform_19(%arg0: i32) -> (i32, i32) {
    %c0_i32 = arith.constant 0 : i32
    %c0_i32_0 = arith.constant 0 : i32
    %c0_i32_1 = arith.constant 0 : i32
    return %c0_i32, %c0_i32_0 : i32, i32
  }
}

</mosaic_0001>

<llo_original>
// kernel: generate_sparse_mask_forward.2
$region0: #{generate_sparse_mask_forward.2}
  #allocation0 [shape = 'u32[]', space=smem, size = 0x4, offset = 0x4, fixed_abs, tag = 'smem constant byte address 0x4 - core index']
  #allocation1 [shape = 'u32[72,128]{1,0:T(1,128)}', space=vmem, size = 0x9000, scoped, tag = 'internal scratch']
  %s0 = inlined_call_operand.vmem [shape: f32[12,128], index: 0, kind: input, shape index: {}]
  %s1 = inlined_call_operand.vmem [shape: f32[72,12], index: 1, kind: input, shape index: {}]
  %s2 = inlined_call_operand.vmem [shape: f32[72,1], index: 2, kind: input, shape index: {}]
  %s3 = inlined_call_operand.vmem [shape: f32[72,128], index: 3, kind: output, shape index: {}]
  %s4 = sld [smem:[#allocation0]]
  $region22: #{generate_sparse_mask_forward.2} parent=0
    _
  %s6 = ssub.s32 1, %s4
  %s7 = scalar_select 0, %s6, %s4
  // Predicated region
  $region2: #{generate_sparse_mask_forward.2} parent=0 // pred_check
    _
  $region3: #{generate_sparse_mask_forward.2} parent=0 // pred_check_branch
    %9 = sbr.rel (0) target = $region5
  $region4: #{generate_sparse_mask_forward.2} parent=0 // pred_region
    _
  $region5: #{generate_sparse_mask_forward.2} parent=0 // pred_fallthru
    _
  // Predicated region
  $region6: #{generate_sparse_mask_forward.2} parent=0 // pred_check
    _
  $region7: #{generate_sparse_mask_forward.2} parent=0 // pred_check_branch
    %11 = sbr.rel (0) target = $region9
  $region8: #{generate_sparse_mask_forward.2} parent=0 // pred_region
    _
  $region9: #{generate_sparse_mask_forward.2} parent=0 // pred_fallthru
    _
  // Predicated region
  $region10: #{generate_sparse_mask_forward.2} parent=0 // pred_check
    _
  $region11: #{generate_sparse_mask_forward.2} parent=0 // pred_check_branch
    %13 = sbr.rel (0) target = $region13
  $region12: #{generate_sparse_mask_forward.2} parent=0 // pred_region
    _
  $region13: #{generate_sparse_mask_forward.2} parent=0 // pred_fallthru
    _
  %v14 = vld [vmem:[%s1] sm:$0xff]
  %v15 = vld [vmem:[%s1 + $0x8] sm:$0xff]
  %v16 = vld [vmem:[%s1 + $0x10] sm:$0xff]
  %v17 = vld [vmem:[%s1 + $0x18] sm:$0xff]
  %v18 = vld [vmem:[%s1 + $0x20] sm:$0xff]
  %v19 = vld [vmem:[%s1 + $0x28] sm:$0xff]
  %v20 = vld [vmem:[%s1 + $0x30] sm:$0xff]
  %v21 = vld [vmem:[%s1 + $0x38] sm:$0xff]
  %v22 = vld [vmem:[%s1 + $0x40] sm:$0xff]
  %v23 = vld [vmem:[%s0] sm:$0xff]
  %v24 = vld [vmem:[%s0 + $0x8] sm:$0xf]
  %v25 = vld [vmem:[%s2] sm:$0xff]
  %v26 = vld [vmem:[%s2 + $0x8] sm:$0xff]
  %v27 = vld [vmem:[%s2 + $0x10] sm:$0xff]
  %v28 = vld [vmem:[%s2 + $0x18] sm:$0xff]
  %v29 = vld [vmem:[%s2 + $0x20] sm:$0xff]
  %v30 = vld [vmem:[%s2 + $0x28] sm:$0xff]
  %v31 = vld [vmem:[%s2 + $0x30] sm:$0xff]
  %v32 = vld [vmem:[%s2 + $0x38] sm:$0xff]
  %v33 = vld [vmem:[%s2 + $0x40] sm:$0xff]
  %35 = vset.pattern.permute.xlu0 0
  %36 = vperm.xlu0 %35, %v25
  %v37 = vpop.permute.xlu0 %36
  %40 = vset.pattern.permute.xlu0 0
  %41 = vperm.xlu0 %40, %v26
  %v42 = vpop.permute.xlu0 %41
  %45 = vset.pattern.permute.xlu0 0
  %46 = vperm.xlu0 %45, %v27
  %v47 = vpop.permute.xlu0 %46
  %50 = vset.pattern.permute.xlu0 0
  %51 = vperm.xlu0 %50, %v28
  %v52 = vpop.permute.xlu0 %51
  %55 = vset.pattern.permute.xlu0 0
  %56 = vperm.xlu0 %55, %v29
  %v57 = vpop.permute.xlu0 %56
  %60 = vset.pattern.permute.xlu0 0
  %61 = vperm.xlu0 %60, %v30
  %v62 = vpop.permute.xlu0 %61
  %65 = vset.pattern.permute.xlu0 0
  %66 = vperm.xlu0 %65, %v31
  %v67 = vpop.permute.xlu0 %66
  %70 = vset.pattern.permute.xlu0 0
  %71 = vperm.xlu0 %70, %v32
  %v72 = vpop.permute.xlu0 %71
  %75 = vset.pattern.permute.xlu0 0
  %76 = vperm.xlu0 %75, %v33
  %v77 = vpop.permute.xlu0 %76
  %vm79 = vcmask 97280
  %v81 = vsel %vm79, %v14, 0
  %v84 = vsel %vm79, %v15, 0
  %v87 = vsel %vm79, %v16, 0
  %v90 = vsel %vm79, %v17, 0
  %v93 = vsel %vm79, %v18, 0
  %v96 = vsel %vm79, %v19, 0
  %v99 = vsel %vm79, %v20, 0
  %v102 = vsel %vm79, %v21, 0
  %v105 = vsel %vm79, %v22, 0
  %vm107 = vcmask 1043456
  %v109 = vsel %vm107, %v24, 0
  %111 = vmatpush.msra.mxu0 0.0
  %112 = vmatpush.msra.mxu0 0.0
  %113 = vmatpush.msra.mxu0 0.0
  %114 = vmatpush.msra.mxu0 0.0
  %115 = vmatpush.msra.mxu0 0.0
  %116 = vmatpush.msra.mxu0 0.0
  %117 = vmatpush.msra.mxu0 0.0
  %118 = vmatpush.msra.mxu0 0.0
  %119 = vmatpush.msra.mxu0 0.0
  %120 = vmatpush.msra.mxu0 0.0
  %121 = vmatpush.msra.mxu0 0.0
  %122 = vmatpush.msra.mxu0 0.0
  %123 = vmatpush.msra.mxu0 0.0
  %124 = vmatpush.msra.mxu0 0.0
  %125 = vmatpush.msra.mxu0 %v109
  %126 = vmatpush.msra.mxu0 %v23
  %127 = vmatmul.f32.gmra.mxu0 %v81
  %v128 = vpop.f32.mrf.mxu0
  %v129 = vadd.f32 %v37, %v128
  %130 = vmatmul.f32.gmra.mxu0 %v84
  %v131 = vpop.f32.mrf.mxu0
  %v132 = vadd.f32 %v42, %v131
  %133 = vmatmul.f32.gmra.mxu0 %v87
  %v134 = vpop.f32.mrf.mxu0
  %v135 = vadd.f32 %v47, %v134
  %136 = vmatmul.f32.gmra.mxu0 %v90
  %v137 = vpop.f32.mrf.mxu0
  %v138 = vadd.f32 %v52, %v137
  %139 = vmatmul.f32.gmra.mxu0 %v93
  %v140 = vpop.f32.mrf.mxu0
  %v141 = vadd.f32 %v57, %v140
  %142 = vmatmul.f32.gmra.mxu0 %v96
  %v143 = vpop.f32.mrf.mxu0
  %v144 = vadd.f32 %v62, %v143
  %145 = vmatmul.f32.gmra.mxu0 %v99
  %v146 = vpop.f32.mrf.mxu0
  %v147 = vadd.f32 %v67, %v146
  %148 = vmatmul.f32.gmra.mxu0 %v102
  %v149 = vpop.f32.mrf.mxu0
  %v150 = vadd.f32 %v72, %v149
  %151 = vmatmul.f32.gmra.mxu0 %v105
  %v152 = vpop.f32.mrf.mxu0
  %v153 = vadd.f32 %v77, %v152
  %154 = vdwg.mxu0
  %v155 = vmax.f32 %v129, 0.0
  %v156 = vmax.f32 %v132, 0.0
  %v157 = vmax.f32 %v135, 0.0
  %v158 = vmax.f32 %v138, 0.0
  %v159 = vmax.f32 %v141, 0.0
  %v160 = vmax.f32 %v144, 0.0
  %v161 = vmax.f32 %v147, 0.0
  %v162 = vmax.f32 %v150, 0.0
  %v163 = vmax.f32 %v153, 0.0
  %164 = vst [vmem:[%s3] sm:$0xff] %v155
  %165 = vst [vmem:[%s3 + $0x8] sm:$0xff] %v156
  %166 = vst [vmem:[%s3 + $0x10] sm:$0xff] %v157
  %167 = vst [vmem:[%s3 + $0x18] sm:$0xff] %v158
  %168 = vst [vmem:[%s3 + $0x20] sm:$0xff] %v159
  %169 = vst [vmem:[%s3 + $0x28] sm:$0xff] %v160
  %170 = vst [vmem:[%s3 + $0x30] sm:$0xff] %v161
  %171 = vst [vmem:[%s3 + $0x38] sm:$0xff] %v162
  %172 = vst [vmem:[%s3 + $0x40] sm:$0xff] %v163
  // Predicated region
  $region14: #{generate_sparse_mask_forward.2} parent=0 // pred_check
    _
  $region15: #{generate_sparse_mask_forward.2} parent=0 // pred_check_branch
    %174 = sbr.rel (0) target = $region17
  $region16: #{generate_sparse_mask_forward.2} parent=0 // pred_region
    _
  $region17: #{generate_sparse_mask_forward.2} parent=0 // pred_fallthru
    _
  // Predicated region
  $region18: #{generate_sparse_mask_forward.2} parent=0 // pred_check
    _
  $region19: #{generate_sparse_mask_forward.2} parent=0 // pred_check_branch
    %176 = sbr.rel (0) target = $region21
  $region20: #{generate_sparse_mask_forward.2} parent=0 // pred_region
    _
  $region21: #{generate_sparse_mask_forward.2} parent=0 // pred_fallthru
    _

// kernel: generate_sparse_mask_forward.3
$region0: #{generate_sparse_mask_forward.3}
  #allocation0 [shape = 'u32[]', space=smem, size = 0x4, offset = 0x4, fixed_abs, tag = 'smem constant byte address 0x4 - core index']
  #allocation1 [shape = 'u32[72,128]{1,0:T(1,128)}', space=vmem, size = 0x9000, scoped, tag = 'internal scratch']
  #allocation2 [shape = 'f32[1,1]{1,0:T(1,128)S(1)}', space=vmem, size = 0x200, scoped, tag = 'scoped memory for generate_sparse_mask_forward.3']
  #allocation3 [shape = 'f32[1,1]{1,0:T(1,128)S(1)}', space=vmem, size = 0x200, scoped, tag = 'scoped memory for generate_sparse_mask_forward.3']
  %s0 = inlined_call_operand.vmem [shape: f32[9,1152], index: 0, kind: input, shape index: {}]
  %s1 = inlined_call_operand.vmem [shape: f32[8,1202], index: 1, kind: input, shape index: {}]
  %s2 = inlined_call_operand.vmem [shape: f32[4,1202], index: 2, kind: input, shape index: {}]
  %s3 = inlined_call_operand.vmem [shape: f32[3,72], index: 3, kind: input, shape index: {}]
  %s4 = inlined_call_operand.vmem [shape: f32[3,1], index: 4, kind: input, shape index: {}]
  %s5 = inlined_call_operand.vmem [shape: f32[3,1], index: 5, kind: input, shape index: {}]
  %s6 = inlined_call_operand.vmem [shape: f32[8,36], index: 6, kind: input, shape index: {}]
  %s7 = inlined_call_operand.vmem [shape: f32[8,1], index: 7, kind: input, shape index: {}]
  %s8 = inlined_call_operand.vmem [shape: f32[3,72], index: 8, kind: input, shape index: {}]
  %s9 = inlined_call_operand.vmem [shape: f32[3,1], index: 9, kind: input, shape index: {}]
  %s10 = inlined_call_operand.vmem [shape: f32[3,1], index: 10, kind: input, shape index: {}]
  %s11 = inlined_call_operand.vmem [shape: f32[3,27], index: 11, kind: input, shape index: {}]
  %s12 = inlined_call_operand.vmem [shape: f32[3,1], index: 12, kind: input, shape index: {}]
  %s13 = inlined_call_operand.vmem [shape: f32[3,1], index: 13, kind: input, shape index: {}]
  %s14 = inlined_call_operand.vmem [shape: f32[3,1], index: 14, kind: input, shape index: {}]
  %s15 = inlined_call_operand.<no memory space> [shape: f32[1,1], index: 15, kind: input, shape index: {}]
  %s16 = inlined_call_operand.<no memory space> [shape: f32[1,1], index: 16, kind: input, shape index: {}]
  %s17 = inlined_call_operand.vmem [shape: f32[1,1152], index: 17, kind: output, shape index: {0}]
  %s18 = inlined_call_operand.vmem [shape: f32[3,1152], index: 18, kind: output, shape index: {1}]
  %s19 = inlined_call_operand.vmem [shape: f32[3,1152], index: 19, kind: output, shape index: {2}]
  %20 = xla_tuple %s17, %s18, %s19
  %s21 = sld [smem:[#allocation0]]
  $region94: #{generate_sparse_mask_forward.3} parent=0
    _
  %s23 = ssub.s32 1, %s21
  %s24 = scalar_select 0, %s23, %s21
  %v25 = vstv %s15
  %26 = vst [vmem:[#allocation2] sm:$0x1] %v25
  %v27 = vstv %s16
  %28 = vst [vmem:[#allocation3] sm:$0x1] %v27
  // Predicated region
  $region2: #{generate_sparse_mask_forward.3} parent=0 // pred_check
    _
  $region3: #{generate_sparse_mask_forward.3} parent=0 // pred_check_branch
    %30 = sbr.rel (0) target = $region5
  $region4: #{generate_sparse_mask_forward.3} parent=0 // pred_region
    _
  $region5: #{generate_sparse_mask_forward.3} parent=0 // pred_fallthru
    _
  // Predicated region
  $region6: #{generate_sparse_mask_forward.3} parent=0 // pred_check
    _
  $region7: #{generate_sparse_mask_forward.3} parent=0 // pred_check_branch
    %32 = sbr.rel (0) target = $region9
  $region8: #{generate_sparse_mask_forward.3} parent=0 // pred_region
    _
  $region9: #{generate_sparse_mask_forward.3} parent=0 // pred_fallthru
    _
  // Predicated region
  $region10: #{generate_sparse_mask_forward.3} parent=0 // pred_check
    _
  $region11: #{generate_sparse_mask_forward.3} parent=0 // pred_check_branch
    %34 = sbr.rel (0) target = $region13
  $region12: #{generate_sparse_mask_forward.3} parent=0 // pred_region
    _
  $region13: #{generate_sparse_mask_forward.3} parent=0 // pred_fallthru
    _
  // Predicated region
  $region14: #{generate_sparse_mask_forward.3} parent=0 // pred_check
    _
  $region15: #{generate_sparse_mask_forward.3} parent=0 // pred_check_branch
    %36 = sbr.rel (0) target = $region17
  $region16: #{generate_sparse_mask_forward.3} parent=0 // pred_region
    _
  $region17: #{generate_sparse_mask_forward.3} parent=0 // pred_fallthru
    _
  // Predicated region
  $region18: #{generate_sparse_mask_forward.3} parent=0 // pred_check
    _
  $region19: #{generate_sparse_mask_forward.3} parent=0 // pred_check_branch
    %38 = sbr.rel (0) target = $region21
  $region20: #{generate_sparse_mask_forward.3} parent=0 // pred_region
    _
  $region21: #{generate_sparse_mask_forward.3} parent=0 // pred_fallthru
    _
  // Predicated region
  $region22: #{generate_sparse_mask_forward.3} parent=0 // pred_check
    _
  $region23: #{generate_sparse_mask_forward.3} parent=0 // pred_check_branch
    %40 = sbr.rel (0) target = $region25
  $region24: #{generate_sparse_mask_forward.3} parent=0 // pred_region
    _
  $region25: #{generate_sparse_mask_forward.3} parent=0 // pred_fallthru
    _
  // Predicated region
  $region26: #{generate_sparse_mask_forward.3} parent=0 // pred_check
    _
  $region27: #{generate_sparse_mask_forward.3} parent=0 // pred_check_branch
    %42 = sbr.rel (0) target = $region29
  $region28: #{generate_sparse_mask_forward.3} parent=0 // pred_region
    _
  $region29: #{generate_sparse_mask_forward.3} parent=0 // pred_fallthru
    _
  // Predicated region
  $region30: #{generate_sparse_mask_forward.3} parent=0 // pred_check
    _
  $region31: #{generate_sparse_mask_forward.3} parent=0 // pred_check_branch
    %44 = sbr.rel (0) target = $region33
  $region32: #{generate_sparse_mask_forward.3} parent=0 // pred_region
    _
  $region33: #{generate_sparse_mask_forward.3} parent=0 // pred_fallthru
    _
  // Predicated region
  $region34: #{generate_sparse_mask_forward.3} parent=0 // pred_check
    _
  $region35: #{generate_sparse_mask_forward.3} parent=0 // pred_check_branch
    %46 = sbr.rel (0) target = $region37
  $region36: #{generate_sparse_mask_forward.3} parent=0 // pred_region
    _
  $region37: #{generate_sparse_mask_forward.3} parent=0 // pred_fallthru
    _
  // Predicated region
  $region38: #{generate_sparse_mask_forward.3} parent=0 // pred_check
    _
  $region39: #{generate_sparse_mask_forward.3} parent=0 // pred_check_branch
    %48 = sbr.rel (0) target = $region41
  $region40: #{generate_sparse_mask_forward.3} parent=0 // pred_region
    _
  $region41: #{generate_sparse_mask_forward.3} parent=0 // pred_fallthru
    _
  // Predicated region
  $region42: #{generate_sparse_mask_forward.3} parent=0 // pred_check
    _
  $region43: #{generate_sparse_mask_forward.3} parent=0 // pred_check_branch
    %50 = sbr.rel (0) target = $region45
  $region44: #{generate_sparse_mask_forward.3} parent=0 // pred_region
    _
  $region45: #{generate_sparse_mask_forward.3} parent=0 // pred_fallthru
    _
  // Predicated region
  $region46: #{generate_sparse_mask_forward.3} parent=0 // pred_check
    _
  $region47: #{generate_sparse_mask_forward.3} parent=0 // pred_check_branch
    %52 = sbr.rel (0) target = $region49
  $region48: #{generate_sparse_mask_forward.3} parent=0 // pred_region
    _
  $region49: #{generate_sparse_mask_forward.3} parent=0 // pred_fallthru
    _
  // Predicated region
  $region50: #{generate_sparse_mask_forward.3} parent=0 // pred_check
    _
  $region51: #{generate_sparse_mask_forward.3} parent=0 // pred_check_branch
    %54 = sbr.rel (0) target = $region53
  $region52: #{generate_sparse_mask_forward.3} parent=0 // pred_region
    _
  $region53: #{generate_sparse_mask_forward.3} parent=0 // pred_fallthru
    _
  // Predicated region
  $region54: #{generate_sparse_mask_forward.3} parent=0 // pred_check
    _
  $region55: #{generate_sparse_mask_forward.3} parent=0 // pred_check_branch
    %56 = sbr.rel (0) target = $region57
  $region56: #{generate_sparse_mask_forward.3} parent=0 // pred_region
    _
  $region57: #{generate_sparse_mask_forward.3} parent=0 // pred_fallthru
    _
  // Predicated region
  $region58: #{generate_sparse_mask_forward.3} parent=0 // pred_check
    _
  $region59: #{generate_sparse_mask_forward.3} parent=0 // pred_check_branch
    %58 = sbr.rel (0) target = $region61
  $region60: #{generate_sparse_mask_forward.3} parent=0 // pred_region
    _
  $region61: #{generate_sparse_mask_forward.3} parent=0 // pred_fallthru
    _
  // Predicated region
  $region62: #{generate_sparse_mask_forward.3} parent=0 // pred_check
    _
  $region63: #{generate_sparse_mask_forward.3} parent=0 // pred_check_branch
    %60 = sbr.rel (0) target = $region65
  $region64: #{generate_sparse_mask_forward.3} parent=0 // pred_region
    _
  $region65: #{generate_sparse_mask_forward.3} parent=0 // pred_fallthru
    _
  // Predicated region
  $region66: #{generate_sparse_mask_forward.3} parent=0 // pred_check
    _
  $region67: #{generate_sparse_mask_forward.3} parent=0 // pred_check_branch
    %62 = sbr.rel (0) target = $region69
  $region68: #{generate_sparse_mask_forward.3} parent=0 // pred_region
    _
  $region69: #{generate_sparse_mask_forward.3} parent=0 // pred_fallthru
    _
  %v63 = vld [vmem:[%s0] sm:$0xff]
  %v64 = vld [vmem:[%s0 + $0x8] sm:$0xff]
  %v65 = vld [vmem:[%s0 + $0x10] sm:$0xff]
  %v66 = vld [vmem:[%s0 + $0x18] sm:$0xff]
  %v67 = vld [vmem:[%s0 + $0x20] sm:$0xff]
  %v68 = vld [vmem:[%s0 + $0x28] sm:$0xff]
  %v69 = vld [vmem:[%s0 + $0x30] sm:$0xff]
  %v70 = vld [vmem:[%s0 + $0x38] sm:$0xff]
  %v71 = vld [vmem:[%s0 + $0x40] sm:$0xff]
  %v72 = vld [vmem:[%s0 + $0x48] sm:$0x1]
  %v73 = vld [vmem:[%s0 + $0x50] sm:$0x1]
  %v74 = vld [vmem:[%s0 + $0x58] sm:$0x1]
  %v75 = vld [vmem:[%s0 + $0x60] sm:$0x1]
  %v76 = vld [vmem:[%s0 + $0x68] sm:$0x1]
  %v77 = vld [vmem:[%s0 + $0x70] sm:$0x1]
  %v78 = vld [vmem:[%s0 + $0x78] sm:$0x1]
  %v79 = vld [vmem:[%s0 + $0x80] sm:$0x1]
  %v80 = vld [vmem:[%s0 + $0x88] sm:$0x1]
  %v81 = vld [vmem:[%s1] sm:$0xff]
  %v82 = vld [vmem:[%s1 + $0x8] sm:$0xff]
  %v83 = vld [vmem:[%s1 + $0x10] sm:$0xff]
  %v84 = vld [vmem:[%s1 + $0x18] sm:$0xff]
  %v85 = vld [vmem:[%s1 + $0x20] sm:$0xff]
  %v86 = vld [vmem:[%s1 + $0x28] sm:$0xff]
  %v87 = vld [vmem:[%s1 + $0x30] sm:$0xff]
  %v88 = vld [vmem:[%s1 + $0x38] sm:$0xff]
  %v89 = vld [vmem:[%s1 + $0x40] sm:$0xff]
  %v90 = vld [vmem:[%s1 + $0x48] sm:$0xff]
  %v91 = vld [vmem:[%s3] sm:$0x7]
  %v92 = vperm.slane %v63, 0
  %v93 = vperm.slane %v64, 0
  %v94 = vperm.slane %v65, 0
  %v95 = vperm.slane %v66, 0
  %v96 = vperm.slane %v67, 0
  %v97 = vperm.slane %v68, 0
  %v98 = vperm.slane %v69, 0
  %v99 = vperm.slane %v70, 0
  %v100 = vperm.slane %v71, 0
  %v101 = vmul.f32 %v81, %v92
  %v102 = vmul.f32 %v82, %v93
  %v103 = vmul.f32 %v83, %v94
  %v104 = vmul.f32 %v84, %v95
  %v105 = vmul.f32 %v85, %v96
  %v106 = vmul.f32 %v86, %v97
  %v107 = vmul.f32 %v87, %v98
  %v108 = vmul.f32 %v88, %v99
  %v109 = vmul.f32 %v89, %v100
  %v110 = vperm.slane %v63, 1
  %v111 = vperm.slane %v64, 1
  %v112 = vperm.slane %v65, 1
  %v113 = vperm.slane %v66, 1
  %v114 = vperm.slane %v67, 1
  %v115 = vperm.slane %v68, 1
  %v116 = vperm.slane %v69, 1
  %v117 = vperm.slane %v70, 1
  %v118 = vperm.slane %v71, 1
  %128 = vrot.lane.b32.xlu0 %v110, 1
  %v129 = vpop.permute.xlu0 %128
  %130 = vrot.lane.b32.xlu0 %v111, 1
  %v131 = vpop.permute.xlu0 %130
  %132 = vrot.lane.b32.xlu0 %v112, 1
  %v133 = vpop.permute.xlu0 %132
  %134 = vrot.lane.b32.xlu0 %v113, 1
  %v135 = vpop.permute.xlu0 %134
  %136 = vrot.lane.b32.xlu0 %v114, 1
  %v137 = vpop.permute.xlu0 %136
  %138 = vrot.lane.b32.xlu0 %v115, 1
  %v139 = vpop.permute.xlu0 %138
  %140 = vrot.lane.b32.xlu0 %v116, 1
  %v141 = vpop.permute.xlu0 %140
  %142 = vrot.lane.b32.xlu0 %v117, 1
  %v143 = vpop.permute.xlu0 %142
  %144 = vrot.lane.b32.xlu0 %v118, 1
  %v145 = vpop.permute.xlu0 %144
  %vm146 = vcmask 7168
  %v147 = vsel %vm146, %v129, %v131
  %v148 = vsel %vm146, %v131, %v133
  %v149 = vsel %vm146, %v133, %v135
  %v150 = vsel %vm146, %v135, %v137
  %v151 = vsel %vm146, %v137, %v139
  %v152 = vsel %vm146, %v139, %v141
  %v153 = vsel %vm146, %v141, %v143
  %v154 = vsel %vm146, %v143, %v145
  %v165 = vmul.f32 %v81, %v129
  %v166 = vmul.f32 %v82, %v147
  %v167 = vmul.f32 %v83, %v148
  %v168 = vmul.f32 %v84, %v149
  %v169 = vmul.f32 %v85, %v150
  %v170 = vmul.f32 %v86, %v151
  %v171 = vmul.f32 %v87, %v152
  %v172 = vmul.f32 %v88, %v153
  %v173 = vmul.f32 %v89, %v154
  %v174 = vmul.f32 %v90, %v145
  %v175 = vperm.slane %v63, 2
  %v176 = vperm.slane %v64, 2
  %v177 = vperm.slane %v65, 2
  %v178 = vperm.slane %v66, 2
  %v179 = vperm.slane %v67, 2
  %v180 = vperm.slane %v68, 2
  %v181 = vperm.slane %v69, 2
  %v182 = vperm.slane %v70, 2
  %v183 = vperm.slane %v71, 2
  %193 = vrot.lane.b32.xlu0 %v175, 2
  %v194 = vpop.permute.xlu0 %193
  %195 = vrot.lane.b32.xlu0 %v176, 2
  %v196 = vpop.permute.xlu0 %195
  %197 = vrot.lane.b32.xlu0 %v177, 2
  %v198 = vpop.permute.xlu0 %197
  %199 = vrot.lane.b32.xlu0 %v178, 2
  %v200 = vpop.permute.xlu0 %199
  %201 = vrot.lane.b32.xlu0 %v179, 2
  %v202 = vpop.permute.xlu0 %201
  %203 = vrot.lane.b32.xlu0 %v180, 2
  %v204 = vpop.permute.xlu0 %203
  %205 = vrot.lane.b32.xlu0 %v181, 2
  %v206 = vpop.permute.xlu0 %205
  %207 = vrot.lane.b32.xlu0 %v182, 2
  %v208 = vpop.permute.xlu0 %207
  %209 = vrot.lane.b32.xlu0 %v183, 2
  %v210 = vpop.permute.xlu0 %209
  %vm211 = vcmask 15360
  %v212 = vsel %vm211, %v194, %v196
  %v213 = vsel %vm211, %v196, %v198
  %v214 = vsel %vm211, %v198, %v200
  %v215 = vsel %vm211, %v200, %v202
  %v216 = vsel %vm211, %v202, %v204
  %v217 = vsel %vm211, %v204, %v206
  %v218 = vsel %vm211, %v206, %v208
  %v219 = vsel %vm211, %v208, %v210
  %v230 = vmul.f32 %v81, %v194
  %v231 = vmul.f32 %v82, %v212
  %v232 = vmul.f32 %v83, %v213
  %v233 = vmul.f32 %v84, %v214
  %v234 = vmul.f32 %v85, %v215
  %v235 = vmul.f32 %v86, %v216
  %v236 = vmul.f32 %v87, %v217
  %v237 = vmul.f32 %v88, %v218
  %v238 = vmul.f32 %v89, %v219
  %v239 = vmul.f32 %v90, %v210
  %v240 = vperm.slane %v63, 3
  %v241 = vperm.slane %v64, 3
  %v242 = vperm.slane %v65, 3
  %v243 = vperm.slane %v66, 3
  %v244 = vperm.slane %v67, 3
  %v245 = vperm.slane %v68, 3
  %v246 = vperm.slane %v69, 3
  %v247 = vperm.slane %v70, 3
  %v248 = vperm.slane %v71, 3
  %258 = vrot.lane.b32.xlu0 %v240, 24
  %v259 = vpop.permute.xlu0 %258
  %260 = vrot.lane.b32.xlu0 %v241, 24
  %v261 = vpop.permute.xlu0 %260
  %262 = vrot.lane.b32.xlu0 %v242, 24
  %v263 = vpop.permute.xlu0 %262
  %264 = vrot.lane.b32.xlu0 %v243, 24
  %v265 = vpop.permute.xlu0 %264
  %266 = vrot.lane.b32.xlu0 %v244, 24
  %v267 = vpop.permute.xlu0 %266
  %268 = vrot.lane.b32.xlu0 %v245, 24
  %v269 = vpop.permute.xlu0 %268
  %270 = vrot.lane.b32.xlu0 %v246, 24
  %v271 = vpop.permute.xlu0 %270
  %272 = vrot.lane.b32.xlu0 %v247, 24
  %v273 = vpop.permute.xlu0 %272
  %274 = vrot.lane.b32.xlu0 %v248, 24
  %v275 = vpop.permute.xlu0 %274
  %vm276 = vcmask 195584
  %v277 = vsel %vm276, %v259, %v261
  %v278 = vsel %vm276, %v261, %v263
  %v279 = vsel %vm276, %v263, %v265
  %v280 = vsel %vm276, %v265, %v267
  %v281 = vsel %vm276, %v267, %v269
  %v282 = vsel %vm276, %v269, %v271
  %v283 = vsel %vm276, %v271, %v273
  %v284 = vsel %vm276, %v273, %v275
  %v295 = vmul.f32 %v81, %v259
  %v296 = vmul.f32 %v82, %v277
  %v297 = vmul.f32 %v83, %v278
  %v298 = vmul.f32 %v84, %v279
  %v299 = vmul.f32 %v85, %v280
  %v300 = vmul.f32 %v86, %v281
  %v301 = vmul.f32 %v87, %v282
  %v302 = vmul.f32 %v88, %v283
  %v303 = vmul.f32 %v89, %v284
  %v304 = vmul.f32 %v90, %v275
  %v305 = vperm.slane %v63, 4
  %v306 = vperm.slane %v64, 4
  %v307 = vperm.slane %v65, 4
  %v308 = vperm.slane %v66, 4
  %v309 = vperm.slane %v67, 4
  %v310 = vperm.slane %v68, 4
  %v311 = vperm.slane %v69, 4
  %v312 = vperm.slane %v70, 4
  %v313 = vperm.slane %v71, 4
  %323 = vrot.lane.b32.xlu0 %v305, 25
  %v324 = vpop.permute.xlu0 %323
  %325 = vrot.lane.b32.xlu0 %v306, 25
  %v326 = vpop.permute.xlu0 %325
  %327 = vrot.lane.b32.xlu0 %v307, 25
  %v328 = vpop.permute.xlu0 %327
  %329 = vrot.lane.b32.xlu0 %v308, 25
  %v330 = vpop.permute.xlu0 %329
  %331 = vrot.lane.b32.xlu0 %v309, 25
  %v332 = vpop.permute.xlu0 %331
  %333 = vrot.lane.b32.xlu0 %v310, 25
  %v334 = vpop.permute.xlu0 %333
  %335 = vrot.lane.b32.xlu0 %v311, 25
  %v336 = vpop.permute.xlu0 %335
  %337 = vrot.lane.b32.xlu0 %v312, 25
  %v338 = vpop.permute.xlu0 %337
  %339 = vrot.lane.b32.xlu0 %v313, 25
  %v340 = vpop.permute.xlu0 %339
  %vm341 = vcmask 203776
  %v342 = vsel %vm341, %v324, %v326
  %v343 = vsel %vm341, %v326, %v328
  %v344 = vsel %vm341, %v328, %v330
  %v345 = vsel %vm341, %v330, %v332
  %v346 = vsel %vm341, %v332, %v334
  %v347 = vsel %vm341, %v334, %v336
  %v348 = vsel %vm341, %v336, %v338
  %v349 = vsel %vm341, %v338, %v340
  %v360 = vmul.f32 %v81, %v324
  %v361 = vmul.f32 %v82, %v342
  %v362 = vmul.f32 %v83, %v343
  %v363 = vmul.f32 %v84, %v344
  %v364 = vmul.f32 %v85, %v345
  %v365 = vmul.f32 %v86, %v346
  %v366 = vmul.f32 %v87, %v347
  %v367 = vmul.f32 %v88, %v348
  %v368 = vmul.f32 %v89, %v349
  %v369 = vmul.f32 %v90, %v340
  %v370 = vperm.slane %v63, 5
  %v371 = vperm.slane %v64, 5
  %v372 = vperm.slane %v65, 5
  %v373 = vperm.slane %v66, 5
  %v374 = vperm.slane %v67, 5
  %v375 = vperm.slane %v68, 5
  %v376 = vperm.slane %v69, 5
  %v377 = vperm.slane %v70, 5
  %v378 = vperm.slane %v71, 5
  %388 = vrot.lane.b32.xlu0 %v370, 26
  %v389 = vpop.permute.xlu0 %388
  %390 = vrot.lane.b32.xlu0 %v371, 26
  %v391 = vpop.permute.xlu0 %390
  %392 = vrot.lane.b32.xlu0 %v372, 26
  %v393 = vpop.permute.xlu0 %392
  %394 = vrot.lane.b32.xlu0 %v373, 26
  %v395 = vpop.permute.xlu0 %394
  %396 = vrot.lane.b32.xlu0 %v374, 26
  %v397 = vpop.permute.xlu0 %396
  %398 = vrot.lane.b32.xlu0 %v375, 26
  %v399 = vpop.permute.xlu0 %398
  %400 = vrot.lane.b32.xlu0 %v376, 26
  %v401 = vpop.permute.xlu0 %400
  %402 = vrot.lane.b32.xlu0 %v377, 26
  %v403 = vpop.permute.xlu0 %402
  %404 = vrot.lane.b32.xlu0 %v378, 26
  %v405 = vpop.permute.xlu0 %404
  %vm406 = vcmask 211968
  %v407 = vsel %vm406, %v389, %v391
  %v408 = vsel %vm406, %v391, %v393
  %v409 = vsel %vm406, %v393, %v395
  %v410 = vsel %vm406, %v395, %v397
  %v411 = vsel %vm406, %v397, %v399
  %v412 = vsel %vm406, %v399, %v401
  %v413 = vsel %vm406, %v401, %v403
  %v414 = vsel %vm406, %v403, %v405
  %v425 = vmul.f32 %v81, %v389
  %v426 = vmul.f32 %v82, %v407
  %v427 = vmul.f32 %v83, %v408
  %v428 = vmul.f32 %v84, %v409
  %v429 = vmul.f32 %v85, %v410
  %v430 = vmul.f32 %v86, %v411
  %v431 = vmul.f32 %v87, %v412
  %v432 = vmul.f32 %v88, %v413
  %v433 = vmul.f32 %v89, %v414
  %v434 = vmul.f32 %v90, %v405
  %v435 = vperm.slane %v63, 6
  %v436 = vperm.slane %v64, 6
  %v437 = vperm.slane %v65, 6
  %v438 = vperm.slane %v66, 6
  %v439 = vperm.slane %v67, 6
  %v440 = vperm.slane %v68, 6
  %v441 = vperm.slane %v69, 6
  %v442 = vperm.slane %v70, 6
  %v443 = vperm.slane %v71, 6
  %453 = vrot.lane.b32.xlu0 %v435, 48
  %v454 = vpop.permute.xlu0 %453
  %455 = vrot.lane.b32.xlu0 %v436, 48
  %v456 = vpop.permute.xlu0 %455
  %457 = vrot.lane.b32.xlu0 %v437, 48
  %v458 = vpop.permute.xlu0 %457
  %459 = vrot.lane.b32.xlu0 %v438, 48
  %v460 = vpop.permute.xlu0 %459
  %461 = vrot.lane.b32.xlu0 %v439, 48
  %v462 = vpop.permute.xlu0 %461
  %463 = vrot.lane.b32.xlu0 %v440, 48
  %v464 = vpop.permute.xlu0 %463
  %465 = vrot.lane.b32.xlu0 %v441, 48
  %v466 = vpop.permute.xlu0 %465
  %467 = vrot.lane.b32.xlu0 %v442, 48
  %v468 = vpop.permute.xlu0 %467
  %469 = vrot.lane.b32.xlu0 %v443, 48
  %v470 = vpop.permute.xlu0 %469
  %vm471 = vcmask 392192
  %v472 = vsel %vm471, %v454, %v456
  %v473 = vsel %vm471, %v456, %v458
  %v474 = vsel %vm471, %v458, %v460
  %v475 = vsel %vm471, %v460, %v462
  %v476 = vsel %vm471, %v462, %v464
  %v477 = vsel %vm471, %v464, %v466
  %v478 = vsel %vm471, %v466, %v468
  %v479 = vsel %vm471, %v468, %v470
  %v490 = vmul.f32 %v81, %v454
  %v491 = vmul.f32 %v82, %v472
  %v492 = vmul.f32 %v83, %v473
  %v493 = vmul.f32 %v84, %v474
  %v494 = vmul.f32 %v85, %v475
  %v495 = vmul.f32 %v86, %v476
  %v496 = vmul.f32 %v87, %v477
  %v497 = vmul.f32 %v88, %v478
  %v498 = vmul.f32 %v89, %v479
  %v499 = vmul.f32 %v90, %v470
  %v500 = vperm.slane %v63, 7
  %v501 = vperm.slane %v64, 7
  %v502 = vperm.slane %v65, 7
  %v503 = vperm.slane %v66, 7
  %v504 = vperm.slane %v67, 7
  %v505 = vperm.slane %v68, 7
  %v506 = vperm.slane %v69, 7
  %v507 = vperm.slane %v70, 7
  %v508 = vperm.slane %v71, 7
  %518 = vrot.lane.b32.xlu0 %v500, 49
  %v519 = vpop.permute.xlu0 %518
  %520 = vrot.lane.b32.xlu0 %v501, 49
  %v521 = vpop.permute.xlu0 %520
  %522 = vrot.lane.b32.xlu0 %v502, 49
  %v523 = vpop.permute.xlu0 %522
  %524 = vrot.lane.b32.xlu0 %v503, 49
  %v525 = vpop.permute.xlu0 %524
  %526 = vrot.lane.b32.xlu0 %v504, 49
  %v527 = vpop.permute.xlu0 %526
  %528 = vrot.lane.b32.xlu0 %v505, 49
  %v529 = vpop.permute.xlu0 %528
  %530 = vrot.lane.b32.xlu0 %v506, 49
  %v531 = vpop.permute.xlu0 %530
  %532 = vrot.lane.b32.xlu0 %v507, 49
  %v533 = vpop.permute.xlu0 %532
  %534 = vrot.lane.b32.xlu0 %v508, 49
  %v535 = vpop.permute.xlu0 %534
  %vm536 = vcmask 400384
  %v537 = vsel %vm536, %v519, %v521
  %v538 = vsel %vm536, %v521, %v523
  %v539 = vsel %vm536, %v523, %v525
  %v540 = vsel %vm536, %v525, %v527
  %v541 = vsel %vm536, %v527, %v529
  %v542 = vsel %vm536, %v529, %v531
  %v543 = vsel %vm536, %v531, %v533
  %v544 = vsel %vm536, %v533, %v535
  %v555 = vmul.f32 %v81, %v519
  %v556 = vmul.f32 %v82, %v537
  %v557 = vmul.f32 %v83, %v538
  %v558 = vmul.f32 %v84, %v539
  %v559 = vmul.f32 %v85, %v540
  %v560 = vmul.f32 %v86, %v541
  %v561 = vmul.f32 %v87, %v542
  %v562 = vmul.f32 %v88, %v543
  %v563 = vmul.f32 %v89, %v544
  %v564 = vmul.f32 %v90, %v535
  %v565 = vperm.slane %v72, 0
  %v566 = vperm.slane %v73, 0
  %v567 = vperm.slane %v74, 0
  %v568 = vperm.slane %v75, 0
  %v569 = vperm.slane %v76, 0
  %v570 = vperm.slane %v77, 0
  %v571 = vperm.slane %v78, 0
  %v572 = vperm.slane %v79, 0
  %v573 = vperm.slane %v80, 0
  %583 = vrot.lane.b32.xlu0 %v565, 50
  %v584 = vpop.permute.xlu0 %583
  %585 = vrot.lane.b32.xlu0 %v566, 50
  %v586 = vpop.permute.xlu0 %585
  %587 = vrot.lane.b32.xlu0 %v567, 50
  %v588 = vpop.permute.xlu0 %587
  %589 = vrot.lane.b32.xlu0 %v568, 50
  %v590 = vpop.permute.xlu0 %589
  %591 = vrot.lane.b32.xlu0 %v569, 50
  %v592 = vpop.permute.xlu0 %591
  %593 = vrot.lane.b32.xlu0 %v570, 50
  %v594 = vpop.permute.xlu0 %593
  %595 = vrot.lane.b32.xlu0 %v571, 50
  %v596 = vpop.permute.xlu0 %595
  %597 = vrot.lane.b32.xlu0 %v572, 50
  %v598 = vpop.permute.xlu0 %597
  %599 = vrot.lane.b32.xlu0 %v573, 50
  %v600 = vpop.permute.xlu0 %599
  %vm601 = vcmask 408576
  %v602 = vsel %vm601, %v584, %v586
  %v603 = vsel %vm601, %v586, %v588
  %v604 = vsel %vm601, %v588, %v590
  %v605 = vsel %vm601, %v590, %v592
  %v606 = vsel %vm601, %v592, %v594
  %v607 = vsel %vm601, %v594, %v596
  %v608 = vsel %vm601, %v596, %v598
  %v609 = vsel %vm601, %v598, %v600
  %v620 = vmul.f32 %v81, %v584
  %v621 = vmul.f32 %v82, %v602
  %v622 = vmul.f32 %v83, %v603
  %v623 = vmul.f32 %v84, %v604
  %v624 = vmul.f32 %v85, %v605
  %v625 = vmul.f32 %v86, %v606
  %v626 = vmul.f32 %v87, %v607
  %v627 = vmul.f32 %v88, %v608
  %v628 = vmul.f32 %v89, %v609
  %v629 = vmul.f32 %v90, %v600
  %640 = vrot.lane.b32.xlu0 %v165, 127
  %v641 = vpop.permute.xlu0 %640
  %642 = vrot.lane.b32.xlu0 %v166, 127
  %v643 = vpop.permute.xlu0 %642
  %644 = vrot.lane.b32.xlu0 %v167, 127
  %v645 = vpop.permute.xlu0 %644
  %646 = vrot.lane.b32.xlu0 %v168, 127
  %v647 = vpop.permute.xlu0 %646
  %648 = vrot.lane.b32.xlu0 %v169, 127
  %v649 = vpop.permute.xlu0 %648
  %650 = vrot.lane.b32.xlu0 %v170, 127
  %v651 = vpop.permute.xlu0 %650
  %652 = vrot.lane.b32.xlu0 %v171, 127
  %v653 = vpop.permute.xlu0 %652
  %654 = vrot.lane.b32.xlu0 %v172, 127
  %v655 = vpop.permute.xlu0 %654
  %656 = vrot.lane.b32.xlu0 %v173, 127
  %v657 = vpop.permute.xlu0 %656
  %658 = vrot.lane.b32.xlu0 %v174, 127
  %v659 = vpop.permute.xlu0 %658
  %vm660 = vcmask 1039360
  %v661 = vsel %vm660, %v641, %v643
  %v662 = vsel %vm660, %v643, %v645
  %v663 = vsel %vm660, %v645, %v647
  %v664 = vsel %vm660, %v647, %v649
  %v665 = vsel %vm660, %v649, %v651
  %v666 = vsel %vm660, %v651, %v653
  %v667 = vsel %vm660, %v653, %v655
  %v668 = vsel %vm660, %v655, %v657
  %v669 = vsel %vm660, %v657, %v659
  %689 = vrot.lane.b32.xlu0 %v230, 126
  %v690 = vpop.permute.xlu0 %689
  %691 = vrot.lane.b32.xlu0 %v231, 126
  %v692 = vpop.permute.xlu0 %691
  %693 = vrot.lane.b32.xlu0 %v232, 126
  %v694 = vpop.permute.xlu0 %693
  %695 = vrot.lane.b32.xlu0 %v233, 126
  %v696 = vpop.permute.xlu0 %695
  %697 = vrot.lane.b32.xlu0 %v234, 126
  %v698 = vpop.permute.xlu0 %697
  %699 = vrot.lane.b32.xlu0 %v235, 126
  %v700 = vpop.permute.xlu0 %699
  %701 = vrot.lane.b32.xlu0 %v236, 126
  %v702 = vpop.permute.xlu0 %701
  %703 = vrot.lane.b32.xlu0 %v237, 126
  %v704 = vpop.permute.xlu0 %703
  %705 = vrot.lane.b32.xlu0 %v238, 126
  %v706 = vpop.permute.xlu0 %705
  %707 = vrot.lane.b32.xlu0 %v239, 126
  %v708 = vpop.permute.xlu0 %707
  %vm709 = vcmask 1031168
  %v710 = vsel %vm709, %v690, %v692
  %v711 = vsel %vm709, %v692, %v694
  %v712 = vsel %vm709, %v694, %v696
  %v713 = vsel %vm709, %v696, %v698
  %v714 = vsel %vm709, %v698, %v700
  %v715 = vsel %vm709, %v700, %v702
  %v716 = vsel %vm709, %v702, %v704
  %v717 = vsel %vm709, %v704, %v706
  %v718 = vsel %vm709, %v706, %v708
  %738 = vrot.lane.b32.xlu0 %v295, 104
  %v739 = vpop.permute.xlu0 %738
  %740 = vrot.lane.b32.xlu0 %v296, 104
  %v741 = vpop.permute.xlu0 %740
  %742 = vrot.lane.b32.xlu0 %v297, 104
  %v743 = vpop.permute.xlu0 %742
  %744 = vrot.lane.b32.xlu0 %v298, 104
  %v745 = vpop.permute.xlu0 %744
  %746 = vrot.lane.b32.xlu0 %v299, 104
  %v747 = vpop.permute.xlu0 %746
  %748 = vrot.lane.b32.xlu0 %v300, 104
  %v749 = vpop.permute.xlu0 %748
  %750 = vrot.lane.b32.xlu0 %v301, 104
  %v751 = vpop.permute.xlu0 %750
  %752 = vrot.lane.b32.xlu0 %v302, 104
  %v753 = vpop.permute.xlu0 %752
  %754 = vrot.lane.b32.xlu0 %v303, 104
  %v755 = vpop.permute.xlu0 %754
  %756 = vrot.lane.b32.xlu0 %v304, 104
  %v757 = vpop.permute.xlu0 %756
  %vm758 = vcmask 850944
  %v759 = vsel %vm758, %v739, %v741
  %v760 = vsel %vm758, %v741, %v743
  %v761 = vsel %vm758, %v743, %v745
  %v762 = vsel %vm758, %v745, %v747
  %v763 = vsel %vm758, %v747, %v749
  %v764 = vsel %vm758, %v749, %v751
  %v765 = vsel %vm758, %v751, %v753
  %v766 = vsel %vm758, %v753, %v755
  %v767 = vsel %vm758, %v755, %v757
  %787 = vrot.lane.b32.xlu0 %v360, 103
  %v788 = vpop.permute.xlu0 %787
  %789 = vrot.lane.b32.xlu0 %v361, 103
  %v790 = vpop.permute.xlu0 %789
  %791 = vrot.lane.b32.xlu0 %v362, 103
  %v792 = vpop.permute.xlu0 %791
  %793 = vrot.lane.b32.xlu0 %v363, 103
  %v794 = vpop.permute.xlu0 %793
  %795 = vrot.lane.b32.xlu0 %v364, 103
  %v796 = vpop.permute.xlu0 %795
  %797 = vrot.lane.b32.xlu0 %v365, 103
  %v798 = vpop.permute.xlu0 %797
  %799 = vrot.lane.b32.xlu0 %v366, 103
  %v800 = vpop.permute.xlu0 %799
  %801 = vrot.lane.b32.xlu0 %v367, 103
  %v802 = vpop.permute.xlu0 %801
  %803 = vrot.lane.b32.xlu0 %v368, 103
  %v804 = vpop.permute.xlu0 %803
  %805 = vrot.lane.b32.xlu0 %v369, 103
  %v806 = vpop.permute.xlu0 %805
  %vm807 = vcmask 842752
  %v808 = vsel %vm807, %v788, %v790
  %v809 = vsel %vm807, %v790, %v792
  %v810 = vsel %vm807, %v792, %v794
  %v811 = vsel %vm807, %v794, %v796
  %v812 = vsel %vm807, %v796, %v798
  %v813 = vsel %vm807, %v798, %v800
  %v814 = vsel %vm807, %v800, %v802
  %v815 = vsel %vm807, %v802, %v804
  %v816 = vsel %vm807, %v804, %v806
  %836 = vrot.lane.b32.xlu0 %v425, 102
  %v837 = vpop.permute.xlu0 %836
  %838 = vrot.lane.b32.xlu0 %v426, 102
  %v839 = vpop.permute.xlu0 %838
  %840 = vrot.lane.b32.xlu0 %v427, 102
  %v841 = vpop.permute.xlu0 %840
  %842 = vrot.lane.b32.xlu0 %v428, 102
  %v843 = vpop.permute.xlu0 %842
  %844 = vrot.lane.b32.xlu0 %v429, 102
  %v845 = vpop.permute.xlu0 %844
  %846 = vrot.lane.b32.xlu0 %v430, 102
  %v847 = vpop.permute.xlu0 %846
  %848 = vrot.lane.b32.xlu0 %v431, 102
  %v849 = vpop.permute.xlu0 %848
  %850 = vrot.lane.b32.xlu0 %v432, 102
  %v851 = vpop.permute.xlu0 %850
  %852 = vrot.lane.b32.xlu0 %v433, 102
  %v853 = vpop.permute.xlu0 %852
  %854 = vrot.lane.b32.xlu0 %v434, 102
  %v855 = vpop.permute.xlu0 %854
  %vm856 = vcmask 834560
  %v857 = vsel %vm856, %v837, %v839
  %v858 = vsel %vm856, %v839, %v841
  %v859 = vsel %vm856, %v841, %v843
  %v860 = vsel %vm856, %v843, %v845
  %v861 = vsel %vm856, %v845, %v847
  %v862 = vsel %vm856, %v847, %v849
  %v863 = vsel %vm856, %v849, %v851
  %v864 = vsel %vm856, %v851, %v853
  %v865 = vsel %vm856, %v853, %v855
  %885 = vrot.lane.b32.xlu0 %v490, 80
  %v886 = vpop.permute.xlu0 %885
  %887 = vrot.lane.b32.xlu0 %v491, 80
  %v888 = vpop.permute.xlu0 %887
  %889 = vrot.lane.b32.xlu0 %v492, 80
  %v890 = vpop.permute.xlu0 %889
  %891 = vrot.lane.b32.xlu0 %v493, 80
  %v892 = vpop.permute.xlu0 %891
  %893 = vrot.lane.b32.xlu0 %v494, 80
  %v894 = vpop.permute.xlu0 %893
  %895 = vrot.lane.b32.xlu0 %v495, 80
  %v896 = vpop.permute.xlu0 %895
  %897 = vrot.lane.b32.xlu0 %v496, 80
  %v898 = vpop.permute.xlu0 %897
  %899 = vrot.lane.b32.xlu0 %v497, 80
  %v900 = vpop.permute.xlu0 %899
  %901 = vrot.lane.b32.xlu0 %v498, 80
  %v902 = vpop.permute.xlu0 %901
  %903 = vrot.lane.b32.xlu0 %v499, 80
  %v904 = vpop.permute.xlu0 %903
  %vm905 = vcmask 654336
  %v906 = vsel %vm905, %v886, %v888
  %v907 = vsel %vm905, %v888, %v890
  %v908 = vsel %vm905, %v890, %v892
  %v909 = vsel %vm905, %v892, %v894
  %v910 = vsel %vm905, %v894, %v896
  %v911 = vsel %vm905, %v896, %v898
  %v912 = vsel %vm905, %v898, %v900
  %v913 = vsel %vm905, %v900, %v902
  %v914 = vsel %vm905, %v902, %v904
  %934 = vrot.lane.b32.xlu0 %v555, 79
  %v935 = vpop.permute.xlu0 %934
  %936 = vrot.lane.b32.xlu0 %v556, 79
  %v937 = vpop.permute.xlu0 %936
  %938 = vrot.lane.b32.xlu0 %v557, 79
  %v939 = vpop.permute.xlu0 %938
  %940 = vrot.lane.b32.xlu0 %v558, 79
  %v941 = vpop.permute.xlu0 %940
  %942 = vrot.lane.b32.xlu0 %v559, 79
  %v943 = vpop.permute.xlu0 %942
  %944 = vrot.lane.b32.xlu0 %v560, 79
  %v945 = vpop.permute.xlu0 %944
  %946 = vrot.lane.b32.xlu0 %v561, 79
  %v947 = vpop.permute.xlu0 %946
  %948 = vrot.lane.b32.xlu0 %v562, 79
  %v949 = vpop.permute.xlu0 %948
  %950 = vrot.lane.b32.xlu0 %v563, 79
  %v951 = vpop.permute.xlu0 %950
  %952 = vrot.lane.b32.xlu0 %v564, 79
  %v953 = vpop.permute.xlu0 %952
  %vm954 = vcmask 646144
  %v955 = vsel %vm954, %v935, %v937
  %v956 = vsel %vm954, %v937, %v939
  %v957 = vsel %vm954, %v939, %v941
  %v958 = vsel %vm954, %v941, %v943
  %v959 = vsel %vm954, %v943, %v945
  %v960 = vsel %vm954, %v945, %v947
  %v961 = vsel %vm954, %v947, %v949
  %v962 = vsel %vm954, %v949, %v951
  %v963 = vsel %vm954, %v951, %v953
  %983 = vrot.lane.b32.xlu0 %v620, 78
  %v984 = vpop.permute.xlu0 %983
  %985 = vrot.lane.b32.xlu0 %v621, 78
  %v986 = vpop.permute.xlu0 %985
  %987 = vrot.lane.b32.xlu0 %v622, 78
  %v988 = vpop.permute.xlu0 %987
  %989 = vrot.lane.b32.xlu0 %v623, 78
  %v990 = vpop.permute.xlu0 %989
  %991 = vrot.lane.b32.xlu0 %v624, 78
  %v992 = vpop.permute.xlu0 %991
  %993 = vrot.lane.b32.xlu0 %v625, 78
  %v994 = vpop.permute.xlu0 %993
  %995 = vrot.lane.b32.xlu0 %v626, 78
  %v996 = vpop.permute.xlu0 %995
  %997 = vrot.lane.b32.xlu0 %v627, 78
  %v998 = vpop.permute.xlu0 %997
  %999 = vrot.lane.b32.xlu0 %v628, 78
  %v1000 = vpop.permute.xlu0 %999
  %1001 = vrot.lane.b32.xlu0 %v629, 78
  %v1002 = vpop.permute.xlu0 %1001
  %vm1003 = vcmask 637952
  %v1004 = vsel %vm1003, %v984, %v986
  %v1005 = vsel %vm1003, %v986, %v988
  %v1006 = vsel %vm1003, %v988, %v990
  %v1007 = vsel %vm1003, %v990, %v992
  %v1008 = vsel %vm1003, %v992, %v994
  %v1009 = vsel %vm1003, %v994, %v996
  %v1010 = vsel %vm1003, %v996, %v998
  %v1011 = vsel %vm1003, %v998, %v1000
  %v1012 = vsel %vm1003, %v1000, %v1002
  %vm1022 = vcmask 588800
  %v1024 = vsel %vm1022, %v91, 0
  %1026 = vmatpush.msra.mxu0 0.0
  %1027 = vmatpush.msra.mxu0 0.0
  %1028 = vmatpush.msra.mxu0 0.0
  %1029 = vmatpush.msra.mxu0 0.0
  %1030 = vmatpush.msra.mxu0 0.0
  %1031 = vmatpush.msra.mxu0 0.0
  %1032 = vmatpush.msra.mxu0 0.0
  %1033 = vmatpush.msra.mxu0 %v1004
  %1034 = vmatpush.msra.mxu0 %v955
  %1035 = vmatpush.msra.mxu0 %v906
  %1036 = vmatpush.msra.mxu0 %v857
  %1037 = vmatpush.msra.mxu0 %v808
  %1038 = vmatpush.msra.mxu0 %v759
  %1039 = vmatpush.msra.mxu0 %v710
  %1040 = vmatpush.msra.mxu0 %v661
  %1041 = vmatpush.msra.mxu0 %v101
  %1042 = vmatmul.f32.gmra.mxu0 %v1024
  %v1043 = vpop.f32.mrf.mxu0
  %v1044 = vadd.f32 0.0, %v1043
  %1045 = vdwg.mxu0
  %1046 = vmatpush.msra.mxu0 0.0
  %1047 = vmatpush.msra.mxu0 0.0
  %1048 = vmatpush.msra.mxu0 0.0
  %1049 = vmatpush.msra.mxu0 0.0
  %1050 = vmatpush.msra.mxu0 0.0
  %1051 = vmatpush.msra.mxu0 0.0
  %1052 = vmatpush.msra.mxu0 0.0
  %1053 = vmatpush.msra.mxu0 %v1005
  %1054 = vmatpush.msra.mxu0 %v956
  %1055 = vmatpush.msra.mxu0 %v907
  %1056 = vmatpush.msra.mxu0 %v858
  %1057 = vmatpush.msra.mxu0 %v809
  %1058 = vmatpush.msra.mxu0 %v760
  %1059 = vmatpush.msra.mxu0 %v711
  %1060 = vmatpush.msra.mxu0 %v662
  %1061 = vmatpush.msra.mxu0 %v102
  %1062 = vmatmul.f32.gmra.mxu0 %v1024
  %v1063 = vpop.f32.mrf.mxu0
  %v1064 = vadd.f32 0.0, %v1063
  %1065 = vdwg.mxu0
  %1066 = vmatpush.msra.mxu0 0.0
  %1067 = vmatpush.msra.mxu0 0.0
  %1068 = vmatpush.msra.mxu0 0.0
  %1069 = vmatpush.msra.mxu0 0.0
  %1070 = vmatpush.msra.mxu0 0.0
  %1071 = vmatpush.msra.mxu0 0.0
  %1072 = vmatpush.msra.mxu0 0.0
  %1073 = vmatpush.msra.mxu0 %v1006
  %1074 = vmatpush.msra.mxu0 %v957
  %1075 = vmatpush.msra.mxu0 %v908
  %1076 = vmatpush.msra.mxu0 %v859
  %1077 = vmatpush.msra.mxu0 %v810
  %1078 = vmatpush.msra.mxu0 %v761
  %1079 = vmatpush.msra.mxu0 %v712
  %1080 = vmatpush.msra.mxu0 %v663
  %1081 = vmatpush.msra.mxu0 %v103
  %1082 = vmatmul.f32.gmra.mxu0 %v1024
  %v1083 = vpop.f32.mrf.mxu0
  %v1084 = vadd.f32 0.0, %v1083
  %1085 = vdwg.mxu0
  %1086 = vmatpush.msra.mxu0 0.0
  %1087 = vmatpush.msra.mxu0 0.0
  %1088 = vmatpush.msra.mxu0 0.0
  %1089 = vmatpush.msra.mxu0 0.0
  %1090 = vmatpush.msra.mxu0 0.0
  %1091 = vmatpush.msra.mxu0 0.0
  %1092 = vmatpush.msra.mxu0 0.0
  %1093 = vmatpush.msra.mxu0 %v1007
  %1094 = vmatpush.msra.mxu0 %v958
  %1095 = vmatpush.msra.mxu0 %v909
  %1096 = vmatpush.msra.mxu0 %v860
  %1097 = vmatpush.msra.mxu0 %v811
  %1098 = vmatpush.msra.mxu0 %v762
  %1099 = vmatpush.msra.mxu0 %v713
  %1100 = vmatpush.msra.mxu0 %v664
  %1101 = vmatpush.msra.mxu0 %v104
  %1102 = vmatmul.f32.gmra.mxu0 %v1024
  %v1103 = vpop.f32.mrf.mxu0
  %v1104 = vadd.f32 0.0, %v1103
  %1105 = vdwg.mxu0
  %1106 = vmatpush.msra.mxu0 0.0
  %1107 = vmatpush.msra.mxu0 0.0
  %1108 = vmatpush.msra.mxu0 0.0
  %1109 = vmatpush.msra.mxu0 0.0
  %1110 = vmatpush.msra.mxu0 0.0
  %1111 = vmatpush.msra.mxu0 0.0
  %1112 = vmatpush.msra.mxu0 0.0
  %1113 = vmatpush.msra.mxu0 %v1008
  %1114 = vmatpush.msra.mxu0 %v959
  %1115 = vmatpush.msra.mxu0 %v910
  %1116 = vmatpush.msra.mxu0 %v861
  %1117 = vmatpush.msra.mxu0 %v812
  %1118 = vmatpush.msra.mxu0 %v763
  %1119 = vmatpush.msra.mxu0 %v714
  %1120 = vmatpush.msra.mxu0 %v665
  %1121 = vmatpush.msra.mxu0 %v105
  %1122 = vmatmul.f32.gmra.mxu0 %v1024
  %v1123 = vpop.f32.mrf.mxu0
  %v1124 = vadd.f32 0.0, %v1123
  %1125 = vdwg.mxu0
  %1126 = vmatpush.msra.mxu0 0.0
  %1127 = vmatpush.msra.mxu0 0.0
  %1128 = vmatpush.msra.mxu0 0.0
  %1129 = vmatpush.msra.mxu0 0.0
  %1130 = vmatpush.msra.mxu0 0.0
  %1131 = vmatpush.msra.mxu0 0.0
  %1132 = vmatpush.msra.mxu0 0.0
  %1133 = vmatpush.msra.mxu0 %v1009
  %1134 = vmatpush.msra.mxu0 %v960
  %1135 = vmatpush.msra.mxu0 %v911
  %1136 = vmatpush.msra.mxu0 %v862
  %1137 = vmatpush.msra.mxu0 %v813
  %1138 = vmatpush.msra.mxu0 %v764
  %1139 = vmatpush.msra.mxu0 %v715
  %1140 = vmatpush.msra.mxu0 %v666
  %1141 = vmatpush.msra.mxu0 %v106
  %1142 = vmatmul.f32.gmra.mxu0 %v1024
  %v1143 = vpop.f32.mrf.mxu0
  %v1144 = vadd.f32 0.0, %v1143
  %1145 = vdwg.mxu0
  %1146 = vmatpush.msra.mxu0 0.0
  %1147 = vmatpush.msra.mxu0 0.0
  %1148 = vmatpush.msra.mxu0 0.0
  %1149 = vmatpush.msra.mxu0 0.0
  %1150 = vmatpush.msra.mxu0 0.0
  %1151 = vmatpush.msra.mxu0 0.0
  %1152 = vmatpush.msra.mxu0 0.0
  %1153 = vmatpush.msra.mxu0 %v1010
  %1154 = vmatpush.msra.mxu0 %v961
  %1155 = vmatpush.msra.mxu0 %v912
  %1156 = vmatpush.msra.mxu0 %v863
  %1157 = vmatpush.msra.mxu0 %v814
  %1158 = vmatpush.msra.mxu0 %v765
  %1159 = vmatpush.msra.mxu0 %v716
  %1160 = vmatpush.msra.mxu0 %v667
  %1161 = vmatpush.msra.mxu0 %v107
  %1162 = vmatmul.f32.gmra.mxu0 %v1024
  %v1163 = vpop.f32.mrf.mxu0
  %v1164 = vadd.f32 0.0, %v1163
  %1165 = vdwg.mxu0
  %1166 = vmatpush.msra.mxu0 0.0
  %1167 = vmatpush.msra.mxu0 0.0
  %1168 = vmatpush.msra.mxu0 0.0
  %1169 = vmatpush.msra.mxu0 0.0
  %1170 = vmatpush.msra.mxu0 0.0
  %1171 = vmatpush.msra.mxu0 0.0
  %1172 = vmatpush.msra.mxu0 0.0
  %1173 = vmatpush.msra.mxu0 %v1011
  %1174 = vmatpush.msra.mxu0 %v962
  %1175 = vmatpush.msra.mxu0 %v913
  %1176 = vmatpush.msra.mxu0 %v864
  %1177 = vmatpush.msra.mxu0 %v815
  %1178 = vmatpush.msra.mxu0 %v766
  %1179 = vmatpush.msra.mxu0 %v717
  %1180 = vmatpush.msra.mxu0 %v668
  %1181 = vmatpush.msra.mxu0 %v108
  %1182 = vmatmul.f32.gmra.mxu0 %v1024
  %v1183 = vpop.f32.mrf.mxu0
  %v1184 = vadd.f32 0.0, %v1183
  %1185 = vdwg.mxu0
  %1186 = vmatpush.msra.mxu0 0.0
  %1187 = vmatpush.msra.mxu0 0.0
  %1188 = vmatpush.msra.mxu0 0.0
  %1189 = vmatpush.msra.mxu0 0.0
  %1190 = vmatpush.msra.mxu0 0.0
  %1191 = vmatpush.msra.mxu0 0.0
  %1192 = vmatpush.msra.mxu0 0.0
  %1193 = vmatpush.msra.mxu0 %v1012
  %1194 = vmatpush.msra.mxu0 %v963
  %1195 = vmatpush.msra.mxu0 %v914
  %1196 = vmatpush.msra.mxu0 %v865
  %1197 = vmatpush.msra.mxu0 %v816
  %1198 = vmatpush.msra.mxu0 %v767
  %1199 = vmatpush.msra.mxu0 %v718
  %1200 = vmatpush.msra.mxu0 %v669
  %1201 = vmatpush.msra.mxu0 %v109
  %1202 = vmatmul.f32.gmra.mxu0 %v1024
  %v1203 = vpop.f32.mrf.mxu0
  %v1204 = vadd.f32 0.0, %v1203
  %1205 = vdwg.mxu0
  %v1206 = vld [vmem:[%s4] sm:$0x7]
  %v1207 = vld [vmem:[%s5] sm:$0x7]
  %vm1208 = vcmask 1042432
  %v1209 = vsel %vm1208, %v1044, 0.0
  %v1210 = vsel %vm1208, %v1064, 0.0
  %v1211 = vadd.f32 %v1209, %v1210
  %v1212 = vsel %vm1208, %v1084, 0.0
  %v1213 = vadd.f32 %v1211, %v1212
  %v1214 = vsel %vm1208, %v1104, 0.0
  %v1215 = vadd.f32 %v1213, %v1214
  %v1216 = vsel %vm1208, %v1124, 0.0
  %v1217 = vadd.f32 %v1215, %v1216
  %v1218 = vsel %vm1208, %v1144, 0.0
  %v1219 = vadd.f32 %v1217, %v1218
  %v1220 = vsel %vm1208, %v1164, 0.0
  %v1221 = vadd.f32 %v1219, %v1220
  %v1222 = vsel %vm1208, %v1184, 0.0
  %v1223 = vadd.f32 %v1221, %v1222
  %v1224 = vsel %vm1208, %v1204, 0.0
  %v1225 = vadd.f32 %v1223, %v1224
  %1226 = vadd.xlane.f32.xlu0 %v1225
  %v1227 = vpop.xlane.xlu0 %1226
  %v1228 = vrcp.pop 1152.0
  %v1229 = vmul.f32 1152.0, %v1228
  %v1230 = vsub.f32 1.0, %v1229
  %v1231 = vmul.f32 %v1228, %v1230
  %v1232 = vadd.f32 %v1228, %v1231
  %vm1233 = vweird.f32 %v1228
  %v1234 = vsel %vm1233, %v1228, %v1232
  %v1235 = vmul.f32 %v1227, %v1234
  %v1236 = vsub.f32 %v1044, %v1235
  %v1237 = vsub.f32 %v1064, %v1235
  %v1238 = vsub.f32 %v1084, %v1235
  %v1239 = vsub.f32 %v1104, %v1235
  %v1240 = vsub.f32 %v1124, %v1235
  %v1241 = vsub.f32 %v1144, %v1235
  %v1242 = vsub.f32 %v1164, %v1235
  %v1243 = vsub.f32 %v1184, %v1235
  %v1244 = vsub.f32 %v1204, %v1235
  %v1245 = vmul.f32 %v1236, %v1236
  %v1246 = vmul.f32 %v1237, %v1237
  %v1247 = vmul.f32 %v1238, %v1238
  %v1248 = vmul.f32 %v1239, %v1239
  %v1249 = vmul.f32 %v1240, %v1240
  %v1250 = vmul.f32 %v1241, %v1241
  %v1251 = vmul.f32 %v1242, %v1242
  %v1252 = vmul.f32 %v1243, %v1243
  %v1253 = vmul.f32 %v1244, %v1244
  %v1254 = vsel %vm1208, %v1245, 0.0
  %v1255 = vsel %vm1208, %v1246, 0.0
  %v1256 = vadd.f32 %v1254, %v1255
  %v1257 = vsel %vm1208, %v1247, 0.0
  %v1258 = vadd.f32 %v1256, %v1257
  %v1259 = vsel %vm1208, %v1248, 0.0
  %v1260 = vadd.f32 %v1258, %v1259
  %v1261 = vsel %vm1208, %v1249, 0.0
  %v1262 = vadd.f32 %v1260, %v1261
  %v1263 = vsel %vm1208, %v1250, 0.0
  %v1264 = vadd.f32 %v1262, %v1263
  %v1265 = vsel %vm1208, %v1251, 0.0
  %v1266 = vadd.f32 %v1264, %v1265
  %v1267 = vsel %vm1208, %v1252, 0.0
  %v1268 = vadd.f32 %v1266, %v1267
  %v1269 = vsel %vm1208, %v1253, 0.0
  %v1270 = vadd.f32 %v1268, %v1269
  %1271 = vadd.xlane.f32.xlu0 %v1270
  %v1272 = vpop.xlane.xlu0 %1271
  %v1273 = vmul.f32 %v1272, %v1234
  %v1274 = vadd.f32 %v1273, 1e-05
  %v1275 = vrsqrt.pop %v1274
  %v1276 = vmul.f32 %v1275, %v1274
  %v1277 = vmul.f32 %v1276, %v1275
  %v1278 = vmul.f32 0.5, %v1277
  %v1279 = vsub.f32 1.5, %v1278
  %v1280 = vmul.f32 %v1275, %v1279
  %vm1281 = vweird.f32 %v1274
  %vm1282 = vweird.f32 %v1275
  %vm1283 = vmor %vm1281, %vm1282
  %v1284 = vsel %vm1283, %v1275, %v1280
  %v1285 = vmul.f32 %v1236, %v1284
  %v1286 = vmul.f32 %v1237, %v1284
  %v1287 = vmul.f32 %v1238, %v1284
  %v1288 = vmul.f32 %v1239, %v1284
  %v1289 = vmul.f32 %v1240, %v1284
  %v1290 = vmul.f32 %v1241, %v1284
  %v1291 = vmul.f32 %v1242, %v1284
  %v1292 = vmul.f32 %v1243, %v1284
  %v1293 = vmul.f32 %v1244, %v1284
  %1295 = vset.pattern.permute.xlu0 0
  %1296 = vperm.xlu0 %1295, %v1206
  %v1297 = vpop.permute.xlu0 %1296
  %v1299 = vmul.f32 %v1285, %v1297
  %v1300 = vmul.f32 %v1286, %v1297
  %v1301 = vmul.f32 %v1287, %v1297
  %v1302 = vmul.f32 %v1288, %v1297
  %v1303 = vmul.f32 %v1289, %v1297
  %v1304 = vmul.f32 %v1290, %v1297
  %v1305 = vmul.f32 %v1291, %v1297
  %v1306 = vmul.f32 %v1292, %v1297
  %v1307 = vmul.f32 %v1293, %v1297
  %1309 = vset.pattern.permute.xlu0 0
  %1310 = vperm.xlu0 %1309, %v1207
  %v1311 = vpop.permute.xlu0 %1310
  %v1313 = vadd.f32 %v1299, %v1311
  %v1314 = vadd.f32 %v1300, %v1311
  %v1315 = vadd.f32 %v1301, %v1311
  %v1316 = vadd.f32 %v1302, %v1311
  %v1317 = vadd.f32 %v1303, %v1311
  %v1318 = vadd.f32 %v1304, %v1311
  %v1319 = vadd.f32 %v1305, %v1311
  %v1320 = vadd.f32 %v1306, %v1311
  %v1321 = vadd.f32 %v1307, %v1311
  %v1330 = vrot.slane %v1314, 4
  %v1331 = vrot.slane %v1316, 4
  %v1332 = vrot.slane %v1318, 4
  %v1333 = vrot.slane %v1320, 4
  %vm1334 = vcmask 1043456
  %v1335 = vsel %vm1334, %v1313, %v1330
  %v1336 = vsel %vm1334, %v1315, %v1331
  %v1337 = vsel %vm1334, %v1317, %v1332
  %v1338 = vsel %vm1334, %v1319, %v1333
  %1343 = vst [vmem:[%s19] sm:$0x77] %v1335
  %1344 = vst [vmem:[%s19 + $0x8] sm:$0x77] %v1336
  %1345 = vst [vmem:[%s19 + $0x10] sm:$0x77] %v1337
  %1346 = vst [vmem:[%s19 + $0x18] sm:$0x77] %v1338
  %1347 = vst [vmem:[%s19 + $0x20] sm:$0x7] %v1321
  %v1348 = vld [vmem:[%s2] sm:$0xff]
  %v1349 = vld [vmem:[%s2 + $0x8] sm:$0xff]
  %v1350 = vld [vmem:[%s2 + $0x10] sm:$0xff]
  %v1351 = vld [vmem:[%s2 + $0x18] sm:$0xff]
  %v1352 = vld [vmem:[%s2 + $0x20] sm:$0xff]
  %v1353 = vld [vmem:[%s6] sm:$0xff]
  %v1362 = vrot.slane %v93, 4
  %v1363 = vrot.slane %v95, 4
  %v1364 = vrot.slane %v97, 4
  %v1365 = vrot.slane %v99, 4
  %v1366 = vsel %vm1334, %v92, %v1362
  %v1367 = vsel %vm1334, %v94, %v1363
  %v1368 = vsel %vm1334, %v96, %v1364
  %v1369 = vsel %vm1334, %v98, %v1365
  %v1374 = vmul.f32 %v1348, %v1366
  %v1375 = vmul.f32 %v1349, %v1367
  %v1376 = vmul.f32 %v1350, %v1368
  %v1377 = vmul.f32 %v1351, %v1369
  %v1378 = vmul.f32 %v1352, %v100
  %v1379 = vrot.slane %v111, 4
  %v1380 = vrot.slane %v113, 4
  %v1381 = vrot.slane %v115, 4
  %v1382 = vrot.slane %v117, 4
  %v1383 = vsel %vm1334, %v110, %v1379
  %v1384 = vsel %vm1334, %v112, %v1380
  %v1385 = vsel %vm1334, %v114, %v1381
  %v1386 = vsel %vm1334, %v116, %v1382
  %1387 = vrot.lane.b32.xlu0 %v1383, 1
  %v1388 = vpop.permute.xlu0 %1387
  %1389 = vrot.lane.b32.xlu0 %v1384, 1
  %v1390 = vpop.permute.xlu0 %1389
  %1391 = vrot.lane.b32.xlu0 %v1385, 1
  %v1392 = vpop.permute.xlu0 %1391
  %1393 = vrot.lane.b32.xlu0 %v1386, 1
  %v1394 = vpop.permute.xlu0 %1393
  %v1395 = vrot.slane %v1388, 4
  %v1396 = vrot.slane %v1390, 4
  %v1397 = vrot.slane %v1392, 4
  %v1398 = vrot.slane %v1394, 4
  %v1399 = vrot.slane %v145, 4
  %v1400 = vsel %vm146, %v1395, %v1388
  %v1401 = vsel %vm1334, %v1395, %v1396
  %v1402 = vsel %vm146, %v1401, %v1390
  %v1403 = vsel %vm1334, %v1396, %v1397
  %v1404 = vsel %vm146, %v1403, %v1392
  %v1405 = vsel %vm1334, %v1397, %v1398
  %v1406 = vsel %vm146, %v1405, %v1394
  %v1407 = vsel %vm1334, %v1398, %v1399
  %v1408 = vsel %vm146, %v1407, %v145
  %v1414 = vmul.f32 %v1348, %v1400
  %v1415 = vmul.f32 %v1349, %v1402
  %v1416 = vmul.f32 %v1350, %v1404
  %v1417 = vmul.f32 %v1351, %v1406
  %v1418 = vmul.f32 %v1352, %v1408
  %v1419 = vrot.slane %v176, 4
  %v1420 = vrot.slane %v178, 4
  %v1421 = vrot.slane %v180, 4
  %v1422 = vrot.slane %v182, 4
  %v1423 = vsel %vm1334, %v175, %v1419
  %v1424 = vsel %vm1334, %v177, %v1420
  %v1425 = vsel %vm1334, %v179, %v1421
  %v1426 = vsel %vm1334, %v181, %v1422
  %1427 = vrot.lane.b32.xlu0 %v1423, 2
  %v1428 = vpop.permute.xlu0 %1427
  %1429 = vrot.lane.b32.xlu0 %v1424, 2
  %v1430 = vpop.permute.xlu0 %1429
  %1431 = vrot.lane.b32.xlu0 %v1425, 2
  %v1432 = vpop.permute.xlu0 %1431
  %1433 = vrot.lane.b32.xlu0 %v1426, 2
  %v1434 = vpop.permute.xlu0 %1433
  %v1435 = vrot.slane %v1428, 4
  %v1436 = vrot.slane %v1430, 4
  %v1437 = vrot.slane %v1432, 4
  %v1438 = vrot.slane %v1434, 4
  %v1439 = vrot.slane %v210, 4
  %v1440 = vsel %vm211, %v1435, %v1428
  %v1441 = vsel %vm1334, %v1435, %v1436
  %v1442 = vsel %vm211, %v1441, %v1430
  %v1443 = vsel %vm1334, %v1436, %v1437
  %v1444 = vsel %vm211, %v1443, %v1432
  %v1445 = vsel %vm1334, %v1437, %v1438
  %v1446 = vsel %vm211, %v1445, %v1434
  %v1447 = vsel %vm1334, %v1438, %v1439
  %v1448 = vsel %vm211, %v1447, %v210
  %v1454 = vmul.f32 %v1348, %v1440
  %v1455 = vmul.f32 %v1349, %v1442
  %v1456 = vmul.f32 %v1350, %v1444
  %v1457 = vmul.f32 %v1351, %v1446
  %v1458 = vmul.f32 %v1352, %v1448
  %v1459 = vrot.slane %v241, 4
  %v1460 = vrot.slane %v243, 4
  %v1461 = vrot.slane %v245, 4
  %v1462 = vrot.slane %v247, 4
  %v1463 = vsel %vm1334, %v240, %v1459
  %v1464 = vsel %vm1334, %v242, %v1460
  %v1465 = vsel %vm1334, %v244, %v1461
  %v1466 = vsel %vm1334, %v246, %v1462
  %1467 = vrot.lane.b32.xlu0 %v1463, 24
  %v1468 = vpop.permute.xlu0 %1467
  %1469 = vrot.lane.b32.xlu0 %v1464, 24
  %v1470 = vpop.permute.xlu0 %1469
  %1471 = vrot.lane.b32.xlu0 %v1465, 24
  %v1472 = vpop.permute.xlu0 %1471
  %1473 = vrot.lane.b32.xlu0 %v1466, 24
  %v1474 = vpop.permute.xlu0 %1473
  %v1475 = vrot.slane %v1468, 4
  %v1476 = vrot.slane %v1470, 4
  %v1477 = vrot.slane %v1472, 4
  %v1478 = vrot.slane %v1474, 4
  %v1479 = vrot.slane %v275, 4
  %v1480 = vsel %vm276, %v1475, %v1468
  %v1481 = vsel %vm1334, %v1475, %v1476
  %v1482 = vsel %vm276, %v1481, %v1470
  %v1483 = vsel %vm1334, %v1476, %v1477
  %v1484 = vsel %vm276, %v1483, %v1472
  %v1485 = vsel %vm1334, %v1477, %v1478
  %v1486 = vsel %vm276, %v1485, %v1474
  %v1487 = vsel %vm1334, %v1478, %v1479
  %v1488 = vsel %vm276, %v1487, %v275
  %v1494 = vmul.f32 %v1348, %v1480
  %v1495 = vmul.f32 %v1349, %v1482
  %v1496 = vmul.f32 %v1350, %v1484
  %v1497 = vmul.f32 %v1351, %v1486
  %v1498 = vmul.f32 %v1352, %v1488
  %v1499 = vrot.slane %v306, 4
  %v1500 = vrot.slane %v308, 4
  %v1501 = vrot.slane %v310, 4
  %v1502 = vrot.slane %v312, 4
  %v1503 = vsel %vm1334, %v305, %v1499
  %v1504 = vsel %vm1334, %v307, %v1500
  %v1505 = vsel %vm1334, %v309, %v1501
  %v1506 = vsel %vm1334, %v311, %v1502
  %1507 = vrot.lane.b32.xlu0 %v1503, 25
  %v1508 = vpop.permute.xlu0 %1507
  %1509 = vrot.lane.b32.xlu0 %v1504, 25
  %v1510 = vpop.permute.xlu0 %1509
  %1511 = vrot.lane.b32.xlu0 %v1505, 25
  %v1512 = vpop.permute.xlu0 %1511
  %1513 = vrot.lane.b32.xlu0 %v1506, 25
  %v1514 = vpop.permute.xlu0 %1513
  %v1515 = vrot.slane %v1508, 4
  %v1516 = vrot.slane %v1510, 4
  %v1517 = vrot.slane %v1512, 4
  %v1518 = vrot.slane %v1514, 4
  %v1519 = vrot.slane %v340, 4
  %v1520 = vsel %vm341, %v1515, %v1508
  %v1521 = vsel %vm1334, %v1515, %v1516
  %v1522 = vsel %vm341, %v1521, %v1510
  %v1523 = vsel %vm1334, %v1516, %v1517
  %v1524 = vsel %vm341, %v1523, %v1512
  %v1525 = vsel %vm1334, %v1517, %v1518
  %v1526 = vsel %vm341, %v1525, %v1514
  %v1527 = vsel %vm1334, %v1518, %v1519
  %v1528 = vsel %vm341, %v1527, %v340
  %v1534 = vmul.f32 %v1348, %v1520
  %v1535 = vmul.f32 %v1349, %v1522
  %v1536 = vmul.f32 %v1350, %v1524
  %v1537 = vmul.f32 %v1351, %v1526
  %v1538 = vmul.f32 %v1352, %v1528
  %v1539 = vrot.slane %v371, 4
  %v1540 = vrot.slane %v373, 4
  %v1541 = vrot.slane %v375, 4
  %v1542 = vrot.slane %v377, 4
  %v1543 = vsel %vm1334, %v370, %v1539
  %v1544 = vsel %vm1334, %v372, %v1540
  %v1545 = vsel %vm1334, %v374, %v1541
  %v1546 = vsel %vm1334, %v376, %v1542
  %1547 = vrot.lane.b32.xlu0 %v1543, 26
  %v1548 = vpop.permute.xlu0 %1547
  %1549 = vrot.lane.b32.xlu0 %v1544, 26
  %v1550 = vpop.permute.xlu0 %1549
  %1551 = vrot.lane.b32.xlu0 %v1545, 26
  %v1552 = vpop.permute.xlu0 %1551
  %1553 = vrot.lane.b32.xlu0 %v1546, 26
  %v1554 = vpop.permute.xlu0 %1553
  %v1555 = vrot.slane %v1548, 4
  %v1556 = vrot.slane %v1550, 4
  %v1557 = vrot.slane %v1552, 4
  %v1558 = vrot.slane %v1554, 4
  %v1559 = vrot.slane %v405, 4
  %v1560 = vsel %vm406, %v1555, %v1548
  %v1561 = vsel %vm1334, %v1555, %v1556
  %v1562 = vsel %vm406, %v1561, %v1550
  %v1563 = vsel %vm1334, %v1556, %v1557
  %v1564 = vsel %vm406, %v1563, %v1552
  %v1565 = vsel %vm1334, %v1557, %v1558
  %v1566 = vsel %vm406, %v1565, %v1554
  %v1567 = vsel %vm1334, %v1558, %v1559
  %v1568 = vsel %vm406, %v1567, %v405
  %v1574 = vmul.f32 %v1348, %v1560
  %v1575 = vmul.f32 %v1349, %v1562
  %v1576 = vmul.f32 %v1350, %v1564
  %v1577 = vmul.f32 %v1351, %v1566
  %v1578 = vmul.f32 %v1352, %v1568
  %v1579 = vrot.slane %v436, 4
  %v1580 = vrot.slane %v438, 4
  %v1581 = vrot.slane %v440, 4
  %v1582 = vrot.slane %v442, 4
  %v1583 = vsel %vm1334, %v435, %v1579
  %v1584 = vsel %vm1334, %v437, %v1580
  %v1585 = vsel %vm1334, %v439, %v1581
  %v1586 = vsel %vm1334, %v441, %v1582
  %1587 = vrot.lane.b32.xlu0 %v1583, 48
  %v1588 = vpop.permute.xlu0 %1587
  %1589 = vrot.lane.b32.xlu0 %v1584, 48
  %v1590 = vpop.permute.xlu0 %1589
  %1591 = vrot.lane.b32.xlu0 %v1585, 48
  %v1592 = vpop.permute.xlu0 %1591
  %1593 = vrot.lane.b32.xlu0 %v1586, 48
  %v1594 = vpop.permute.xlu0 %1593
  %v1595 = vrot.slane %v1588, 4
  %v1596 = vrot.slane %v1590, 4
  %v1597 = vrot.slane %v1592, 4
  %v1598 = vrot.slane %v1594, 4
  %v1599 = vrot.slane %v470, 4
  %v1600 = vsel %vm471, %v1595, %v1588
  %v1601 = vsel %vm1334, %v1595, %v1596
  %v1602 = vsel %vm471, %v1601, %v1590
  %v1603 = vsel %vm1334, %v1596, %v1597
  %v1604 = vsel %vm471, %v1603, %v1592
  %v1605 = vsel %vm1334, %v1597, %v1598
  %v1606 = vsel %vm471, %v1605, %v1594
  %v1607 = vsel %vm1334, %v1598, %v1599
  %v1608 = vsel %vm471, %v1607, %v470
  %v1614 = vmul.f32 %v1348, %v1600
  %v1615 = vmul.f32 %v1349, %v1602
  %v1616 = vmul.f32 %v1350, %v1604
  %v1617 = vmul.f32 %v1351, %v1606
  %v1618 = vmul.f32 %v1352, %v1608
  %v1619 = vrot.slane %v501, 4
  %v1620 = vrot.slane %v503, 4
  %v1621 = vrot.slane %v505, 4
  %v1622 = vrot.slane %v507, 4
  %v1623 = vsel %vm1334, %v500, %v1619
  %v1624 = vsel %vm1334, %v502, %v1620
  %v1625 = vsel %vm1334, %v504, %v1621
  %v1626 = vsel %vm1334, %v506, %v1622
  %1627 = vrot.lane.b32.xlu0 %v1623, 49
  %v1628 = vpop.permute.xlu0 %1627
  %1629 = vrot.lane.b32.xlu0 %v1624, 49
  %v1630 = vpop.permute.xlu0 %1629
  %1631 = vrot.lane.b32.xlu0 %v1625, 49
  %v1632 = vpop.permute.xlu0 %1631
  %1633 = vrot.lane.b32.xlu0 %v1626, 49
  %v1634 = vpop.permute.xlu0 %1633
  %v1635 = vrot.slane %v1628, 4
  %v1636 = vrot.slane %v1630, 4
  %v1637 = vrot.slane %v1632, 4
  %v1638 = vrot.slane %v1634, 4
  %v1639 = vrot.slane %v535, 4
  %v1640 = vsel %vm536, %v1635, %v1628
  %v1641 = vsel %vm1334, %v1635, %v1636
  %v1642 = vsel %vm536, %v1641, %v1630
  %v1643 = vsel %vm1334, %v1636, %v1637
  %v1644 = vsel %vm536, %v1643, %v1632
  %v1645 = vsel %vm1334, %v1637, %v1638
  %v1646 = vsel %vm536, %v1645, %v1634
  %v1647 = vsel %vm1334, %v1638, %v1639
  %v1648 = vsel %vm536, %v1647, %v535
  %v1654 = vmul.f32 %v1348, %v1640
  %v1655 = vmul.f32 %v1349, %v1642
  %v1656 = vmul.f32 %v1350, %v1644
  %v1657 = vmul.f32 %v1351, %v1646
  %v1658 = vmul.f32 %v1352, %v1648
  %v1659 = vrot.slane %v566, 4
  %v1660 = vrot.slane %v568, 4
  %v1661 = vrot.slane %v570, 4
  %v1662 = vrot.slane %v572, 4
  %v1663 = vsel %vm1334, %v565, %v1659
  %v1664 = vsel %vm1334, %v567, %v1660
  %v1665 = vsel %vm1334, %v569, %v1661
  %v1666 = vsel %vm1334, %v571, %v1662
  %1667 = vrot.lane.b32.xlu0 %v1663, 50
  %v1668 = vpop.permute.xlu0 %1667
  %1669 = vrot.lane.b32.xlu0 %v1664, 50
  %v1670 = vpop.permute.xlu0 %1669
  %1671 = vrot.lane.b32.xlu0 %v1665, 50
  %v1672 = vpop.permute.xlu0 %1671
  %1673 = vrot.lane.b32.xlu0 %v1666, 50
  %v1674 = vpop.permute.xlu0 %1673
  %v1675 = vrot.slane %v1668, 4
  %v1676 = vrot.slane %v1670, 4
  %v1677 = vrot.slane %v1672, 4
  %v1678 = vrot.slane %v1674, 4
  %v1679 = vrot.slane %v600, 4
  %v1680 = vsel %vm601, %v1675, %v1668
  %v1681 = vsel %vm1334, %v1675, %v1676
  %v1682 = vsel %vm601, %v1681, %v1670
  %v1683 = vsel %vm1334, %v1676, %v1677
  %v1684 = vsel %vm601, %v1683, %v1672
  %v1685 = vsel %vm1334, %v1677, %v1678
  %v1686 = vsel %vm601, %v1685, %v1674
  %v1687 = vsel %vm1334, %v1678, %v1679
  %v1688 = vsel %vm601, %v1687, %v600
  %v1694 = vmul.f32 %v1348, %v1680
  %v1695 = vmul.f32 %v1349, %v1682
  %v1696 = vmul.f32 %v1350, %v1684
  %v1697 = vmul.f32 %v1351, %v1686
  %v1698 = vmul.f32 %v1352, %v1688
  %1704 = vst [vmem:[#allocation1] ss:$2 sm:$0xff] %v1374
  %s1705 = scalar_lea.vmem [#allocation1], 16
  %1706 = vst [vmem:[%s1705] ss:$2 sm:$0xff] %v1375
  %s1707 = scalar_lea.vmem [#allocation1], 32
  %1708 = vst [vmem:[%s1707] ss:$2 sm:$0xff] %v1376
  %s1709 = scalar_lea.vmem [#allocation1], 48
  %1710 = vst [vmem:[%s1709] ss:$2 sm:$0xff] %v1377
  %v1711 = vld.sshfl [vmem:[#allocation1] sm:$0xff pattern:$0x75316420]
  %v1712 = vld.sshfl [vmem:[#allocation1 + $0x8] sm:$0xff pattern:$0x75316420]
  %v1713 = vld.sshfl [vmem:[#allocation1 + $0x10] sm:$0xff pattern:$0x75316420]
  %v1714 = vld.sshfl [vmem:[#allocation1 + $0x18] sm:$0xff pattern:$0x75316420]
  %v1715 = vld.sshfl [vmem:[#allocation1 + $0x20] sm:$0xff pattern:$0x75316420]
  %v1716 = vld.sshfl [vmem:[#allocation1 + $0x28] sm:$0xff pattern:$0x75316420]
  %v1717 = vld.sshfl [vmem:[#allocation1 + $0x30] sm:$0xff pattern:$0x75316420]
  %v1718 = vld.sshfl [vmem:[#allocation1 + $0x38] sm:$0xff pattern:$0x75316420]
  %1719 = vst [vmem:[#allocation1] ss:$2 sm:$0xff] %v1378
  %v1720 = vld.sshfl [vmem:[#allocation1] sm:$0xff pattern:$0x75316420]
  %s1735 = scalar_lea.vmem [#allocation1], 1
  %1736 = vst [vmem:[%s1735] ss:$2 sm:$0xff] %v1414
  %s1737 = scalar_lea.vmem [#allocation1], 17
  %1738 = vst [vmem:[%s1737] ss:$2 sm:$0xff] %v1415
  %s1739 = scalar_lea.vmem [#allocation1], 33
  %1740 = vst [vmem:[%s1739] ss:$2 sm:$0xff] %v1416
  %s1741 = scalar_lea.vmem [#allocation1], 49
  %1742 = vst [vmem:[%s1741] ss:$2 sm:$0xff] %v1417
  %v1743 = vld.sshfl [vmem:[#allocation1] sm:$0xff pattern:$0x75316420]
  %v1744 = vld.sshfl [vmem:[#allocation1 + $0x8] sm:$0xff pattern:$0x75316420]
  %v1745 = vld.sshfl [vmem:[#allocation1 + $0x10] sm:$0xff pattern:$0x75316420]
  %v1746 = vld.sshfl [vmem:[#allocation1 + $0x18] sm:$0xff pattern:$0x75316420]
  %v1747 = vld.sshfl [vmem:[#allocation1 + $0x20] sm:$0xff pattern:$0x75316420]
  %v1748 = vld.sshfl [vmem:[#allocation1 + $0x28] sm:$0xff pattern:$0x75316420]
  %v1749 = vld.sshfl [vmem:[#allocation1 + $0x30] sm:$0xff pattern:$0x75316420]
  %v1750 = vld.sshfl [vmem:[#allocation1 + $0x38] sm:$0xff pattern:$0x75316420]
  %1751 = vst [vmem:[%s1735] ss:$2 sm:$0xff] %v1418
  %v1752 = vld.sshfl [vmem:[#allocation1] sm:$0xff pattern:$0x75316420]
  %v1753 = vld.sshfl [vmem:[#allocation1 + $0x8] sm:$0xff pattern:$0x75316420]
  %1754 = vrot.lane.b32.xlu0 %v1743, 127
  %v1755 = vpop.permute.xlu0 %1754
  %1756 = vrot.lane.b32.xlu0 %v1744, 127
  %v1757 = vpop.permute.xlu0 %1756
  %1758 = vrot.lane.b32.xlu0 %v1745, 127
  %v1759 = vpop.permute.xlu0 %1758
  %1760 = vrot.lane.b32.xlu0 %v1746, 127
  %v1761 = vpop.permute.xlu0 %1760
  %1762 = vrot.lane.b32.xlu0 %v1747, 127
  %v1763 = vpop.permute.xlu0 %1762
  %1764 = vrot.lane.b32.xlu0 %v1748, 127
  %v1765 = vpop.permute.xlu0 %1764
  %1766 = vrot.lane.b32.xlu0 %v1749, 127
  %v1767 = vpop.permute.xlu0 %1766
  %1768 = vrot.lane.b32.xlu0 %v1750, 127
  %v1769 = vpop.permute.xlu0 %1768
  %1770 = vrot.lane.b32.xlu0 %v1752, 127
  %v1771 = vpop.permute.xlu0 %1770
  %1772 = vrot.lane.b32.xlu0 %v1753, 127
  %v1773 = vpop.permute.xlu0 %1772
  %v1774 = vsel %vm660, %v1755, %v1757
  %v1775 = vsel %vm660, %v1757, %v1759
  %v1776 = vsel %vm660, %v1759, %v1761
  %v1777 = vsel %vm660, %v1761, %v1763
  %v1778 = vsel %vm660, %v1763, %v1765
  %v1779 = vsel %vm660, %v1765, %v1767
  %v1780 = vsel %vm660, %v1767, %v1769
  %v1781 = vsel %vm660, %v1769, %v1771
  %v1782 = vsel %vm660, %v1771, %v1773
  %1797 = vst [vmem:[#allocation1] ss:$2 sm:$0xff] %v1454
  %s1798 = scalar_lea.vmem [#allocation1], 16
  %1799 = vst [vmem:[%s1798] ss:$2 sm:$0xff] %v1455
  %s1800 = scalar_lea.vmem [#allocation1], 32
  %1801 = vst [vmem:[%s1800] ss:$2 sm:$0xff] %v1456
  %s1802 = scalar_lea.vmem [#allocation1], 48
  %1803 = vst [vmem:[%s1802] ss:$2 sm:$0xff] %v1457
  %v1804 = vld.sshfl [vmem:[#allocation1] sm:$0xff pattern:$0x75316420]
  %v1805 = vld.sshfl [vmem:[#allocation1 + $0x8] sm:$0xff pattern:$0x75316420]
  %v1806 = vld.sshfl [vmem:[#allocation1 + $0x10] sm:$0xff pattern:$0x75316420]
  %v1807 = vld.sshfl [vmem:[#allocation1 + $0x18] sm:$0xff pattern:$0x75316420]
  %v1808 = vld.sshfl [vmem:[#allocation1 + $0x20] sm:$0xff pattern:$0x75316420]
  %v1809 = vld.sshfl [vmem:[#allocation1 + $0x28] sm:$0xff pattern:$0x75316420]
  %v1810 = vld.sshfl [vmem:[#allocation1 + $0x30] sm:$0xff pattern:$0x75316420]
  %v1811 = vld.sshfl [vmem:[#allocation1 + $0x38] sm:$0xff pattern:$0x75316420]
  %1812 = vst [vmem:[#allocation1] ss:$2 sm:$0xff] %v1458
  %v1813 = vld.sshfl [vmem:[#allocation1] sm:$0xff pattern:$0x75316420]
  %v1814 = vld.sshfl [vmem:[#allocation1 + $0x8] sm:$0xff pattern:$0x75316420]
  %1815 = vrot.lane.b32.xlu0 %v1804, 126
  %v1816 = vpop.permute.xlu0 %1815
  %1817 = vrot.lane.b32.xlu0 %v1805, 126
  %v1818 = vpop.permute.xlu0 %1817
  %1819 = vrot.lane.b32.xlu0 %v1806, 126
  %v1820 = vpop.permute.xlu0 %1819
  %1821 = vrot.lane.b32.xlu0 %v1807, 126
  %v1822 = vpop.permute.xlu0 %1821
  %1823 = vrot.lane.b32.xlu0 %v1808, 126
  %v1824 = vpop.permute.xlu0 %1823
  %1825 = vrot.lane.b32.xlu0 %v1809, 126
  %v1826 = vpop.permute.xlu0 %1825
  %1827 = vrot.lane.b32.xlu0 %v1810, 126
  %v1828 = vpop.permute.xlu0 %1827
  %1829 = vrot.lane.b32.xlu0 %v1811, 126
  %v1830 = vpop.permute.xlu0 %1829
  %1831 = vrot.lane.b32.xlu0 %v1813, 126
  %v1832 = vpop.permute.xlu0 %1831
  %1833 = vrot.lane.b32.xlu0 %v1814, 126
  %v1834 = vpop.permute.xlu0 %1833
  %v1835 = vsel %vm709, %v1816, %v1818
  %v1836 = vsel %vm709, %v1818, %v1820
  %v1837 = vsel %vm709, %v1820, %v1822
  %v1838 = vsel %vm709, %v1822, %v1824
  %v1839 = vsel %vm709, %v1824, %v1826
  %v1840 = vsel %vm709, %v1826, %v1828
  %v1841 = vsel %vm709, %v1828, %v1830
  %v1842 = vsel %vm709, %v1830, %v1832
  %v1843 = vsel %vm709, %v1832, %v1834
  %s1858 = scalar_lea.vmem [#allocation1], 1
  %1859 = vst [vmem:[%s1858] ss:$2 sm:$0xff] %v1494
  %s1860 = scalar_lea.vmem [#allocation1], 17
  %1861 = vst [vmem:[%s1860] ss:$2 sm:$0xff] %v1495
  %s1862 = scalar_lea.vmem [#allocation1], 33
  %1863 = vst [vmem:[%s1862] ss:$2 sm:$0xff] %v1496
  %s1864 = scalar_lea.vmem [#allocation1], 49
  %1865 = vst [vmem:[%s1864] ss:$2 sm:$0xff] %v1497
  %v1866 = vld.sshfl [vmem:[#allocation1] sm:$0xff pattern:$0x75316420]
  %v1867 = vld.sshfl [vmem:[#allocation1 + $0x8] sm:$0xff pattern:$0x75316420]
  %v1868 = vld.sshfl [vmem:[#allocation1 + $0x10] sm:$0xff pattern:$0x75316420]
  %v1869 = vld.sshfl [vmem:[#allocation1 + $0x18] sm:$0xff pattern:$0x75316420]
  %v1870 = vld.sshfl [vmem:[#allocation1 + $0x20] sm:$0xff pattern:$0x75316420]
  %v1871 = vld.sshfl [vmem:[#allocation1 + $0x28] sm:$0xff pattern:$0x75316420]
  %v1872 = vld.sshfl [vmem:[#allocation1 + $0x30] sm:$0xff pattern:$0x75316420]
  %v1873 = vld.sshfl [vmem:[#allocation1 + $0x38] sm:$0xff pattern:$0x75316420]
  %1874 = vst [vmem:[%s1858] ss:$2 sm:$0xff] %v1498
  %v1875 = vld.sshfl [vmem:[#allocation1] sm:$0xff pattern:$0x75316420]
  %v1876 = vld.sshfl [vmem:[#allocation1 + $0x8] sm:$0xff pattern:$0x75316420]
  %1877 = vrot.lane.b32.xlu0 %v1866, 104
  %v1878 = vpop.permute.xlu0 %1877
  %1879 = vrot.lane.b32.xlu0 %v1867, 104
  %v1880 = vpop.permute.xlu0 %1879
  %1881 = vrot.lane.b32.xlu0 %v1868, 104
  %v1882 = vpop.permute.xlu0 %1881
  %1883 = vrot.lane.b32.xlu0 %v1869, 104
  %v1884 = vpop.permute.xlu0 %1883
  %1885 = vrot.lane.b32.xlu0 %v1870, 104
  %v1886 = vpop.permute.xlu0 %1885
  %1887 = vrot.lane.b32.xlu0 %v1871, 104
  %v1888 = vpop.permute.xlu0 %1887
  %1889 = vrot.lane.b32.xlu0 %v1872, 104
  %v1890 = vpop.permute.xlu0 %1889
  %1891 = vrot.lane.b32.xlu0 %v1873, 104
  %v1892 = vpop.permute.xlu0 %1891
  %1893 = vrot.lane.b32.xlu0 %v1875, 104
  %v1894 = vpop.permute.xlu0 %1893
  %1895 = vrot.lane.b32.xlu0 %v1876, 104
  %v1896 = vpop.permute.xlu0 %1895
  %v1897 = vsel %vm758, %v1878, %v1880
  %v1898 = vsel %vm758, %v1880, %v1882
  %v1899 = vsel %vm758, %v1882, %v1884
  %v1900 = vsel %vm758, %v1884, %v1886
  %v1901 = vsel %vm758, %v1886, %v1888
  %v1902 = vsel %vm758, %v1888, %v1890
  %v1903 = vsel %vm758, %v1890, %v1892
  %v1904 = vsel %vm758, %v1892, %v1894
  %v1905 = vsel %vm758, %v1894, %v1896
  %1920 = vst [vmem:[#allocation1] ss:$2 sm:$0xff] %v1534
  %s1921 = scalar_lea.vmem [#allocation1], 16
  %1922 = vst [vmem:[%s1921] ss:$2 sm:$0xff] %v1535
  %s1923 = scalar_lea.vmem [#allocation1], 32
  %1924 = vst [vmem:[%s1923] ss:$2 sm:$0xff] %v1536
  %s1925 = scalar_lea.vmem [#allocation1], 48
  %1926 = vst [vmem:[%s1925] ss:$2 sm:$0xff] %v1537
  %v1927 = vld.sshfl [vmem:[#allocation1] sm:$0xff pattern:$0x75316420]
  %v1928 = vld.sshfl [vmem:[#allocation1 + $0x8] sm:$0xff pattern:$0x75316420]
  %v1929 = vld.sshfl [vmem:[#allocation1 + $0x10] sm:$0xff pattern:$0x75316420]
  %v1930 = vld.sshfl [vmem:[#allocation1 + $0x18] sm:$0xff pattern:$0x75316420]
  %v1931 = vld.sshfl [vmem:[#allocation1 + $0x20] sm:$0xff pattern:$0x75316420]
  %v1932 = vld.sshfl [vmem:[#allocation1 + $0x28] sm:$0xff pattern:$0x75316420]
  %v1933 = vld.sshfl [vmem:[#allocation1 + $0x30] sm:$0xff pattern:$0x75316420]
  %v1934 = vld.sshfl [vmem:[#allocation1 + $0x38] sm:$0xff pattern:$0x75316420]
  %1935 = vst [vmem:[#allocation1] ss:$2 sm:$0xff] %v1538
  %v1936 = vld.sshfl [vmem:[#allocation1] sm:$0xff pattern:$0x75316420]
  %v1937 = vld.sshfl [vmem:[#allocation1 + $0x8] sm:$0xff pattern:$0x75316420]
  %1938 = vrot.lane.b32.xlu0 %v1927, 103
  %v1939 = vpop.permute.xlu0 %1938
  %1940 = vrot.lane.b32.xlu0 %v1928, 103
  %v1941 = vpop.permute.xlu0 %1940
  %1942 = vrot.lane.b32.xlu0 %v1929, 103
  %v1943 = vpop.permute.xlu0 %1942
  %1944 = vrot.lane.b32.xlu0 %v1930, 103
  %v1945 = vpop.permute.xlu0 %1944
  %1946 = vrot.lane.b32.xlu0 %v1931, 103
  %v1947 = vpop.permute.xlu0 %1946
  %1948 = vrot.lane.b32.xlu0 %v1932, 103
  %v1949 = vpop.permute.xlu0 %1948
  %1950 = vrot.lane.b32.xlu0 %v1933, 103
  %v1951 = vpop.permute.xlu0 %1950
  %1952 = vrot.lane.b32.xlu0 %v1934, 103
  %v1953 = vpop.permute.xlu0 %1952
  %1954 = vrot.lane.b32.xlu0 %v1936, 103
  %v1955 = vpop.permute.xlu0 %1954
  %1956 = vrot.lane.b32.xlu0 %v1937, 103
  %v1957 = vpop.permute.xlu0 %1956
  %v1958 = vsel %vm807, %v1939, %v1941
  %v1959 = vsel %vm807, %v1941, %v1943
  %v1960 = vsel %vm807, %v1943, %v1945
  %v1961 = vsel %vm807, %v1945, %v1947
  %v1962 = vsel %vm807, %v1947, %v1949
  %v1963 = vsel %vm807, %v1949, %v1951
  %v1964 = vsel %vm807, %v1951, %v1953
  %v1965 = vsel %vm807, %v1953, %v1955
  %v1966 = vsel %vm807, %v1955, %v1957
  %s1981 = scalar_lea.vmem [#allocation1], 1
  %1982 = vst [vmem:[%s1981] ss:$2 sm:$0xff] %v1574
  %s1983 = scalar_lea.vmem [#allocation1], 17
  %1984 = vst [vmem:[%s1983] ss:$2 sm:$0xff] %v1575
  %s1985 = scalar_lea.vmem [#allocation1], 33
  %1986 = vst [vmem:[%s1985] ss:$2 sm:$0xff] %v1576
  %s1987 = scalar_lea.vmem [#allocation1], 49
  %1988 = vst [vmem:[%s1987] ss:$2 sm:$0xff] %v1577
  %v1989 = vld.sshfl [vmem:[#allocation1] sm:$0xff pattern:$0x75316420]
  %v1990 = vld.sshfl [vmem:[#allocation1 + $0x8] sm:$0xff pattern:$0x75316420]
  %v1991 = vld.sshfl [vmem:[#allocation1 + $0x10] sm:$0xff pattern:$0x75316420]
  %v1992 = vld.sshfl [vmem:[#allocation1 + $0x18] sm:$0xff pattern:$0x75316420]
  %v1993 = vld.sshfl [vmem:[#allocation1 + $0x20] sm:$0xff pattern:$0x75316420]
  %v1994 = vld.sshfl [vmem:[#allocation1 + $0x28] sm:$0xff pattern:$0x75316420]
  %v1995 = vld.sshfl [vmem:[#allocation1 + $0x30] sm:$0xff pattern:$0x75316420]
  %v1996 = vld.sshfl [vmem:[#allocation1 + $0x38] sm:$0xff pattern:$0x75316420]
  %1997 = vst [vmem:[%s1981] ss:$2 sm:$0xff] %v1578
  %v1998 = vld.sshfl [vmem:[#allocation1] sm:$0xff pattern:$0x75316420]
  %v1999 = vld.sshfl [vmem:[#allocation1 + $0x8] sm:$0xff pattern:$0x75316420]
  %2000 = vrot.lane.b32.xlu0 %v1989, 102
  %v2001 = vpop.permute.xlu0 %2000
  %2002 = vrot.lane.b32.xlu0 %v1990, 102
  %v2003 = vpop.permute.xlu0 %2002
  %2004 = vrot.lane.b32.xlu0 %v1991, 102
  %v2005 = vpop.permute.xlu0 %2004
  %2006 = vrot.lane.b32.xlu0 %v1992, 102
  %v2007 = vpop.permute.xlu0 %2006
  %2008 = vrot.lane.b32.xlu0 %v1993, 102
  %v2009 = vpop.permute.xlu0 %2008
  %2010 = vrot.lane.b32.xlu0 %v1994, 102
  %v2011 = vpop.permute.xlu0 %2010
  %2012 = vrot.lane.b32.xlu0 %v1995, 102
  %v2013 = vpop.permute.xlu0 %2012
  %2014 = vrot.lane.b32.xlu0 %v1996, 102
  %v2015 = vpop.permute.xlu0 %2014
  %2016 = vrot.lane.b32.xlu0 %v1998, 102
  %v2017 = vpop.permute.xlu0 %2016
  %2018 = vrot.lane.b32.xlu0 %v1999, 102
  %v2019 = vpop.permute.xlu0 %2018
  %v2020 = vsel %vm856, %v2001, %v2003
  %v2021 = vsel %vm856, %v2003, %v2005
  %v2022 = vsel %vm856, %v2005, %v2007
  %v2023 = vsel %vm856, %v2007, %v2009
  %v2024 = vsel %vm856, %v2009, %v2011
  %v2025 = vsel %vm856, %v2011, %v2013
  %v2026 = vsel %vm856, %v2013, %v2015
  %v2027 = vsel %vm856, %v2015, %v2017
  %v2028 = vsel %vm856, %v2017, %v2019
  %2043 = vst [vmem:[#allocation1] ss:$2 sm:$0xff] %v1614
  %s2044 = scalar_lea.vmem [#allocation1], 16
  %2045 = vst [vmem:[%s2044] ss:$2 sm:$0xff] %v1615
  %s2046 = scalar_lea.vmem [#allocation1], 32
  %2047 = vst [vmem:[%s2046] ss:$2 sm:$0xff] %v1616
  %s2048 = scalar_lea.vmem [#allocation1], 48
  %2049 = vst [vmem:[%s2048] ss:$2 sm:$0xff] %v1617
  %v2050 = vld.sshfl [vmem:[#allocation1] sm:$0xff pattern:$0x75316420]
  %v2051 = vld.sshfl [vmem:[#allocation1 + $0x8] sm:$0xff pattern:$0x75316420]
  %v2052 = vld.sshfl [vmem:[#allocation1 + $0x10] sm:$0xff pattern:$0x75316420]
  %v2053 = vld.sshfl [vmem:[#allocation1 + $0x18] sm:$0xff pattern:$0x75316420]
  %v2054 = vld.sshfl [vmem:[#allocation1 + $0x20] sm:$0xff pattern:$0x75316420]
  %v2055 = vld.sshfl [vmem:[#allocation1 + $0x28] sm:$0xff pattern:$0x75316420]
  %v2056 = vld.sshfl [vmem:[#allocation1 + $0x30] sm:$0xff pattern:$0x75316420]
  %v2057 = vld.sshfl [vmem:[#allocation1 + $0x38] sm:$0xff pattern:$0x75316420]
  %2058 = vst [vmem:[#allocation1] ss:$2 sm:$0xff] %v1618
  %v2059 = vld.sshfl [vmem:[#allocation1] sm:$0xff pattern:$0x75316420]
  %v2060 = vld.sshfl [vmem:[#allocation1 + $0x8] sm:$0xff pattern:$0x75316420]
  %2061 = vrot.lane.b32.xlu0 %v2050, 80
  %v2062 = vpop.permute.xlu0 %2061
  %2063 = vrot.lane.b32.xlu0 %v2051, 80
  %v2064 = vpop.permute.xlu0 %2063
  %2065 = vrot.lane.b32.xlu0 %v2052, 80
  %v2066 = vpop.permute.xlu0 %2065
  %2067 = vrot.lane.b32.xlu0 %v2053, 80
  %v2068 = vpop.permute.xlu0 %2067
  %2069 = vrot.lane.b32.xlu0 %v2054, 80
  %v2070 = vpop.permute.xlu0 %2069
  %2071 = vrot.lane.b32.xlu0 %v2055, 80
  %v2072 = vpop.permute.xlu0 %2071
  %2073 = vrot.lane.b32.xlu0 %v2056, 80
  %v2074 = vpop.permute.xlu0 %2073
  %2075 = vrot.lane.b32.xlu0 %v2057, 80
  %v2076 = vpop.permute.xlu0 %2075
  %2077 = vrot.lane.b32.xlu0 %v2059, 80
  %v2078 = vpop.permute.xlu0 %2077
  %2079 = vrot.lane.b32.xlu0 %v2060, 80
  %v2080 = vpop.permute.xlu0 %2079
  %v2081 = vsel %vm905, %v2062, %v2064
  %v2082 = vsel %vm905, %v2064, %v2066
  %v2083 = vsel %vm905, %v2066, %v2068
  %v2084 = vsel %vm905, %v2068, %v2070
  %v2085 = vsel %vm905, %v2070, %v2072
  %v2086 = vsel %vm905, %v2072, %v2074
  %v2087 = vsel %vm905, %v2074, %v2076
  %v2088 = vsel %vm905, %v2076, %v2078
  %v2089 = vsel %vm905, %v2078, %v2080
  %s2104 = scalar_lea.vmem [#allocation1], 1
  %2105 = vst [vmem:[%s2104] ss:$2 sm:$0xff] %v1654
  %s2106 = scalar_lea.vmem [#allocation1], 17
  %2107 = vst [vmem:[%s2106] ss:$2 sm:$0xff] %v1655
  %s2108 = scalar_lea.vmem [#allocation1], 33
  %2109 = vst [vmem:[%s2108] ss:$2 sm:$0xff] %v1656
  %s2110 = scalar_lea.vmem [#allocation1], 49
  %2111 = vst [vmem:[%s2110] ss:$2 sm:$0xff] %v1657
  %v2112 = vld.sshfl [vmem:[#allocation1] sm:$0xff pattern:$0x75316420]
  %v2113 = vld.sshfl [vmem:[#allocation1 + $0x8] sm:$0xff pattern:$0x75316420]
  %v2114 = vld.sshfl [vmem:[#allocation1 + $0x10] sm:$0xff pattern:$0x75316420]
  %v2115 = vld.sshfl [vmem:[#allocation1 + $0x18] sm:$0xff pattern:$0x75316420]
  %v2116 = vld.sshfl [vmem:[#allocation1 + $0x20] sm:$0xff pattern:$0x75316420]
  %v2117 = vld.sshfl [vmem:[#allocation1 + $0x28] sm:$0xff pattern:$0x75316420]
  %v2118 = vld.sshfl [vmem:[#allocation1 + $0x30] sm:$0xff pattern:$0x75316420]
  %v2119 = vld.sshfl [vmem:[#allocation1 + $0x38] sm:$0xff pattern:$0x75316420]
  %2120 = vst [vmem:[%s2104] ss:$2 sm:$0xff] %v1658
  %v2121 = vld.sshfl [vmem:[#allocation1] sm:$0xff pattern:$0x75316420]
  %v2122 = vld.sshfl [vmem:[#allocation1 + $0x8] sm:$0xff pattern:$0x75316420]
  %2123 = vrot.lane.b32.xlu0 %v2112, 79
  %v2124 = vpop.permute.xlu0 %2123
  %2125 = vrot.lane.b32.xlu0 %v2113, 79
  %v2126 = vpop.permute.xlu0 %2125
  %2127 = vrot.lane.b32.xlu0 %v2114, 79
  %v2128 = vpop.permute.xlu0 %2127
  %2129 = vrot.lane.b32.xlu0 %v2115, 79
  %v2130 = vpop.permute.xlu0 %2129
  %2131 = vrot.lane.b32.xlu0 %v2116, 79
  %v2132 = vpop.permute.xlu0 %2131
  %2133 = vrot.lane.b32.xlu0 %v2117, 79
  %v2134 = vpop.permute.xlu0 %2133
  %2135 = vrot.lane.b32.xlu0 %v2118, 79
  %v2136 = vpop.permute.xlu0 %2135
  %2137 = vrot.lane.b32.xlu0 %v2119, 79
  %v2138 = vpop.permute.xlu0 %2137
  %2139 = vrot.lane.b32.xlu0 %v2121, 79
  %v2140 = vpop.permute.xlu0 %2139
  %2141 = vrot.lane.b32.xlu0 %v2122, 79
  %v2142 = vpop.permute.xlu0 %2141
  %v2143 = vsel %vm954, %v2124, %v2126
  %v2144 = vsel %vm954, %v2126, %v2128
  %v2145 = vsel %vm954, %v2128, %v2130
  %v2146 = vsel %vm954, %v2130, %v2132
  %v2147 = vsel %vm954, %v2132, %v2134
  %v2148 = vsel %vm954, %v2134, %v2136
  %v2149 = vsel %vm954, %v2136, %v2138
  %v2150 = vsel %vm954, %v2138, %v2140
  %v2151 = vsel %vm954, %v2140, %v2142
  %2166 = vst [vmem:[#allocation1] ss:$2 sm:$0xff] %v1694
  %s2167 = scalar_lea.vmem [#allocation1], 16
  %2168 = vst [vmem:[%s2167] ss:$2 sm:$0xff] %v1695
  %s2169 = scalar_lea.vmem [#allocation1], 32
  %2170 = vst [vmem:[%s2169] ss:$2 sm:$0xff] %v1696
  %s2171 = scalar_lea.vmem [#allocation1], 48
  %2172 = vst [vmem:[%s2171] ss:$2 sm:$0xff] %v1697
  %v2173 = vld.sshfl [vmem:[#allocation1] sm:$0xff pattern:$0x75316420]
  %v2174 = vld.sshfl [vmem:[#allocation1 + $0x8] sm:$0xff pattern:$0x75316420]
  %v2175 = vld.sshfl [vmem:[#allocation1 + $0x10] sm:$0xff pattern:$0x75316420]
  %v2176 = vld.sshfl [vmem:[#allocation1 + $0x18] sm:$0xff pattern:$0x75316420]
  %v2177 = vld.sshfl [vmem:[#allocation1 + $0x20] sm:$0xff pattern:$0x75316420]
  %v2178 = vld.sshfl [vmem:[#allocation1 + $0x28] sm:$0xff pattern:$0x75316420]
  %v2179 = vld.sshfl [vmem:[#allocation1 + $0x30] sm:$0xff pattern:$0x75316420]
  %v2180 = vld.sshfl [vmem:[#allocation1 + $0x38] sm:$0xff pattern:$0x75316420]
  %2181 = vst [vmem:[#allocation1] ss:$2 sm:$0xff] %v1698
  %v2182 = vld.sshfl [vmem:[#allocation1] sm:$0xff pattern:$0x75316420]
  %v2183 = vld.sshfl [vmem:[#allocation1 + $0x8] sm:$0xff pattern:$0x75316420]
  %2184 = vrot.lane.b32.xlu0 %v2173, 78
  %v2185 = vpop.permute.xlu0 %2184
  %2186 = vrot.lane.b32.xlu0 %v2174, 78
  %v2187 = vpop.permute.xlu0 %2186
  %2188 = vrot.lane.b32.xlu0 %v2175, 78
  %v2189 = vpop.permute.xlu0 %2188
  %2190 = vrot.lane.b32.xlu0 %v2176, 78
  %v2191 = vpop.permute.xlu0 %2190
  %2192 = vrot.lane.b32.xlu0 %v2177, 78
  %v2193 = vpop.permute.xlu0 %2192
  %2194 = vrot.lane.b32.xlu0 %v2178, 78
  %v2195 = vpop.permute.xlu0 %2194
  %2196 = vrot.lane.b32.xlu0 %v2179, 78
  %v2197 = vpop.permute.xlu0 %2196
  %2198 = vrot.lane.b32.xlu0 %v2180, 78
  %v2199 = vpop.permute.xlu0 %2198
  %2200 = vrot.lane.b32.xlu0 %v2182, 78
  %v2201 = vpop.permute.xlu0 %2200
  %2202 = vrot.lane.b32.xlu0 %v2183, 78
  %v2203 = vpop.permute.xlu0 %2202
  %v2204 = vsel %vm1003, %v2185, %v2187
  %v2205 = vsel %vm1003, %v2187, %v2189
  %v2206 = vsel %vm1003, %v2189, %v2191
  %v2207 = vsel %vm1003, %v2191, %v2193
  %v2208 = vsel %vm1003, %v2193, %v2195
  %v2209 = vsel %vm1003, %v2195, %v2197
  %v2210 = vsel %vm1003, %v2197, %v2199
  %v2211 = vsel %vm1003, %v2199, %v2201
  %v2212 = vsel %vm1003, %v2201, %v2203
  %v2213 = vsel %vm1334, %v1711, %v1774
  %v2214 = vsel %vm1334, %v1712, %v1775
  %v2215 = vsel %vm1334, %v1713, %v1776
  %v2216 = vsel %vm1334, %v1714, %v1777
  %v2217 = vsel %vm1334, %v1715, %v1778
  %v2218 = vsel %vm1334, %v1716, %v1779
  %v2219 = vsel %vm1334, %v1717, %v1780
  %v2220 = vsel %vm1334, %v1718, %v1781
  %v2221 = vsel %vm1334, %v1720, %v1782
  %v2222 = vsel %vm1334, %v1835, %v1897
  %v2223 = vsel %vm1334, %v1836, %v1898
  %v2224 = vsel %vm1334, %v1837, %v1899
  %v2225 = vsel %vm1334, %v1838, %v1900
  %v2226 = vsel %vm1334, %v1839, %v1901
  %v2227 = vsel %vm1334, %v1840, %v1902
  %v2228 = vsel %vm1334, %v1841, %v1903
  %v2229 = vsel %vm1334, %v1842, %v1904
  %v2230 = vsel %vm1334, %v1843, %v1905
  %v2231 = vsel %vm1334, %v1958, %v2020
  %v2232 = vsel %vm1334, %v1959, %v2021
  %v2233 = vsel %vm1334, %v1960, %v2022
  %v2234 = vsel %vm1334, %v1961, %v2023
  %v2235 = vsel %vm1334, %v1962, %v2024
  %v2236 = vsel %vm1334, %v1963, %v2025
  %v2237 = vsel %vm1334, %v1964, %v2026
  %v2238 = vsel %vm1334, %v1965, %v2027
  %v2239 = vsel %vm1334, %v1966, %v2028
  %v2240 = vsel %vm1334, %v2081, %v2143
  %v2241 = vsel %vm1334, %v2082, %v2144
  %v2242 = vsel %vm1334, %v2083, %v2145
  %v2243 = vsel %vm1334, %v2084, %v2146
  %v2244 = vsel %vm1334, %v2085, %v2147
  %v2245 = vsel %vm1334, %v2086, %v2148
  %v2246 = vsel %vm1334, %v2087, %v2149
  %v2247 = vsel %vm1334, %v2088, %v2150
  %v2248 = vsel %vm1334, %v2089, %v2151
  %v2249 = vld [vmem:[%s7] sm:$0xff]
  %2251 = vset.pattern.permute.xlu0 0
  %2252 = vperm.xlu0 %2251, %v2249
  %v2253 = vpop.permute.xlu0 %2252
  %vm2255 = vcmask 293888
  %v2257 = vsel %vm2255, %v1353, 0
  %v2259 = vsel %vm1334, %v2204, 0
  %v2261 = vsel %vm1334, %v2205, 0
  %v2263 = vsel %vm1334, %v2206, 0
  %v2265 = vsel %vm1334, %v2207, 0
  %v2267 = vsel %vm1334, %v2208, 0
  %v2269 = vsel %vm1334, %v2209, 0
  %v2271 = vsel %vm1334, %v2210, 0
  %v2273 = vsel %vm1334, %v2211, 0
  %v2275 = vsel %vm1334, %v2212, 0
  %2277 = vmatpush.msra.mxu0 0.0
  %2278 = vmatpush.msra.mxu0 0.0
  %2279 = vmatpush.msra.mxu0 0.0
  %2280 = vmatpush.msra.mxu0 0.0
  %2281 = vmatpush.msra.mxu0 0.0
  %2282 = vmatpush.msra.mxu0 0.0
  %2283 = vmatpush.msra.mxu0 0.0
  %2284 = vmatpush.msra.mxu0 0.0
  %2285 = vmatpush.msra.mxu0 0.0
  %2286 = vmatpush.msra.mxu0 0.0
  %2287 = vmatpush.msra.mxu0 0.0
  %2288 = vmatpush.msra.mxu0 %v2259
  %2289 = vmatpush.msra.mxu0 %v2240
  %2290 = vmatpush.msra.mxu0 %v2231
  %2291 = vmatpush.msra.mxu0 %v2222
  %2292 = vmatpush.msra.mxu0 %v2213
  %2293 = vmatmul.f32.gmra.mxu0 %v2257
  %v2294 = vpop.f32.mrf.mxu0
  %v2295 = vadd.f32 %v2253, %v2294
  %2296 = vdwg.mxu0
  %2297 = vmatpush.msra.mxu0 0.0
  %2298 = vmatpush.msra.mxu0 0.0
  %2299 = vmatpush.msra.mxu0 0.0
  %2300 = vmatpush.msra.mxu0 0.0
  %2301 = vmatpush.msra.mxu0 0.0
  %2302 = vmatpush.msra.mxu0 0.0
  %2303 = vmatpush.msra.mxu0 0.0
  %2304 = vmatpush.msra.mxu0 0.0
  %2305 = vmatpush.msra.mxu0 0.0
  %2306 = vmatpush.msra.mxu0 0.0
  %2307 = vmatpush.msra.mxu0 0.0
  %2308 = vmatpush.msra.mxu0 %v2261
  %2309 = vmatpush.msra.mxu0 %v2241
  %2310 = vmatpush.msra.mxu0 %v2232
  %2311 = vmatpush.msra.mxu0 %v2223
  %2312 = vmatpush.msra.mxu0 %v2214
  %2313 = vmatmul.f32.gmra.mxu0 %v2257
  %v2314 = vpop.f32.mrf.mxu0
  %v2315 = vadd.f32 %v2253, %v2314
  %2316 = vdwg.mxu0
  %2317 = vmatpush.msra.mxu0 0.0
  %2318 = vmatpush.msra.mxu0 0.0
  %2319 = vmatpush.msra.mxu0 0.0
  %2320 = vmatpush.msra.mxu0 0.0
  %2321 = vmatpush.msra.mxu0 0.0
  %2322 = vmatpush.msra.mxu0 0.0
  %2323 = vmatpush.msra.mxu0 0.0
  %2324 = vmatpush.msra.mxu0 0.0
  %2325 = vmatpush.msra.mxu0 0.0
  %2326 = vmatpush.msra.mxu0 0.0
  %2327 = vmatpush.msra.mxu0 0.0
  %2328 = vmatpush.msra.mxu0 %v2263
  %2329 = vmatpush.msra.mxu0 %v2242
  %2330 = vmatpush.msra.mxu0 %v2233
  %2331 = vmatpush.msra.mxu0 %v2224
  %2332 = vmatpush.msra.mxu0 %v2215
  %2333 = vmatmul.f32.gmra.mxu0 %v2257
  %v2334 = vpop.f32.mrf.mxu0
  %v2335 = vadd.f32 %v2253, %v2334
  %2336 = vdwg.mxu0
  %2337 = vmatpush.msra.mxu0 0.0
  %2338 = vmatpush.msra.mxu0 0.0
  %2339 = vmatpush.msra.mxu0 0.0
  %2340 = vmatpush.msra.mxu0 0.0
  %2341 = vmatpush.msra.mxu0 0.0
  %2342 = vmatpush.msra.mxu0 0.0
  %2343 = vmatpush.msra.mxu0 0.0
  %2344 = vmatpush.msra.mxu0 0.0
  %2345 = vmatpush.msra.mxu0 0.0
  %2346 = vmatpush.msra.mxu0 0.0
  %2347 = vmatpush.msra.mxu0 0.0
  %2348 = vmatpush.msra.mxu0 %v2265
  %2349 = vmatpush.msra.mxu0 %v2243
  %2350 = vmatpush.msra.mxu0 %v2234
  %2351 = vmatpush.msra.mxu0 %v2225
  %2352 = vmatpush.msra.mxu0 %v2216
  %2353 = vmatmul.f32.gmra.mxu0 %v2257
  %v2354 = vpop.f32.mrf.mxu0
  %v2355 = vadd.f32 %v2253, %v2354
  %2356 = vdwg.mxu0
  %2357 = vmatpush.msra.mxu0 0.0
  %2358 = vmatpush.msra.mxu0 0.0
  %2359 = vmatpush.msra.mxu0 0.0
  %2360 = vmatpush.msra.mxu0 0.0
  %2361 = vmatpush.msra.mxu0 0.0
  %2362 = vmatpush.msra.mxu0 0.0
  %2363 = vmatpush.msra.mxu0 0.0
  %2364 = vmatpush.msra.mxu0 0.0
  %2365 = vmatpush.msra.mxu0 0.0
  %2366 = vmatpush.msra.mxu0 0.0
  %2367 = vmatpush.msra.mxu0 0.0
  %2368 = vmatpush.msra.mxu0 %v2267
  %2369 = vmatpush.msra.mxu0 %v2244
  %2370 = vmatpush.msra.mxu0 %v2235
  %2371 = vmatpush.msra.mxu0 %v2226
  %2372 = vmatpush.msra.mxu0 %v2217
  %2373 = vmatmul.f32.gmra.mxu0 %v2257
  %v2374 = vpop.f32.mrf.mxu0
  %v2375 = vadd.f32 %v2253, %v2374
  %2376 = vdwg.mxu0
  %2377 = vmatpush.msra.mxu0 0.0
  %2378 = vmatpush.msra.mxu0 0.0
  %2379 = vmatpush.msra.mxu0 0.0
  %2380 = vmatpush.msra.mxu0 0.0
  %2381 = vmatpush.msra.mxu0 0.0
  %2382 = vmatpush.msra.mxu0 0.0
  %2383 = vmatpush.msra.mxu0 0.0
  %2384 = vmatpush.msra.mxu0 0.0
  %2385 = vmatpush.msra.mxu0 0.0
  %2386 = vmatpush.msra.mxu0 0.0
  %2387 = vmatpush.msra.mxu0 0.0
  %2388 = vmatpush.msra.mxu0 %v2269
  %2389 = vmatpush.msra.mxu0 %v2245
  %2390 = vmatpush.msra.mxu0 %v2236
  %2391 = vmatpush.msra.mxu0 %v2227
  %2392 = vmatpush.msra.mxu0 %v2218
  %2393 = vmatmul.f32.gmra.mxu0 %v2257
  %v2394 = vpop.f32.mrf.mxu0
  %v2395 = vadd.f32 %v2253, %v2394
  %2396 = vdwg.mxu0
  %2397 = vmatpush.msra.mxu0 0.0
  %2398 = vmatpush.msra.mxu0 0.0
  %2399 = vmatpush.msra.mxu0 0.0
  %2400 = vmatpush.msra.mxu0 0.0
  %2401 = vmatpush.msra.mxu0 0.0
  %2402 = vmatpush.msra.mxu0 0.0
  %2403 = vmatpush.msra.mxu0 0.0
  %2404 = vmatpush.msra.mxu0 0.0
  %2405 = vmatpush.msra.mxu0 0.0
  %2406 = vmatpush.msra.mxu0 0.0
  %2407 = vmatpush.msra.mxu0 0.0
  %2408 = vmatpush.msra.mxu0 %v2271
  %2409 = vmatpush.msra.mxu0 %v2246
  %2410 = vmatpush.msra.mxu0 %v2237
  %2411 = vmatpush.msra.mxu0 %v2228
  %2412 = vmatpush.msra.mxu0 %v2219
  %2413 = vmatmul.f32.gmra.mxu0 %v2257
  %v2414 = vpop.f32.mrf.mxu0
  %v2415 = vadd.f32 %v2253, %v2414
  %2416 = vdwg.mxu0
  %2417 = vmatpush.msra.mxu0 0.0
  %2418 = vmatpush.msra.mxu0 0.0
  %2419 = vmatpush.msra.mxu0 0.0
  %2420 = vmatpush.msra.mxu0 0.0
  %2421 = vmatpush.msra.mxu0 0.0
  %2422 = vmatpush.msra.mxu0 0.0
  %2423 = vmatpush.msra.mxu0 0.0
  %2424 = vmatpush.msra.mxu0 0.0
  %2425 = vmatpush.msra.mxu0 0.0
  %2426 = vmatpush.msra.mxu0 0.0
  %2427 = vmatpush.msra.mxu0 0.0
  %2428 = vmatpush.msra.mxu0 %v2273
  %2429 = vmatpush.msra.mxu0 %v2247
  %2430 = vmatpush.msra.mxu0 %v2238
  %2431 = vmatpush.msra.mxu0 %v2229
  %2432 = vmatpush.msra.mxu0 %v2220
  %2433 = vmatmul.f32.gmra.mxu0 %v2257
  %v2434 = vpop.f32.mrf.mxu0
  %v2435 = vadd.f32 %v2253, %v2434
  %2436 = vdwg.mxu0
  %2437 = vmatpush.msra.mxu0 0.0
  %2438 = vmatpush.msra.mxu0 0.0
  %2439 = vmatpush.msra.mxu0 0.0
  %2440 = vmatpush.msra.mxu0 0.0
  %2441 = vmatpush.msra.mxu0 0.0
  %2442 = vmatpush.msra.mxu0 0.0
  %2443 = vmatpush.msra.mxu0 0.0
  %2444 = vmatpush.msra.mxu0 0.0
  %2445 = vmatpush.msra.mxu0 0.0
  %2446 = vmatpush.msra.mxu0 0.0
  %2447 = vmatpush.msra.mxu0 0.0
  %2448 = vmatpush.msra.mxu0 %v2275
  %2449 = vmatpush.msra.mxu0 %v2248
  %2450 = vmatpush.msra.mxu0 %v2239
  %2451 = vmatpush.msra.mxu0 %v2230
  %2452 = vmatpush.msra.mxu0 %v2221
  %2453 = vmatmul.f32.gmra.mxu0 %v2257
  %v2454 = vpop.f32.mrf.mxu0
  %v2455 = vadd.f32 %v2253, %v2454
  %2456 = vdwg.mxu0
  %v2457 = vmax.f32 %v2295, 0.0
  %v2458 = vmax.f32 %v2315, 0.0
  %v2459 = vmax.f32 %v2335, 0.0
  %v2460 = vmax.f32 %v2355, 0.0
  %v2461 = vmax.f32 %v2375, 0.0
  %v2462 = vmax.f32 %v2395, 0.0
  %v2463 = vmax.f32 %v2415, 0.0
  %v2464 = vmax.f32 %v2435, 0.0
  %v2465 = vmax.f32 %v2455, 0.0
  %2475 = vrot.lane.b32.xlu0 %v2457, 25
  %v2476 = vpop.permute.xlu0 %2475
  %2477 = vrot.lane.b32.xlu0 %v2458, 25
  %v2478 = vpop.permute.xlu0 %2477
  %2479 = vrot.lane.b32.xlu0 %v2459, 25
  %v2480 = vpop.permute.xlu0 %2479
  %2481 = vrot.lane.b32.xlu0 %v2460, 25
  %v2482 = vpop.permute.xlu0 %2481
  %2483 = vrot.lane.b32.xlu0 %v2461, 25
  %v2484 = vpop.permute.xlu0 %2483
  %2485 = vrot.lane.b32.xlu0 %v2462, 25
  %v2486 = vpop.permute.xlu0 %2485
  %2487 = vrot.lane.b32.xlu0 %v2463, 25
  %v2488 = vpop.permute.xlu0 %2487
  %2489 = vrot.lane.b32.xlu0 %v2464, 25
  %v2490 = vpop.permute.xlu0 %2489
  %2491 = vrot.lane.b32.xlu0 %v2465, 25
  %v2492 = vpop.permute.xlu0 %2491
  %v2493 = vsel %vm341, %v2476, %v2478
  %v2494 = vsel %vm341, %v2478, %v2480
  %v2495 = vsel %vm341, %v2480, %v2482
  %v2496 = vsel %vm341, %v2482, %v2484
  %v2497 = vsel %vm341, %v2484, %v2486
  %v2498 = vsel %vm341, %v2486, %v2488
  %v2499 = vsel %vm341, %v2488, %v2490
  %v2500 = vsel %vm341, %v2490, %v2492
  %v2511 = vsel %vm341, 0.0, %v2476
  %v2512 = vsel %vm341, %v2492, 0.0
  %v2513 = vld [vmem:[%s8] sm:$0x7]
  %v2514 = vmul.f32 %v2511, %v92
  %v2515 = vmul.f32 %v2493, %v93
  %v2516 = vmul.f32 %v2494, %v94
  %v2517 = vmul.f32 %v2495, %v95
  %v2518 = vmul.f32 %v2496, %v96
  %v2519 = vmul.f32 %v2497, %v97
  %v2520 = vmul.f32 %v2498, %v98
  %v2521 = vmul.f32 %v2499, %v99
  %v2522 = vmul.f32 %v2500, %v100
  %v2523 = vmul.f32 %v2511, %v129
  %v2524 = vmul.f32 %v2493, %v147
  %v2525 = vmul.f32 %v2494, %v148
  %v2526 = vmul.f32 %v2495, %v149
  %v2527 = vmul.f32 %v2496, %v150
  %v2528 = vmul.f32 %v2497, %v151
  %v2529 = vmul.f32 %v2498, %v152
  %v2530 = vmul.f32 %v2499, %v153
  %v2531 = vmul.f32 %v2500, %v154
  %v2532 = vmul.f32 %v2512, %v145
  %v2533 = vmul.f32 %v2511, %v194
  %v2534 = vmul.f32 %v2493, %v212
  %v2535 = vmul.f32 %v2494, %v213
  %v2536 = vmul.f32 %v2495, %v214
  %v2537 = vmul.f32 %v2496, %v215
  %v2538 = vmul.f32 %v2497, %v216
  %v2539 = vmul.f32 %v2498, %v217
  %v2540 = vmul.f32 %v2499, %v218
  %v2541 = vmul.f32 %v2500, %v219
  %v2542 = vmul.f32 %v2512, %v210
  %v2543 = vmul.f32 %v2511, %v259
  %v2544 = vmul.f32 %v2493, %v277
  %v2545 = vmul.f32 %v2494, %v278
  %v2546 = vmul.f32 %v2495, %v279
  %v2547 = vmul.f32 %v2496, %v280
  %v2548 = vmul.f32 %v2497, %v281
  %v2549 = vmul.f32 %v2498, %v282
  %v2550 = vmul.f32 %v2499, %v283
  %v2551 = vmul.f32 %v2500, %v284
  %v2552 = vmul.f32 %v2512, %v275
  %v2553 = vmul.f32 %v2511, %v324
  %v2554 = vmul.f32 %v2493, %v342
  %v2555 = vmul.f32 %v2494, %v343
  %v2556 = vmul.f32 %v2495, %v344
  %v2557 = vmul.f32 %v2496, %v345
  %v2558 = vmul.f32 %v2497, %v346
  %v2559 = vmul.f32 %v2498, %v347
  %v2560 = vmul.f32 %v2499, %v348
  %v2561 = vmul.f32 %v2500, %v349
  %v2562 = vmul.f32 %v2512, %v340
  %v2563 = vmul.f32 %v2511, %v389
  %v2564 = vmul.f32 %v2493, %v407
  %v2565 = vmul.f32 %v2494, %v408
  %v2566 = vmul.f32 %v2495, %v409
  %v2567 = vmul.f32 %v2496, %v410
  %v2568 = vmul.f32 %v2497, %v411
  %v2569 = vmul.f32 %v2498, %v412
  %v2570 = vmul.f32 %v2499, %v413
  %v2571 = vmul.f32 %v2500, %v414
  %v2572 = vmul.f32 %v2512, %v405
  %v2573 = vmul.f32 %v2511, %v454
  %v2574 = vmul.f32 %v2493, %v472
  %v2575 = vmul.f32 %v2494, %v473
  %v2576 = vmul.f32 %v2495, %v474
  %v2577 = vmul.f32 %v2496, %v475
  %v2578 = vmul.f32 %v2497, %v476
  %v2579 = vmul.f32 %v2498, %v477
  %v2580 = vmul.f32 %v2499, %v478
  %v2581 = vmul.f32 %v2500, %v479
  %v2582 = vmul.f32 %v2512, %v470
  %v2583 = vmul.f32 %v2511, %v519
  %v2584 = vmul.f32 %v2493, %v537
  %v2585 = vmul.f32 %v2494, %v538
  %v2586 = vmul.f32 %v2495, %v539
  %v2587 = vmul.f32 %v2496, %v540
  %v2588 = vmul.f32 %v2497, %v541
  %v2589 = vmul.f32 %v2498, %v542
  %v2590 = vmul.f32 %v2499, %v543
  %v2591 = vmul.f32 %v2500, %v544
  %v2592 = vmul.f32 %v2512, %v535
  %v2593 = vmul.f32 %v2511, %v584
  %v2594 = vmul.f32 %v2493, %v602
  %v2595 = vmul.f32 %v2494, %v603
  %v2596 = vmul.f32 %v2495, %v604
  %v2597 = vmul.f32 %v2496, %v605
  %v2598 = vmul.f32 %v2497, %v606
  %v2599 = vmul.f32 %v2498, %v607
  %v2600 = vmul.f32 %v2499, %v608
  %v2601 = vmul.f32 %v2500, %v609
  %v2602 = vmul.f32 %v2512, %v600
  %2613 = vrot.lane.b32.xlu0 %v2523, 127
  %v2614 = vpop.permute.xlu0 %2613
  %2615 = vrot.lane.b32.xlu0 %v2524, 127
  %v2616 = vpop.permute.xlu0 %2615
  %2617 = vrot.lane.b32.xlu0 %v2525, 127
  %v2618 = vpop.permute.xlu0 %2617
  %2619 = vrot.lane.b32.xlu0 %v2526, 127
  %v2620 = vpop.permute.xlu0 %2619
  %2621 = vrot.lane.b32.xlu0 %v2527, 127
  %v2622 = vpop.permute.xlu0 %2621
  %2623 = vrot.lane.b32.xlu0 %v2528, 127
  %v2624 = vpop.permute.xlu0 %2623
  %2625 = vrot.lane.b32.xlu0 %v2529, 127
  %v2626 = vpop.permute.xlu0 %2625
  %2627 = vrot.lane.b32.xlu0 %v2530, 127
  %v2628 = vpop.permute.xlu0 %2627
  %2629 = vrot.lane.b32.xlu0 %v2531, 127
  %v2630 = vpop.permute.xlu0 %2629
  %2631 = vrot.lane.b32.xlu0 %v2532, 127
  %v2632 = vpop.permute.xlu0 %2631
  %v2633 = vsel %vm660, %v2614, %v2616
  %v2634 = vsel %vm660, %v2616, %v2618
  %v2635 = vsel %vm660, %v2618, %v2620
  %v2636 = vsel %vm660, %v2620, %v2622
  %v2637 = vsel %vm660, %v2622, %v2624
  %v2638 = vsel %vm660, %v2624, %v2626
  %v2639 = vsel %vm660, %v2626, %v2628
  %v2640 = vsel %vm660, %v2628, %v2630
  %v2641 = vsel %vm660, %v2630, %v2632
  %2661 = vrot.lane.b32.xlu0 %v2533, 126
  %v2662 = vpop.permute.xlu0 %2661
  %2663 = vrot.lane.b32.xlu0 %v2534, 126
  %v2664 = vpop.permute.xlu0 %2663
  %2665 = vrot.lane.b32.xlu0 %v2535, 126
  %v2666 = vpop.permute.xlu0 %2665
  %2667 = vrot.lane.b32.xlu0 %v2536, 126
  %v2668 = vpop.permute.xlu0 %2667
  %2669 = vrot.lane.b32.xlu0 %v2537, 126
  %v2670 = vpop.permute.xlu0 %2669
  %2671 = vrot.lane.b32.xlu0 %v2538, 126
  %v2672 = vpop.permute.xlu0 %2671
  %2673 = vrot.lane.b32.xlu0 %v2539, 126
  %v2674 = vpop.permute.xlu0 %2673
  %2675 = vrot.lane.b32.xlu0 %v2540, 126
  %v2676 = vpop.permute.xlu0 %2675
  %2677 = vrot.lane.b32.xlu0 %v2541, 126
  %v2678 = vpop.permute.xlu0 %2677
  %2679 = vrot.lane.b32.xlu0 %v2542, 126
  %v2680 = vpop.permute.xlu0 %2679
  %v2681 = vsel %vm709, %v2662, %v2664
  %v2682 = vsel %vm709, %v2664, %v2666
  %v2683 = vsel %vm709, %v2666, %v2668
  %v2684 = vsel %vm709, %v2668, %v2670
  %v2685 = vsel %vm709, %v2670, %v2672
  %v2686 = vsel %vm709, %v2672, %v2674
  %v2687 = vsel %vm709, %v2674, %v2676
  %v2688 = vsel %vm709, %v2676, %v2678
  %v2689 = vsel %vm709, %v2678, %v2680
  %2709 = vrot.lane.b32.xlu0 %v2543, 104
  %v2710 = vpop.permute.xlu0 %2709
  %2711 = vrot.lane.b32.xlu0 %v2544, 104
  %v2712 = vpop.permute.xlu0 %2711
  %2713 = vrot.lane.b32.xlu0 %v2545, 104
  %v2714 = vpop.permute.xlu0 %2713
  %2715 = vrot.lane.b32.xlu0 %v2546, 104
  %v2716 = vpop.permute.xlu0 %2715
  %2717 = vrot.lane.b32.xlu0 %v2547, 104
  %v2718 = vpop.permute.xlu0 %2717
  %2719 = vrot.lane.b32.xlu0 %v2548, 104
  %v2720 = vpop.permute.xlu0 %2719
  %2721 = vrot.lane.b32.xlu0 %v2549, 104
  %v2722 = vpop.permute.xlu0 %2721
  %2723 = vrot.lane.b32.xlu0 %v2550, 104
  %v2724 = vpop.permute.xlu0 %2723
  %2725 = vrot.lane.b32.xlu0 %v2551, 104
  %v2726 = vpop.permute.xlu0 %2725
  %2727 = vrot.lane.b32.xlu0 %v2552, 104
  %v2728 = vpop.permute.xlu0 %2727
  %v2729 = vsel %vm758, %v2710, %v2712
  %v2730 = vsel %vm758, %v2712, %v2714
  %v2731 = vsel %vm758, %v2714, %v2716
  %v2732 = vsel %vm758, %v2716, %v2718
  %v2733 = vsel %vm758, %v2718, %v2720
  %v2734 = vsel %vm758, %v2720, %v2722
  %v2735 = vsel %vm758, %v2722, %v2724
  %v2736 = vsel %vm758, %v2724, %v2726
  %v2737 = vsel %vm758, %v2726, %v2728
  %2757 = vrot.lane.b32.xlu0 %v2553, 103
  %v2758 = vpop.permute.xlu0 %2757
  %2759 = vrot.lane.b32.xlu0 %v2554, 103
  %v2760 = vpop.permute.xlu0 %2759
  %2761 = vrot.lane.b32.xlu0 %v2555, 103
  %v2762 = vpop.permute.xlu0 %2761
  %2763 = vrot.lane.b32.xlu0 %v2556, 103
  %v2764 = vpop.permute.xlu0 %2763
  %2765 = vrot.lane.b32.xlu0 %v2557, 103
  %v2766 = vpop.permute.xlu0 %2765
  %2767 = vrot.lane.b32.xlu0 %v2558, 103
  %v2768 = vpop.permute.xlu0 %2767
  %2769 = vrot.lane.b32.xlu0 %v2559, 103
  %v2770 = vpop.permute.xlu0 %2769
  %2771 = vrot.lane.b32.xlu0 %v2560, 103
  %v2772 = vpop.permute.xlu0 %2771
  %2773 = vrot.lane.b32.xlu0 %v2561, 103
  %v2774 = vpop.permute.xlu0 %2773
  %2775 = vrot.lane.b32.xlu0 %v2562, 103
  %v2776 = vpop.permute.xlu0 %2775
  %v2777 = vsel %vm807, %v2758, %v2760
  %v2778 = vsel %vm807, %v2760, %v2762
  %v2779 = vsel %vm807, %v2762, %v2764
  %v2780 = vsel %vm807, %v2764, %v2766
  %v2781 = vsel %vm807, %v2766, %v2768
  %v2782 = vsel %vm807, %v2768, %v2770
  %v2783 = vsel %vm807, %v2770, %v2772
  %v2784 = vsel %vm807, %v2772, %v2774
  %v2785 = vsel %vm807, %v2774, %v2776
  %2805 = vrot.lane.b32.xlu0 %v2563, 102
  %v2806 = vpop.permute.xlu0 %2805
  %2807 = vrot.lane.b32.xlu0 %v2564, 102
  %v2808 = vpop.permute.xlu0 %2807
  %2809 = vrot.lane.b32.xlu0 %v2565, 102
  %v2810 = vpop.permute.xlu0 %2809
  %2811 = vrot.lane.b32.xlu0 %v2566, 102
  %v2812 = vpop.permute.xlu0 %2811
  %2813 = vrot.lane.b32.xlu0 %v2567, 102
  %v2814 = vpop.permute.xlu0 %2813
  %2815 = vrot.lane.b32.xlu0 %v2568, 102
  %v2816 = vpop.permute.xlu0 %2815
  %2817 = vrot.lane.b32.xlu0 %v2569, 102
  %v2818 = vpop.permute.xlu0 %2817
  %2819 = vrot.lane.b32.xlu0 %v2570, 102
  %v2820 = vpop.permute.xlu0 %2819
  %2821 = vrot.lane.b32.xlu0 %v2571, 102
  %v2822 = vpop.permute.xlu0 %2821
  %2823 = vrot.lane.b32.xlu0 %v2572, 102
  %v2824 = vpop.permute.xlu0 %2823
  %v2825 = vsel %vm856, %v2806, %v2808
  %v2826 = vsel %vm856, %v2808, %v2810
  %v2827 = vsel %vm856, %v2810, %v2812
  %v2828 = vsel %vm856, %v2812, %v2814
  %v2829 = vsel %vm856, %v2814, %v2816
  %v2830 = vsel %vm856, %v2816, %v2818
  %v2831 = vsel %vm856, %v2818, %v2820
  %v2832 = vsel %vm856, %v2820, %v2822
  %v2833 = vsel %vm856, %v2822, %v2824
  %2853 = vrot.lane.b32.xlu0 %v2573, 80
  %v2854 = vpop.permute.xlu0 %2853
  %2855 = vrot.lane.b32.xlu0 %v2574, 80
  %v2856 = vpop.permute.xlu0 %2855
  %2857 = vrot.lane.b32.xlu0 %v2575, 80
  %v2858 = vpop.permute.xlu0 %2857
  %2859 = vrot.lane.b32.xlu0 %v2576, 80
  %v2860 = vpop.permute.xlu0 %2859
  %2861 = vrot.lane.b32.xlu0 %v2577, 80
  %v2862 = vpop.permute.xlu0 %2861
  %2863 = vrot.lane.b32.xlu0 %v2578, 80
  %v2864 = vpop.permute.xlu0 %2863
  %2865 = vrot.lane.b32.xlu0 %v2579, 80
  %v2866 = vpop.permute.xlu0 %2865
  %2867 = vrot.lane.b32.xlu0 %v2580, 80
  %v2868 = vpop.permute.xlu0 %2867
  %2869 = vrot.lane.b32.xlu0 %v2581, 80
  %v2870 = vpop.permute.xlu0 %2869
  %2871 = vrot.lane.b32.xlu0 %v2582, 80
  %v2872 = vpop.permute.xlu0 %2871
  %v2873 = vsel %vm905, %v2854, %v2856
  %v2874 = vsel %vm905, %v2856, %v2858
  %v2875 = vsel %vm905, %v2858, %v2860
  %v2876 = vsel %vm905, %v2860, %v2862
  %v2877 = vsel %vm905, %v2862, %v2864
  %v2878 = vsel %vm905, %v2864, %v2866
  %v2879 = vsel %vm905, %v2866, %v2868
  %v2880 = vsel %vm905, %v2868, %v2870
  %v2881 = vsel %vm905, %v2870, %v2872
  %2901 = vrot.lane.b32.xlu0 %v2583, 79
  %v2902 = vpop.permute.xlu0 %2901
  %2903 = vrot.lane.b32.xlu0 %v2584, 79
  %v2904 = vpop.permute.xlu0 %2903
  %2905 = vrot.lane.b32.xlu0 %v2585, 79
  %v2906 = vpop.permute.xlu0 %2905
  %2907 = vrot.lane.b32.xlu0 %v2586, 79
  %v2908 = vpop.permute.xlu0 %2907
  %2909 = vrot.lane.b32.xlu0 %v2587, 79
  %v2910 = vpop.permute.xlu0 %2909
  %2911 = vrot.lane.b32.xlu0 %v2588, 79
  %v2912 = vpop.permute.xlu0 %2911
  %2913 = vrot.lane.b32.xlu0 %v2589, 79
  %v2914 = vpop.permute.xlu0 %2913
  %2915 = vrot.lane.b32.xlu0 %v2590, 79
  %v2916 = vpop.permute.xlu0 %2915
  %2917 = vrot.lane.b32.xlu0 %v2591, 79
  %v2918 = vpop.permute.xlu0 %2917
  %2919 = vrot.lane.b32.xlu0 %v2592, 79
  %v2920 = vpop.permute.xlu0 %2919
  %v2921 = vsel %vm954, %v2902, %v2904
  %v2922 = vsel %vm954, %v2904, %v2906
  %v2923 = vsel %vm954, %v2906, %v2908
  %v2924 = vsel %vm954, %v2908, %v2910
  %v2925 = vsel %vm954, %v2910, %v2912
  %v2926 = vsel %vm954, %v2912, %v2914
  %v2927 = vsel %vm954, %v2914, %v2916
  %v2928 = vsel %vm954, %v2916, %v2918
  %v2929 = vsel %vm954, %v2918, %v2920
  %2949 = vrot.lane.b32.xlu0 %v2593, 78
  %v2950 = vpop.permute.xlu0 %2949
  %2951 = vrot.lane.b32.xlu0 %v2594, 78
  %v2952 = vpop.permute.xlu0 %2951
  %2953 = vrot.lane.b32.xlu0 %v2595, 78
  %v2954 = vpop.permute.xlu0 %2953
  %2955 = vrot.lane.b32.xlu0 %v2596, 78
  %v2956 = vpop.permute.xlu0 %2955
  %2957 = vrot.lane.b32.xlu0 %v2597, 78
  %v2958 = vpop.permute.xlu0 %2957
  %2959 = vrot.lane.b32.xlu0 %v2598, 78
  %v2960 = vpop.permute.xlu0 %2959
  %2961 = vrot.lane.b32.xlu0 %v2599, 78
  %v2962 = vpop.permute.xlu0 %2961
  %2963 = vrot.lane.b32.xlu0 %v2600, 78
  %v2964 = vpop.permute.xlu0 %2963
  %2965 = vrot.lane.b32.xlu0 %v2601, 78
  %v2966 = vpop.permute.xlu0 %2965
  %2967 = vrot.lane.b32.xlu0 %v2602, 78
  %v2968 = vpop.permute.xlu0 %2967
  %v2969 = vsel %vm1003, %v2950, %v2952
  %v2970 = vsel %vm1003, %v2952, %v2954
  %v2971 = vsel %vm1003, %v2954, %v2956
  %v2972 = vsel %vm1003, %v2956, %v2958
  %v2973 = vsel %vm1003, %v2958, %v2960
  %v2974 = vsel %vm1003, %v2960, %v2962
  %v2975 = vsel %vm1003, %v2962, %v2964
  %v2976 = vsel %vm1003, %v2964, %v2966
  %v2977 = vsel %vm1003, %v2966, %v2968
  %v2988 = vsel %vm1022, %v2513, 0
  %2990 = vmatpush.msra.mxu0 0.0
  %2991 = vmatpush.msra.mxu0 0.0
  %2992 = vmatpush.msra.mxu0 0.0
  %2993 = vmatpush.msra.mxu0 0.0
  %2994 = vmatpush.msra.mxu0 0.0
  %2995 = vmatpush.msra.mxu0 0.0
  %2996 = vmatpush.msra.mxu0 0.0
  %2997 = vmatpush.msra.mxu0 %v2969
  %2998 = vmatpush.msra.mxu0 %v2921
  %2999 = vmatpush.msra.mxu0 %v2873
  %3000 = vmatpush.msra.mxu0 %v2825
  %3001 = vmatpush.msra.mxu0 %v2777
  %3002 = vmatpush.msra.mxu0 %v2729
  %3003 = vmatpush.msra.mxu0 %v2681
  %3004 = vmatpush.msra.mxu0 %v2633
  %3005 = vmatpush.msra.mxu0 %v2514
  %3006 = vmatmul.f32.gmra.mxu0 %v2988
  %v3007 = vpop.f32.mrf.mxu0
  %v3008 = vadd.f32 0.0, %v3007
  %3009 = vdwg.mxu0
  %3010 = vmatpush.msra.mxu0 0.0
  %3011 = vmatpush.msra.mxu0 0.0
  %3012 = vmatpush.msra.mxu0 0.0
  %3013 = vmatpush.msra.mxu0 0.0
  %3014 = vmatpush.msra.mxu0 0.0
  %3015 = vmatpush.msra.mxu0 0.0
  %3016 = vmatpush.msra.mxu0 0.0
  %3017 = vmatpush.msra.mxu0 %v2970
  %3018 = vmatpush.msra.mxu0 %v2922
  %3019 = vmatpush.msra.mxu0 %v2874
  %3020 = vmatpush.msra.mxu0 %v2826
  %3021 = vmatpush.msra.mxu0 %v2778
  %3022 = vmatpush.msra.mxu0 %v2730
  %3023 = vmatpush.msra.mxu0 %v2682
  %3024 = vmatpush.msra.mxu0 %v2634
  %3025 = vmatpush.msra.mxu0 %v2515
  %3026 = vmatmul.f32.gmra.mxu0 %v2988
  %v3027 = vpop.f32.mrf.mxu0
  %v3028 = vadd.f32 0.0, %v3027
  %3029 = vdwg.mxu0
  %3030 = vmatpush.msra.mxu0 0.0
  %3031 = vmatpush.msra.mxu0 0.0
  %3032 = vmatpush.msra.mxu0 0.0
  %3033 = vmatpush.msra.mxu0 0.0
  %3034 = vmatpush.msra.mxu0 0.0
  %3035 = vmatpush.msra.mxu0 0.0
  %3036 = vmatpush.msra.mxu0 0.0
  %3037 = vmatpush.msra.mxu0 %v2971
  %3038 = vmatpush.msra.mxu0 %v2923
  %3039 = vmatpush.msra.mxu0 %v2875
  %3040 = vmatpush.msra.mxu0 %v2827
  %3041 = vmatpush.msra.mxu0 %v2779
  %3042 = vmatpush.msra.mxu0 %v2731
  %3043 = vmatpush.msra.mxu0 %v2683
  %3044 = vmatpush.msra.mxu0 %v2635
  %3045 = vmatpush.msra.mxu0 %v2516
  %3046 = vmatmul.f32.gmra.mxu0 %v2988
  %v3047 = vpop.f32.mrf.mxu0
  %v3048 = vadd.f32 0.0, %v3047
  %3049 = vdwg.mxu0
  %3050 = vmatpush.msra.mxu0 0.0
  %3051 = vmatpush.msra.mxu0 0.0
  %3052 = vmatpush.msra.mxu0 0.0
  %3053 = vmatpush.msra.mxu0 0.0
  %3054 = vmatpush.msra.mxu0 0.0
  %3055 = vmatpush.msra.mxu0 0.0
  %3056 = vmatpush.msra.mxu0 0.0
  %3057 = vmatpush.msra.mxu0 %v2972
  %3058 = vmatpush.msra.mxu0 %v2924
  %3059 = vmatpush.msra.mxu0 %v2876
  %3060 = vmatpush.msra.mxu0 %v2828
  %3061 = vmatpush.msra.mxu0 %v2780
  %3062 = vmatpush.msra.mxu0 %v2732
  %3063 = vmatpush.msra.mxu0 %v2684
  %3064 = vmatpush.msra.mxu0 %v2636
  %3065 = vmatpush.msra.mxu0 %v2517
  %3066 = vmatmul.f32.gmra.mxu0 %v2988
  %v3067 = vpop.f32.mrf.mxu0
  %v3068 = vadd.f32 0.0, %v3067
  %3069 = vdwg.mxu0
  %3070 = vmatpush.msra.mxu0 0.0
  %3071 = vmatpush.msra.mxu0 0.0
  %3072 = vmatpush.msra.mxu0 0.0
  %3073 = vmatpush.msra.mxu0 0.0
  %3074 = vmatpush.msra.mxu0 0.0
  %3075 = vmatpush.msra.mxu0 0.0
  %3076 = vmatpush.msra.mxu0 0.0
  %3077 = vmatpush.msra.mxu0 %v2973
  %3078 = vmatpush.msra.mxu0 %v2925
  %3079 = vmatpush.msra.mxu0 %v2877
  %3080 = vmatpush.msra.mxu0 %v2829
  %3081 = vmatpush.msra.mxu0 %v2781
  %3082 = vmatpush.msra.mxu0 %v2733
  %3083 = vmatpush.msra.mxu0 %v2685
  %3084 = vmatpush.msra.mxu0 %v2637
  %3085 = vmatpush.msra.mxu0 %v2518
  %3086 = vmatmul.f32.gmra.mxu0 %v2988
  %v3087 = vpop.f32.mrf.mxu0
  %v3088 = vadd.f32 0.0, %v3087
  %3089 = vdwg.mxu0
  %3090 = vmatpush.msra.mxu0 0.0
  %3091 = vmatpush.msra.mxu0 0.0
  %3092 = vmatpush.msra.mxu0 0.0
  %3093 = vmatpush.msra.mxu0 0.0
  %3094 = vmatpush.msra.mxu0 0.0
  %3095 = vmatpush.msra.mxu0 0.0
  %3096 = vmatpush.msra.mxu0 0.0
  %3097 = vmatpush.msra.mxu0 %v2974
  %3098 = vmatpush.msra.mxu0 %v2926
  %3099 = vmatpush.msra.mxu0 %v2878
  %3100 = vmatpush.msra.mxu0 %v2830
  %3101 = vmatpush.msra.mxu0 %v2782
  %3102 = vmatpush.msra.mxu0 %v2734
  %3103 = vmatpush.msra.mxu0 %v2686
  %3104 = vmatpush.msra.mxu0 %v2638
  %3105 = vmatpush.msra.mxu0 %v2519
  %3106 = vmatmul.f32.gmra.mxu0 %v2988
  %v3107 = vpop.f32.mrf.mxu0
  %v3108 = vadd.f32 0.0, %v3107
  %3109 = vdwg.mxu0
  %3110 = vmatpush.msra.mxu0 0.0
  %3111 = vmatpush.msra.mxu0 0.0
  %3112 = vmatpush.msra.mxu0 0.0
  %3113 = vmatpush.msra.mxu0 0.0
  %3114 = vmatpush.msra.mxu0 0.0
  %3115 = vmatpush.msra.mxu0 0.0
  %3116 = vmatpush.msra.mxu0 0.0
  %3117 = vmatpush.msra.mxu0 %v2975
  %3118 = vmatpush.msra.mxu0 %v2927
  %3119 = vmatpush.msra.mxu0 %v2879
  %3120 = vmatpush.msra.mxu0 %v2831
  %3121 = vmatpush.msra.mxu0 %v2783
  %3122 = vmatpush.msra.mxu0 %v2735
  %3123 = vmatpush.msra.mxu0 %v2687
  %3124 = vmatpush.msra.mxu0 %v2639
  %3125 = vmatpush.msra.mxu0 %v2520
  %3126 = vmatmul.f32.gmra.mxu0 %v2988
  %v3127 = vpop.f32.mrf.mxu0
  %v3128 = vadd.f32 0.0, %v3127
  %3129 = vdwg.mxu0
  %3130 = vmatpush.msra.mxu0 0.0
  %3131 = vmatpush.msra.mxu0 0.0
  %3132 = vmatpush.msra.mxu0 0.0
  %3133 = vmatpush.msra.mxu0 0.0
  %3134 = vmatpush.msra.mxu0 0.0
  %3135 = vmatpush.msra.mxu0 0.0
  %3136 = vmatpush.msra.mxu0 0.0
  %3137 = vmatpush.msra.mxu0 %v2976
  %3138 = vmatpush.msra.mxu0 %v2928
  %3139 = vmatpush.msra.mxu0 %v2880
  %3140 = vmatpush.msra.mxu0 %v2832
  %3141 = vmatpush.msra.mxu0 %v2784
  %3142 = vmatpush.msra.mxu0 %v2736
  %3143 = vmatpush.msra.mxu0 %v2688
  %3144 = vmatpush.msra.mxu0 %v2640
  %3145 = vmatpush.msra.mxu0 %v2521
  %3146 = vmatmul.f32.gmra.mxu0 %v2988
  %v3147 = vpop.f32.mrf.mxu0
  %v3148 = vadd.f32 0.0, %v3147
  %3149 = vdwg.mxu0
  %3150 = vmatpush.msra.mxu0 0.0
  %3151 = vmatpush.msra.mxu0 0.0
  %3152 = vmatpush.msra.mxu0 0.0
  %3153 = vmatpush.msra.mxu0 0.0
  %3154 = vmatpush.msra.mxu0 0.0
  %3155 = vmatpush.msra.mxu0 0.0
  %3156 = vmatpush.msra.mxu0 0.0
  %3157 = vmatpush.msra.mxu0 %v2977
  %3158 = vmatpush.msra.mxu0 %v2929
  %3159 = vmatpush.msra.mxu0 %v2881
  %3160 = vmatpush.msra.mxu0 %v2833
  %3161 = vmatpush.msra.mxu0 %v2785
  %3162 = vmatpush.msra.mxu0 %v2737
  %3163 = vmatpush.msra.mxu0 %v2689
  %3164 = vmatpush.msra.mxu0 %v2641
  %3165 = vmatpush.msra.mxu0 %v2522
  %3166 = vmatmul.f32.gmra.mxu0 %v2988
  %v3167 = vpop.f32.mrf.mxu0
  %v3168 = vadd.f32 0.0, %v3167
  %3169 = vdwg.mxu0
  %v3170 = vld [vmem:[%s9] sm:$0x7]
  %v3171 = vld [vmem:[%s10] sm:$0x7]
  %v3172 = vsel %vm1208, %v3008, 0.0
  %v3173 = vsel %vm1208, %v3028, 0.0
  %v3174 = vadd.f32 %v3172, %v3173
  %v3175 = vsel %vm1208, %v3048, 0.0
  %v3176 = vadd.f32 %v3174, %v3175
  %v3177 = vsel %vm1208, %v3068, 0.0
  %v3178 = vadd.f32 %v3176, %v3177
  %v3179 = vsel %vm1208, %v3088, 0.0
  %v3180 = vadd.f32 %v3178, %v3179
  %v3181 = vsel %vm1208, %v3108, 0.0
  %v3182 = vadd.f32 %v3180, %v3181
  %v3183 = vsel %vm1208, %v3128, 0.0
  %v3184 = vadd.f32 %v3182, %v3183
  %v3185 = vsel %vm1208, %v3148, 0.0
  %v3186 = vadd.f32 %v3184, %v3185
  %v3187 = vsel %vm1208, %v3168, 0.0
  %v3188 = vadd.f32 %v3186, %v3187
  %3189 = vadd.xlane.f32.xlu0 %v3188
  %v3190 = vpop.xlane.xlu0 %3189
  %v3191 = vmul.f32 %v3190, %v1234
  %v3192 = vsub.f32 %v3008, %v3191
  %v3193 = vsub.f32 %v3028, %v3191
  %v3194 = vsub.f32 %v3048, %v3191
  %v3195 = vsub.f32 %v3068, %v3191
  %v3196 = vsub.f32 %v3088, %v3191
  %v3197 = vsub.f32 %v3108, %v3191
  %v3198 = vsub.f32 %v3128, %v3191
  %v3199 = vsub.f32 %v3148, %v3191
  %v3200 = vsub.f32 %v3168, %v3191
  %v3201 = vmul.f32 %v3192, %v3192
  %v3202 = vmul.f32 %v3193, %v3193
  %v3203 = vmul.f32 %v3194, %v3194
  %v3204 = vmul.f32 %v3195, %v3195
  %v3205 = vmul.f32 %v3196, %v3196
  %v3206 = vmul.f32 %v3197, %v3197
  %v3207 = vmul.f32 %v3198, %v3198
  %v3208 = vmul.f32 %v3199, %v3199
  %v3209 = vmul.f32 %v3200, %v3200
  %v3210 = vsel %vm1208, %v3201, 0.0
  %v3211 = vsel %vm1208, %v3202, 0.0
  %v3212 = vadd.f32 %v3210, %v3211
  %v3213 = vsel %vm1208, %v3203, 0.0
  %v3214 = vadd.f32 %v3212, %v3213
  %v3215 = vsel %vm1208, %v3204, 0.0
  %v3216 = vadd.f32 %v3214, %v3215
  %v3217 = vsel %vm1208, %v3205, 0.0
  %v3218 = vadd.f32 %v3216, %v3217
  %v3219 = vsel %vm1208, %v3206, 0.0
  %v3220 = vadd.f32 %v3218, %v3219
  %v3221 = vsel %vm1208, %v3207, 0.0
  %v3222 = vadd.f32 %v3220, %v3221
  %v3223 = vsel %vm1208, %v3208, 0.0
  %v3224 = vadd.f32 %v3222, %v3223
  %v3225 = vsel %vm1208, %v3209, 0.0
  %v3226 = vadd.f32 %v3224, %v3225
  %3227 = vadd.xlane.f32.xlu0 %v3226
  %v3228 = vpop.xlane.xlu0 %3227
  %v3229 = vmul.f32 %v3228, %v1234
  %v3230 = vadd.f32 %v3229, 1e-05
  %v3231 = vrsqrt.pop %v3230
  %v3232 = vmul.f32 %v3231, %v3230
  %v3233 = vmul.f32 %v3232, %v3231
  %v3234 = vmul.f32 0.5, %v3233
  %v3235 = vsub.f32 1.5, %v3234
  %v3236 = vmul.f32 %v3231, %v3235
  %vm3237 = vweird.f32 %v3230
  %vm3238 = vweird.f32 %v3231
  %vm3239 = vmor %vm3237, %vm3238
  %v3240 = vsel %vm3239, %v3231, %v3236
  %v3241 = vmul.f32 %v3192, %v3240
  %v3242 = vmul.f32 %v3193, %v3240
  %v3243 = vmul.f32 %v3194, %v3240
  %v3244 = vmul.f32 %v3195, %v3240
  %v3245 = vmul.f32 %v3196, %v3240
  %v3246 = vmul.f32 %v3197, %v3240
  %v3247 = vmul.f32 %v3198, %v3240
  %v3248 = vmul.f32 %v3199, %v3240
  %v3249 = vmul.f32 %v3200, %v3240
  %3251 = vset.pattern.permute.xlu0 0
  %3252 = vperm.xlu0 %3251, %v3170
  %v3253 = vpop.permute.xlu0 %3252
  %v3255 = vmul.f32 %v3241, %v3253
  %v3256 = vmul.f32 %v3242, %v3253
  %v3257 = vmul.f32 %v3243, %v3253
  %v3258 = vmul.f32 %v3244, %v3253
  %v3259 = vmul.f32 %v3245, %v3253
  %v3260 = vmul.f32 %v3246, %v3253
  %v3261 = vmul.f32 %v3247, %v3253
  %v3262 = vmul.f32 %v3248, %v3253
  %v3263 = vmul.f32 %v3249, %v3253
  %3265 = vset.pattern.permute.xlu0 0
  %3266 = vperm.xlu0 %3265, %v3171
  %v3267 = vpop.permute.xlu0 %3266
  %v3269 = vadd.f32 %v3255, %v3267
  %v3270 = vadd.f32 %v3256, %v3267
  %v3271 = vadd.f32 %v3257, %v3267
  %v3272 = vadd.f32 %v3258, %v3267
  %v3273 = vadd.f32 %v3259, %v3267
  %v3274 = vadd.f32 %v3260, %v3267
  %v3275 = vadd.f32 %v3261, %v3267
  %v3276 = vadd.f32 %v3262, %v3267
  %v3277 = vadd.f32 %v3263, %v3267
  %v3286 = vrot.slane %v3270, 4
  %v3287 = vrot.slane %v3272, 4
  %v3288 = vrot.slane %v3274, 4
  %v3289 = vrot.slane %v3276, 4
  %v3290 = vsel %vm1334, %v3269, %v3286
  %v3291 = vsel %vm1334, %v3271, %v3287
  %v3292 = vsel %vm1334, %v3273, %v3288
  %v3293 = vsel %vm1334, %v3275, %v3289
  %3298 = vst [vmem:[%s18] sm:$0x77] %v3290
  %3299 = vst [vmem:[%s18 + $0x8] sm:$0x77] %v3291
  %3300 = vst [vmem:[%s18 + $0x10] sm:$0x77] %v3292
  %3301 = vst [vmem:[%s18 + $0x18] sm:$0x77] %v3293
  %3302 = vst [vmem:[%s18 + $0x20] sm:$0x7] %v3277
  %v3303 = vsub.f32 %v3269, %v1313
  %v3304 = vsub.f32 %v3270, %v1314
  %v3305 = vsub.f32 %v3271, %v1315
  %v3306 = vsub.f32 %v3272, %v1316
  %v3307 = vsub.f32 %v3273, %v1317
  %v3308 = vsub.f32 %v3274, %v1318
  %v3309 = vsub.f32 %v3275, %v1319
  %v3310 = vsub.f32 %v3276, %v1320
  %v3311 = vsub.f32 %v3277, %v1321
  %v3312 = vmul.f32 %v3303, %v3303
  %v3313 = vmul.f32 %v3304, %v3304
  %v3314 = vmul.f32 %v3305, %v3305
  %v3315 = vmul.f32 %v3306, %v3306
  %v3316 = vmul.f32 %v3307, %v3307
  %v3317 = vmul.f32 %v3308, %v3308
  %v3318 = vmul.f32 %v3309, %v3309
  %v3319 = vmul.f32 %v3310, %v3310
  %v3320 = vmul.f32 %v3311, %v3311
  %3330 = vrot.lane.b32.xlu0 %v3312, 25
  %v3331 = vpop.permute.xlu0 %3330
  %3332 = vrot.lane.b32.xlu0 %v3313, 25
  %v3333 = vpop.permute.xlu0 %3332
  %3334 = vrot.lane.b32.xlu0 %v3314, 25
  %v3335 = vpop.permute.xlu0 %3334
  %3336 = vrot.lane.b32.xlu0 %v3315, 25
  %v3337 = vpop.permute.xlu0 %3336
  %3338 = vrot.lane.b32.xlu0 %v3316, 25
  %v3339 = vpop.permute.xlu0 %3338
  %3340 = vrot.lane.b32.xlu0 %v3317, 25
  %v3341 = vpop.permute.xlu0 %3340
  %3342 = vrot.lane.b32.xlu0 %v3318, 25
  %v3343 = vpop.permute.xlu0 %3342
  %3344 = vrot.lane.b32.xlu0 %v3319, 25
  %v3345 = vpop.permute.xlu0 %3344
  %3346 = vrot.lane.b32.xlu0 %v3320, 25
  %v3347 = vpop.permute.xlu0 %3346
  %v3348 = vsel %vm341, %v3331, %v3333
  %v3349 = vsel %vm341, %v3333, %v3335
  %v3350 = vsel %vm341, %v3335, %v3337
  %v3351 = vsel %vm341, %v3337, %v3339
  %v3352 = vsel %vm341, %v3339, %v3341
  %v3353 = vsel %vm341, %v3341, %v3343
  %v3354 = vsel %vm341, %v3343, %v3345
  %v3355 = vsel %vm341, %v3345, %v3347
  %v3366 = vsel %vm341, 0.0, %v3331
  %v3367 = vsel %vm341, %v3347, 0.0
  %v3368 = vld [vmem:[%s11] sm:$0x7]
  %v3369 = vmul.f32 %v3366, %v92
  %v3370 = vmul.f32 %v3348, %v93
  %v3371 = vmul.f32 %v3349, %v94
  %v3372 = vmul.f32 %v3350, %v95
  %v3373 = vmul.f32 %v3351, %v96
  %v3374 = vmul.f32 %v3352, %v97
  %v3375 = vmul.f32 %v3353, %v98
  %v3376 = vmul.f32 %v3354, %v99
  %v3377 = vmul.f32 %v3355, %v100
  %v3378 = vmul.f32 %v3366, %v129
  %v3379 = vmul.f32 %v3348, %v147
  %v3380 = vmul.f32 %v3349, %v148
  %v3381 = vmul.f32 %v3350, %v149
  %v3382 = vmul.f32 %v3351, %v150
  %v3383 = vmul.f32 %v3352, %v151
  %v3384 = vmul.f32 %v3353, %v152
  %v3385 = vmul.f32 %v3354, %v153
  %v3386 = vmul.f32 %v3355, %v154
  %v3387 = vmul.f32 %v3367, %v145
  %v3388 = vmul.f32 %v3366, %v194
  %v3389 = vmul.f32 %v3348, %v212
  %v3390 = vmul.f32 %v3349, %v213
  %v3391 = vmul.f32 %v3350, %v214
  %v3392 = vmul.f32 %v3351, %v215
  %v3393 = vmul.f32 %v3352, %v216
  %v3394 = vmul.f32 %v3353, %v217
  %v3395 = vmul.f32 %v3354, %v218
  %v3396 = vmul.f32 %v3355, %v219
  %v3397 = vmul.f32 %v3367, %v210
  %v3398 = vmul.f32 %v3366, %v259
  %v3399 = vmul.f32 %v3348, %v277
  %v3400 = vmul.f32 %v3349, %v278
  %v3401 = vmul.f32 %v3350, %v279
  %v3402 = vmul.f32 %v3351, %v280
  %v3403 = vmul.f32 %v3352, %v281
  %v3404 = vmul.f32 %v3353, %v282
  %v3405 = vmul.f32 %v3354, %v283
  %v3406 = vmul.f32 %v3355, %v284
  %v3407 = vmul.f32 %v3367, %v275
  %v3408 = vmul.f32 %v3366, %v324
  %v3409 = vmul.f32 %v3348, %v342
  %v3410 = vmul.f32 %v3349, %v343
  %v3411 = vmul.f32 %v3350, %v344
  %v3412 = vmul.f32 %v3351, %v345
  %v3413 = vmul.f32 %v3352, %v346
  %v3414 = vmul.f32 %v3353, %v347
  %v3415 = vmul.f32 %v3354, %v348
  %v3416 = vmul.f32 %v3355, %v349
  %v3417 = vmul.f32 %v3367, %v340
  %v3418 = vmul.f32 %v3366, %v389
  %v3419 = vmul.f32 %v3348, %v407
  %v3420 = vmul.f32 %v3349, %v408
  %v3421 = vmul.f32 %v3350, %v409
  %v3422 = vmul.f32 %v3351, %v410
  %v3423 = vmul.f32 %v3352, %v411
  %v3424 = vmul.f32 %v3353, %v412
  %v3425 = vmul.f32 %v3354, %v413
  %v3426 = vmul.f32 %v3355, %v414
  %v3427 = vmul.f32 %v3367, %v405
  %v3428 = vmul.f32 %v3366, %v454
  %v3429 = vmul.f32 %v3348, %v472
  %v3430 = vmul.f32 %v3349, %v473
  %v3431 = vmul.f32 %v3350, %v474
  %v3432 = vmul.f32 %v3351, %v475
  %v3433 = vmul.f32 %v3352, %v476
  %v3434 = vmul.f32 %v3353, %v477
  %v3435 = vmul.f32 %v3354, %v478
  %v3436 = vmul.f32 %v3355, %v479
  %v3437 = vmul.f32 %v3367, %v470
  %v3438 = vmul.f32 %v3366, %v519
  %v3439 = vmul.f32 %v3348, %v537
  %v3440 = vmul.f32 %v3349, %v538
  %v3441 = vmul.f32 %v3350, %v539
  %v3442 = vmul.f32 %v3351, %v540
  %v3443 = vmul.f32 %v3352, %v541
  %v3444 = vmul.f32 %v3353, %v542
  %v3445 = vmul.f32 %v3354, %v543
  %v3446 = vmul.f32 %v3355, %v544
  %v3447 = vmul.f32 %v3367, %v535
  %v3448 = vmul.f32 %v3366, %v584
  %v3449 = vmul.f32 %v3348, %v602
  %v3450 = vmul.f32 %v3349, %v603
  %v3451 = vmul.f32 %v3350, %v604
  %v3452 = vmul.f32 %v3351, %v605
  %v3453 = vmul.f32 %v3352, %v606
  %v3454 = vmul.f32 %v3353, %v607
  %v3455 = vmul.f32 %v3354, %v608
  %v3456 = vmul.f32 %v3355, %v609
  %v3457 = vmul.f32 %v3367, %v600
  %v3468 = vrot.slane %v3378, 5
  %v3469 = vrot.slane %v3379, 5
  %v3470 = vrot.slane %v3380, 5
  %v3471 = vrot.slane %v3381, 5
  %v3472 = vrot.slane %v3382, 5
  %v3473 = vrot.slane %v3383, 5
  %v3474 = vrot.slane %v3384, 5
  %v3475 = vrot.slane %v3385, 5
  %v3476 = vrot.slane %v3386, 5
  %v3477 = vrot.slane %v3387, 5
  %3478 = vrot.lane.b32.xlu0 %v3468, 127
  %v3479 = vpop.permute.xlu0 %3478
  %3480 = vrot.lane.b32.xlu0 %v3469, 127
  %v3481 = vpop.permute.xlu0 %3480
  %3482 = vrot.lane.b32.xlu0 %v3470, 127
  %v3483 = vpop.permute.xlu0 %3482
  %3484 = vrot.lane.b32.xlu0 %v3471, 127
  %v3485 = vpop.permute.xlu0 %3484
  %3486 = vrot.lane.b32.xlu0 %v3472, 127
  %v3487 = vpop.permute.xlu0 %3486
  %3488 = vrot.lane.b32.xlu0 %v3473, 127
  %v3489 = vpop.permute.xlu0 %3488
  %3490 = vrot.lane.b32.xlu0 %v3474, 127
  %v3491 = vpop.permute.xlu0 %3490
  %3492 = vrot.lane.b32.xlu0 %v3475, 127
  %v3493 = vpop.permute.xlu0 %3492
  %3494 = vrot.lane.b32.xlu0 %v3476, 127
  %v3495 = vpop.permute.xlu0 %3494
  %3496 = vrot.lane.b32.xlu0 %v3477, 127
  %v3497 = vpop.permute.xlu0 %3496
  %v3498 = vsel %vm660, %v3479, %v3481
  %v3499 = vsel %vm660, %v3481, %v3483
  %v3500 = vsel %vm660, %v3483, %v3485
  %v3501 = vsel %vm660, %v3485, %v3487
  %v3502 = vsel %vm660, %v3487, %v3489
  %v3503 = vsel %vm660, %v3489, %v3491
  %v3504 = vsel %vm660, %v3491, %v3493
  %v3505 = vsel %vm660, %v3493, %v3495
  %v3506 = vsel %vm660, %v3495, %v3497
  %v3526 = vrot.slane %v3388, 2
  %v3527 = vrot.slane %v3389, 2
  %v3528 = vrot.slane %v3390, 2
  %v3529 = vrot.slane %v3391, 2
  %v3530 = vrot.slane %v3392, 2
  %v3531 = vrot.slane %v3393, 2
  %v3532 = vrot.slane %v3394, 2
  %v3533 = vrot.slane %v3395, 2
  %v3534 = vrot.slane %v3396, 2
  %v3535 = vrot.slane %v3397, 2
  %3536 = vrot.lane.b32.xlu0 %v3526, 126
  %v3537 = vpop.permute.xlu0 %3536
  %3538 = vrot.lane.b32.xlu0 %v3527, 126
  %v3539 = vpop.permute.xlu0 %3538
  %3540 = vrot.lane.b32.xlu0 %v3528, 126
  %v3541 = vpop.permute.xlu0 %3540
  %3542 = vrot.lane.b32.xlu0 %v3529, 126
  %v3543 = vpop.permute.xlu0 %3542
  %3544 = vrot.lane.b32.xlu0 %v3530, 126
  %v3545 = vpop.permute.xlu0 %3544
  %3546 = vrot.lane.b32.xlu0 %v3531, 126
  %v3547 = vpop.permute.xlu0 %3546
  %3548 = vrot.lane.b32.xlu0 %v3532, 126
  %v3549 = vpop.permute.xlu0 %3548
  %3550 = vrot.lane.b32.xlu0 %v3533, 126
  %v3551 = vpop.permute.xlu0 %3550
  %3552 = vrot.lane.b32.xlu0 %v3534, 126
  %v3553 = vpop.permute.xlu0 %3552
  %3554 = vrot.lane.b32.xlu0 %v3535, 126
  %v3555 = vpop.permute.xlu0 %3554
  %v3556 = vsel %vm709, %v3537, %v3539
  %v3557 = vsel %vm709, %v3539, %v3541
  %v3558 = vsel %vm709, %v3541, %v3543
  %v3559 = vsel %vm709, %v3543, %v3545
  %v3560 = vsel %vm709, %v3545, %v3547
  %v3561 = vsel %vm709, %v3547, %v3549
  %v3562 = vsel %vm709, %v3549, %v3551
  %v3563 = vsel %vm709, %v3551, %v3553
  %v3564 = vsel %vm709, %v3553, %v3555
  %v3584 = vrot.slane %v3398, 7
  %v3585 = vrot.slane %v3399, 7
  %v3586 = vrot.slane %v3400, 7
  %v3587 = vrot.slane %v3401, 7
  %v3588 = vrot.slane %v3402, 7
  %v3589 = vrot.slane %v3403, 7
  %v3590 = vrot.slane %v3404, 7
  %v3591 = vrot.slane %v3405, 7
  %v3592 = vrot.slane %v3406, 7
  %v3593 = vrot.slane %v3407, 7
  %3594 = vrot.lane.b32.xlu0 %v3584, 104
  %v3595 = vpop.permute.xlu0 %3594
  %3596 = vrot.lane.b32.xlu0 %v3585, 104
  %v3597 = vpop.permute.xlu0 %3596
  %3598 = vrot.lane.b32.xlu0 %v3586, 104
  %v3599 = vpop.permute.xlu0 %3598
  %3600 = vrot.lane.b32.xlu0 %v3587, 104
  %v3601 = vpop.permute.xlu0 %3600
  %3602 = vrot.lane.b32.xlu0 %v3588, 104
  %v3603 = vpop.permute.xlu0 %3602
  %3604 = vrot.lane.b32.xlu0 %v3589, 104
  %v3605 = vpop.permute.xlu0 %3604
  %3606 = vrot.lane.b32.xlu0 %v3590, 104
  %v3607 = vpop.permute.xlu0 %3606
  %3608 = vrot.lane.b32.xlu0 %v3591, 104
  %v3609 = vpop.permute.xlu0 %3608
  %3610 = vrot.lane.b32.xlu0 %v3592, 104
  %v3611 = vpop.permute.xlu0 %3610
  %3612 = vrot.lane.b32.xlu0 %v3593, 104
  %v3613 = vpop.permute.xlu0 %3612
  %v3614 = vsel %vm758, %v3595, %v3597
  %v3615 = vsel %vm758, %v3597, %v3599
  %v3616 = vsel %vm758, %v3599, %v3601
  %v3617 = vsel %vm758, %v3601, %v3603
  %v3618 = vsel %vm758, %v3603, %v3605
  %v3619 = vsel %vm758, %v3605, %v3607
  %v3620 = vsel %vm758, %v3607, %v3609
  %v3621 = vsel %vm758, %v3609, %v3611
  %v3622 = vsel %vm758, %v3611, %v3613
  %v3642 = vrot.slane %v3408, 4
  %v3643 = vrot.slane %v3409, 4
  %v3644 = vrot.slane %v3410, 4
  %v3645 = vrot.slane %v3411, 4
  %v3646 = vrot.slane %v3412, 4
  %v3647 = vrot.slane %v3413, 4
  %v3648 = vrot.slane %v3414, 4
  %v3649 = vrot.slane %v3415, 4
  %v3650 = vrot.slane %v3416, 4
  %v3651 = vrot.slane %v3417, 4
  %3652 = vrot.lane.b32.xlu0 %v3642, 103
  %v3653 = vpop.permute.xlu0 %3652
  %3654 = vrot.lane.b32.xlu0 %v3643, 103
  %v3655 = vpop.permute.xlu0 %3654
  %3656 = vrot.lane.b32.xlu0 %v3644, 103
  %v3657 = vpop.permute.xlu0 %3656
  %3658 = vrot.lane.b32.xlu0 %v3645, 103
  %v3659 = vpop.permute.xlu0 %3658
  %3660 = vrot.lane.b32.xlu0 %v3646, 103
  %v3661 = vpop.permute.xlu0 %3660
  %3662 = vrot.lane.b32.xlu0 %v3647, 103
  %v3663 = vpop.permute.xlu0 %3662
  %3664 = vrot.lane.b32.xlu0 %v3648, 103
  %v3665 = vpop.permute.xlu0 %3664
  %3666 = vrot.lane.b32.xlu0 %v3649, 103
  %v3667 = vpop.permute.xlu0 %3666
  %3668 = vrot.lane.b32.xlu0 %v3650, 103
  %v3669 = vpop.permute.xlu0 %3668
  %3670 = vrot.lane.b32.xlu0 %v3651, 103
  %v3671 = vpop.permute.xlu0 %3670
  %v3672 = vsel %vm807, %v3653, %v3655
  %v3673 = vsel %vm807, %v3655, %v3657
  %v3674 = vsel %vm807, %v3657, %v3659
  %v3675 = vsel %vm807, %v3659, %v3661
  %v3676 = vsel %vm807, %v3661, %v3663
  %v3677 = vsel %vm807, %v3663, %v3665
  %v3678 = vsel %vm807, %v3665, %v3667
  %v3679 = vsel %vm807, %v3667, %v3669
  %v3680 = vsel %vm807, %v3669, %v3671
  %v3700 = vrot.slane %v3418, 1
  %v3701 = vrot.slane %v3419, 1
  %v3702 = vrot.slane %v3420, 1
  %v3703 = vrot.slane %v3421, 1
  %v3704 = vrot.slane %v3422, 1
  %v3705 = vrot.slane %v3423, 1
  %v3706 = vrot.slane %v3424, 1
  %v3707 = vrot.slane %v3425, 1
  %v3708 = vrot.slane %v3426, 1
  %v3709 = vrot.slane %v3427, 1
  %3710 = vrot.lane.b32.xlu0 %v3700, 102
  %v3711 = vpop.permute.xlu0 %3710
  %3712 = vrot.lane.b32.xlu0 %v3701, 102
  %v3713 = vpop.permute.xlu0 %3712
  %3714 = vrot.lane.b32.xlu0 %v3702, 102
  %v3715 = vpop.permute.xlu0 %3714
  %3716 = vrot.lane.b32.xlu0 %v3703, 102
  %v3717 = vpop.permute.xlu0 %3716
  %3718 = vrot.lane.b32.xlu0 %v3704, 102
  %v3719 = vpop.permute.xlu0 %3718
  %3720 = vrot.lane.b32.xlu0 %v3705, 102
  %v3721 = vpop.permute.xlu0 %3720
  %3722 = vrot.lane.b32.xlu0 %v3706, 102
  %v3723 = vpop.permute.xlu0 %3722
  %3724 = vrot.lane.b32.xlu0 %v3707, 102
  %v3725 = vpop.permute.xlu0 %3724
  %3726 = vrot.lane.b32.xlu0 %v3708, 102
  %v3727 = vpop.permute.xlu0 %3726
  %3728 = vrot.lane.b32.xlu0 %v3709, 102
  %v3729 = vpop.permute.xlu0 %3728
  %v3730 = vsel %vm856, %v3711, %v3713
  %v3731 = vsel %vm856, %v3713, %v3715
  %v3732 = vsel %vm856, %v3715, %v3717
  %v3733 = vsel %vm856, %v3717, %v3719
  %v3734 = vsel %vm856, %v3719, %v3721
  %v3735 = vsel %vm856, %v3721, %v3723
  %v3736 = vsel %vm856, %v3723, %v3725
  %v3737 = vsel %vm856, %v3725, %v3727
  %v3738 = vsel %vm856, %v3727, %v3729
  %v3758 = vrot.slane %v3428, 6
  %v3759 = vrot.slane %v3429, 6
  %v3760 = vrot.slane %v3430, 6
  %v3761 = vrot.slane %v3431, 6
  %v3762 = vrot.slane %v3432, 6
  %v3763 = vrot.slane %v3433, 6
  %v3764 = vrot.slane %v3434, 6
  %v3765 = vrot.slane %v3435, 6
  %v3766 = vrot.slane %v3436, 6
  %v3767 = vrot.slane %v3437, 6
  %3768 = vrot.lane.b32.xlu0 %v3758, 80
  %v3769 = vpop.permute.xlu0 %3768
  %3770 = vrot.lane.b32.xlu0 %v3759, 80
  %v3771 = vpop.permute.xlu0 %3770
  %3772 = vrot.lane.b32.xlu0 %v3760, 80
  %v3773 = vpop.permute.xlu0 %3772
  %3774 = vrot.lane.b32.xlu0 %v3761, 80
  %v3775 = vpop.permute.xlu0 %3774
  %3776 = vrot.lane.b32.xlu0 %v3762, 80
  %v3777 = vpop.permute.xlu0 %3776
  %3778 = vrot.lane.b32.xlu0 %v3763, 80
  %v3779 = vpop.permute.xlu0 %3778
  %3780 = vrot.lane.b32.xlu0 %v3764, 80
  %v3781 = vpop.permute.xlu0 %3780
  %3782 = vrot.lane.b32.xlu0 %v3765, 80
  %v3783 = vpop.permute.xlu0 %3782
  %3784 = vrot.lane.b32.xlu0 %v3766, 80
  %v3785 = vpop.permute.xlu0 %3784
  %3786 = vrot.lane.b32.xlu0 %v3767, 80
  %v3787 = vpop.permute.xlu0 %3786
  %v3788 = vsel %vm905, %v3769, %v3771
  %v3789 = vsel %vm905, %v3771, %v3773
  %v3790 = vsel %vm905, %v3773, %v3775
  %v3791 = vsel %vm905, %v3775, %v3777
  %v3792 = vsel %vm905, %v3777, %v3779
  %v3793 = vsel %vm905, %v3779, %v3781
  %v3794 = vsel %vm905, %v3781, %v3783
  %v3795 = vsel %vm905, %v3783, %v3785
  %v3796 = vsel %vm905, %v3785, %v3787
  %v3816 = vrot.slane %v3438, 3
  %v3817 = vrot.slane %v3439, 3
  %v3818 = vrot.slane %v3440, 3
  %v3819 = vrot.slane %v3441, 3
  %v3820 = vrot.slane %v3442, 3
  %v3821 = vrot.slane %v3443, 3
  %v3822 = vrot.slane %v3444, 3
  %v3823 = vrot.slane %v3445, 3
  %v3824 = vrot.slane %v3446, 3
  %v3825 = vrot.slane %v3447, 3
  %3826 = vrot.lane.b32.xlu0 %v3816, 79
  %v3827 = vpop.permute.xlu0 %3826
  %3828 = vrot.lane.b32.xlu0 %v3817, 79
  %v3829 = vpop.permute.xlu0 %3828
  %3830 = vrot.lane.b32.xlu0 %v3818, 79
  %v3831 = vpop.permute.xlu0 %3830
  %3832 = vrot.lane.b32.xlu0 %v3819, 79
  %v3833 = vpop.permute.xlu0 %3832
  %3834 = vrot.lane.b32.xlu0 %v3820, 79
  %v3835 = vpop.permute.xlu0 %3834
  %3836 = vrot.lane.b32.xlu0 %v3821, 79
  %v3837 = vpop.permute.xlu0 %3836
  %3838 = vrot.lane.b32.xlu0 %v3822, 79
  %v3839 = vpop.permute.xlu0 %3838
  %3840 = vrot.lane.b32.xlu0 %v3823, 79
  %v3841 = vpop.permute.xlu0 %3840
  %3842 = vrot.lane.b32.xlu0 %v3824, 79
  %v3843 = vpop.permute.xlu0 %3842
  %3844 = vrot.lane.b32.xlu0 %v3825, 79
  %v3845 = vpop.permute.xlu0 %3844
  %v3846 = vsel %vm954, %v3827, %v3829
  %v3847 = vsel %vm954, %v3829, %v3831
  %v3848 = vsel %vm954, %v3831, %v3833
  %v3849 = vsel %vm954, %v3833, %v3835
  %v3850 = vsel %vm954, %v3835, %v3837
  %v3851 = vsel %vm954, %v3837, %v3839
  %v3852 = vsel %vm954, %v3839, %v3841
  %v3853 = vsel %vm954, %v3841, %v3843
  %v3854 = vsel %vm954, %v3843, %v3845
  %3874 = vrot.lane.b32.xlu0 %v3448, 78
  %v3875 = vpop.permute.xlu0 %3874
  %3876 = vrot.lane.b32.xlu0 %v3449, 78
  %v3877 = vpop.permute.xlu0 %3876
  %3878 = vrot.lane.b32.xlu0 %v3450, 78
  %v3879 = vpop.permute.xlu0 %3878
  %3880 = vrot.lane.b32.xlu0 %v3451, 78
  %v3881 = vpop.permute.xlu0 %3880
  %3882 = vrot.lane.b32.xlu0 %v3452, 78
  %v3883 = vpop.permute.xlu0 %3882
  %3884 = vrot.lane.b32.xlu0 %v3453, 78
  %v3885 = vpop.permute.xlu0 %3884
  %3886 = vrot.lane.b32.xlu0 %v3454, 78
  %v3887 = vpop.permute.xlu0 %3886
  %3888 = vrot.lane.b32.xlu0 %v3455, 78
  %v3889 = vpop.permute.xlu0 %3888
  %3890 = vrot.lane.b32.xlu0 %v3456, 78
  %v3891 = vpop.permute.xlu0 %3890
  %3892 = vrot.lane.b32.xlu0 %v3457, 78
  %v3893 = vpop.permute.xlu0 %3892
  %v3894 = vsel %vm1003, %v3875, %v3877
  %v3895 = vsel %vm1003, %v3877, %v3879
  %v3896 = vsel %vm1003, %v3879, %v3881
  %v3897 = vsel %vm1003, %v3881, %v3883
  %v3898 = vsel %vm1003, %v3883, %v3885
  %v3899 = vsel %vm1003, %v3885, %v3887
  %v3900 = vsel %vm1003, %v3887, %v3889
  %v3901 = vsel %vm1003, %v3889, %v3891
  %v3902 = vsel %vm1003, %v3891, %v3893
  %v3903 = vsel %vm1208, %v3369, %v3498
  %v3904 = vsel %vm1208, %v3370, %v3499
  %v3905 = vsel %vm1208, %v3371, %v3500
  %v3906 = vsel %vm1208, %v3372, %v3501
  %v3907 = vsel %vm1208, %v3373, %v3502
  %v3908 = vsel %vm1208, %v3374, %v3503
  %v3909 = vsel %vm1208, %v3375, %v3504
  %v3910 = vsel %vm1208, %v3376, %v3505
  %v3911 = vsel %vm1208, %v3377, %v3506
  %vm3912 = vcmask 1045504
  %v3913 = vsel %vm3912, %v3903, %v3556
  %v3914 = vsel %vm3912, %v3904, %v3557
  %v3915 = vsel %vm3912, %v3905, %v3558
  %v3916 = vsel %vm3912, %v3906, %v3559
  %v3917 = vsel %vm3912, %v3907, %v3560
  %v3918 = vsel %vm3912, %v3908, %v3561
  %v3919 = vsel %vm3912, %v3909, %v3562
  %v3920 = vsel %vm3912, %v3910, %v3563
  %v3921 = vsel %vm3912, %v3911, %v3564
  %vm3922 = vcmask 1040384
  %v3923 = vsel %vm3922, %v3556, %v3614
  %v3924 = vsel %vm3922, %v3557, %v3615
  %v3925 = vsel %vm3922, %v3558, %v3616
  %v3926 = vsel %vm3922, %v3559, %v3617
  %v3927 = vsel %vm3922, %v3560, %v3618
  %v3928 = vsel %vm3922, %v3561, %v3619
  %v3929 = vsel %vm3922, %v3562, %v3620
  %v3930 = vsel %vm3922, %v3563, %v3621
  %v3931 = vsel %vm3922, %v3564, %v3622
  %v3932 = vsel %vm1334, %v3923, %v3672
  %v3933 = vsel %vm1334, %v3924, %v3673
  %v3934 = vsel %vm1334, %v3925, %v3674
  %v3935 = vsel %vm1334, %v3926, %v3675
  %v3936 = vsel %vm1334, %v3927, %v3676
  %v3937 = vsel %vm1334, %v3928, %v3677
  %v3938 = vsel %vm1334, %v3929, %v3678
  %v3939 = vsel %vm1334, %v3930, %v3679
  %v3940 = vsel %vm1334, %v3931, %v3680
  %vm3941 = vcmask 1046528
  %v3942 = vsel %vm3941, %v3932, %v3730
  %v3943 = vsel %vm3941, %v3933, %v3731
  %v3944 = vsel %vm3941, %v3934, %v3732
  %v3945 = vsel %vm3941, %v3935, %v3733
  %v3946 = vsel %vm3941, %v3936, %v3734
  %v3947 = vsel %vm3941, %v3937, %v3735
  %v3948 = vsel %vm3941, %v3938, %v3736
  %v3949 = vsel %vm3941, %v3939, %v3737
  %v3950 = vsel %vm3941, %v3940, %v3738
  %vm3951 = vcmask 1041408
  %v3952 = vsel %vm3951, %v3730, %v3788
  %v3953 = vsel %vm3951, %v3731, %v3789
  %v3954 = vsel %vm3951, %v3732, %v3790
  %v3955 = vsel %vm3951, %v3733, %v3791
  %v3956 = vsel %vm3951, %v3734, %v3792
  %v3957 = vsel %vm3951, %v3735, %v3793
  %v3958 = vsel %vm3951, %v3736, %v3794
  %v3959 = vsel %vm3951, %v3737, %v3795
  %v3960 = vsel %vm3951, %v3738, %v3796
  %vm3961 = vcmask 1044480
  %v3962 = vsel %vm3961, %v3952, %v3846
  %v3963 = vsel %vm3961, %v3953, %v3847
  %v3964 = vsel %vm3961, %v3954, %v3848
  %v3965 = vsel %vm3961, %v3955, %v3849
  %v3966 = vsel %vm3961, %v3956, %v3850
  %v3967 = vsel %vm3961, %v3957, %v3851
  %v3968 = vsel %vm3961, %v3958, %v3852
  %v3969 = vsel %vm3961, %v3959, %v3853
  %v3970 = vsel %vm3961, %v3960, %v3854
  %vm3971 = vcmask 220160
  %v3973 = vsel %vm3971, %v3368, 0
  %v3975 = vsel %vm1208, %v3894, 0
  %v3977 = vsel %vm1208, %v3895, 0
  %v3979 = vsel %vm1208, %v3896, 0
  %v3981 = vsel %vm1208, %v3897, 0
  %v3983 = vsel %vm1208, %v3898, 0
  %v3985 = vsel %vm1208, %v3899, 0
  %v3987 = vsel %vm1208, %v3900, 0
  %v3989 = vsel %vm1208, %v3901, 0
  %v3991 = vsel %vm1208, %v3902, 0
  %3993 = vmatpush.msra.mxu0 0.0
  %3994 = vmatpush.msra.mxu0 0.0
  %3995 = vmatpush.msra.mxu0 0.0
  %3996 = vmatpush.msra.mxu0 0.0
  %3997 = vmatpush.msra.mxu0 0.0
  %3998 = vmatpush.msra.mxu0 0.0
  %3999 = vmatpush.msra.mxu0 0.0
  %4000 = vmatpush.msra.mxu0 0.0
  %4001 = vmatpush.msra.mxu0 0.0
  %4002 = vmatpush.msra.mxu0 0.0
  %4003 = vmatpush.msra.mxu0 0.0
  %4004 = vmatpush.msra.mxu0 0.0
  %4005 = vmatpush.msra.mxu0 %v3975
  %4006 = vmatpush.msra.mxu0 %v3962
  %4007 = vmatpush.msra.mxu0 %v3942
  %4008 = vmatpush.msra.mxu0 %v3913
  %4009 = vmatmul.f32.gmra.mxu0 %v3973
  %v4010 = vpop.f32.mrf.mxu0
  %v4011 = vadd.f32 0.0, %v4010
  %4012 = vdwg.mxu0
  %4013 = vmatpush.msra.mxu0 0.0
  %4014 = vmatpush.msra.mxu0 0.0
  %4015 = vmatpush.msra.mxu0 0.0
  %4016 = vmatpush.msra.mxu0 0.0
  %4017 = vmatpush.msra.mxu0 0.0
  %4018 = vmatpush.msra.mxu0 0.0
  %4019 = vmatpush.msra.mxu0 0.0
  %4020 = vmatpush.msra.mxu0 0.0
  %4021 = vmatpush.msra.mxu0 0.0
  %4022 = vmatpush.msra.mxu0 0.0
  %4023 = vmatpush.msra.mxu0 0.0
  %4024 = vmatpush.msra.mxu0 0.0
  %4025 = vmatpush.msra.mxu0 %v3977
  %4026 = vmatpush.msra.mxu0 %v3963
  %4027 = vmatpush.msra.mxu0 %v3943
  %4028 = vmatpush.msra.mxu0 %v3914
  %4029 = vmatmul.f32.gmra.mxu0 %v3973
  %v4030 = vpop.f32.mrf.mxu0
  %v4031 = vadd.f32 0.0, %v4030
  %4032 = vdwg.mxu0
  %4033 = vmatpush.msra.mxu0 0.0
  %4034 = vmatpush.msra.mxu0 0.0
  %4035 = vmatpush.msra.mxu0 0.0
  %4036 = vmatpush.msra.mxu0 0.0
  %4037 = vmatpush.msra.mxu0 0.0
  %4038 = vmatpush.msra.mxu0 0.0
  %4039 = vmatpush.msra.mxu0 0.0
  %4040 = vmatpush.msra.mxu0 0.0
  %4041 = vmatpush.msra.mxu0 0.0
  %4042 = vmatpush.msra.mxu0 0.0
  %4043 = vmatpush.msra.mxu0 0.0
  %4044 = vmatpush.msra.mxu0 0.0
  %4045 = vmatpush.msra.mxu0 %v3979
  %4046 = vmatpush.msra.mxu0 %v3964
  %4047 = vmatpush.msra.mxu0 %v3944
  %4048 = vmatpush.msra.mxu0 %v3915
  %4049 = vmatmul.f32.gmra.mxu0 %v3973
  %v4050 = vpop.f32.mrf.mxu0
  %v4051 = vadd.f32 0.0, %v4050
  %4052 = vdwg.mxu0
  %4053 = vmatpush.msra.mxu0 0.0
  %4054 = vmatpush.msra.mxu0 0.0
  %4055 = vmatpush.msra.mxu0 0.0
  %4056 = vmatpush.msra.mxu0 0.0
  %4057 = vmatpush.msra.mxu0 0.0
  %4058 = vmatpush.msra.mxu0 0.0
  %4059 = vmatpush.msra.mxu0 0.0
  %4060 = vmatpush.msra.mxu0 0.0
  %4061 = vmatpush.msra.mxu0 0.0
  %4062 = vmatpush.msra.mxu0 0.0
  %4063 = vmatpush.msra.mxu0 0.0
  %4064 = vmatpush.msra.mxu0 0.0
  %4065 = vmatpush.msra.mxu0 %v3981
  %4066 = vmatpush.msra.mxu0 %v3965
  %4067 = vmatpush.msra.mxu0 %v3945
  %4068 = vmatpush.msra.mxu0 %v3916
  %4069 = vmatmul.f32.gmra.mxu0 %v3973
  %v4070 = vpop.f32.mrf.mxu0
  %v4071 = vadd.f32 0.0, %v4070
  %4072 = vdwg.mxu0
  %4073 = vmatpush.msra.mxu0 0.0
  %4074 = vmatpush.msra.mxu0 0.0
  %4075 = vmatpush.msra.mxu0 0.0
  %4076 = vmatpush.msra.mxu0 0.0
  %4077 = vmatpush.msra.mxu0 0.0
  %4078 = vmatpush.msra.mxu0 0.0
  %4079 = vmatpush.msra.mxu0 0.0
  %4080 = vmatpush.msra.mxu0 0.0
  %4081 = vmatpush.msra.mxu0 0.0
  %4082 = vmatpush.msra.mxu0 0.0
  %4083 = vmatpush.msra.mxu0 0.0
  %4084 = vmatpush.msra.mxu0 0.0
  %4085 = vmatpush.msra.mxu0 %v3983
  %4086 = vmatpush.msra.mxu0 %v3966
  %4087 = vmatpush.msra.mxu0 %v3946
  %4088 = vmatpush.msra.mxu0 %v3917
  %4089 = vmatmul.f32.gmra.mxu0 %v3973
  %v4090 = vpop.f32.mrf.mxu0
  %v4091 = vadd.f32 0.0, %v4090
  %4092 = vdwg.mxu0
  %4093 = vmatpush.msra.mxu0 0.0
  %4094 = vmatpush.msra.mxu0 0.0
  %4095 = vmatpush.msra.mxu0 0.0
  %4096 = vmatpush.msra.mxu0 0.0
  %4097 = vmatpush.msra.mxu0 0.0
  %4098 = vmatpush.msra.mxu0 0.0
  %4099 = vmatpush.msra.mxu0 0.0
  %4100 = vmatpush.msra.mxu0 0.0
  %4101 = vmatpush.msra.mxu0 0.0
  %4102 = vmatpush.msra.mxu0 0.0
  %4103 = vmatpush.msra.mxu0 0.0
  %4104 = vmatpush.msra.mxu0 0.0
  %4105 = vmatpush.msra.mxu0 %v3985
  %4106 = vmatpush.msra.mxu0 %v3967
  %4107 = vmatpush.msra.mxu0 %v3947
  %4108 = vmatpush.msra.mxu0 %v3918
  %4109 = vmatmul.f32.gmra.mxu0 %v3973
  %v4110 = vpop.f32.mrf.mxu0
  %v4111 = vadd.f32 0.0, %v4110
  %4112 = vdwg.mxu0
  %4113 = vmatpush.msra.mxu0 0.0
  %4114 = vmatpush.msra.mxu0 0.0
  %4115 = vmatpush.msra.mxu0 0.0
  %4116 = vmatpush.msra.mxu0 0.0
  %4117 = vmatpush.msra.mxu0 0.0
  %4118 = vmatpush.msra.mxu0 0.0
  %4119 = vmatpush.msra.mxu0 0.0
  %4120 = vmatpush.msra.mxu0 0.0
  %4121 = vmatpush.msra.mxu0 0.0
  %4122 = vmatpush.msra.mxu0 0.0
  %4123 = vmatpush.msra.mxu0 0.0
  %4124 = vmatpush.msra.mxu0 0.0
  %4125 = vmatpush.msra.mxu0 %v3987
  %4126 = vmatpush.msra.mxu0 %v3968
  %4127 = vmatpush.msra.mxu0 %v3948
  %4128 = vmatpush.msra.mxu0 %v3919
  %4129 = vmatmul.f32.gmra.mxu0 %v3973
  %v4130 = vpop.f32.mrf.mxu0
  %v4131 = vadd.f32 0.0, %v4130
  %4132 = vdwg.mxu0
  %4133 = vmatpush.msra.mxu0 0.0
  %4134 = vmatpush.msra.mxu0 0.0
  %4135 = vmatpush.msra.mxu0 0.0
  %4136 = vmatpush.msra.mxu0 0.0
  %4137 = vmatpush.msra.mxu0 0.0
  %4138 = vmatpush.msra.mxu0 0.0
  %4139 = vmatpush.msra.mxu0 0.0
  %4140 = vmatpush.msra.mxu0 0.0
  %4141 = vmatpush.msra.mxu0 0.0
  %4142 = vmatpush.msra.mxu0 0.0
  %4143 = vmatpush.msra.mxu0 0.0
  %4144 = vmatpush.msra.mxu0 0.0
  %4145 = vmatpush.msra.mxu0 %v3989
  %4146 = vmatpush.msra.mxu0 %v3969
  %4147 = vmatpush.msra.mxu0 %v3949
  %4148 = vmatpush.msra.mxu0 %v3920
  %4149 = vmatmul.f32.gmra.mxu0 %v3973
  %v4150 = vpop.f32.mrf.mxu0
  %v4151 = vadd.f32 0.0, %v4150
  %4152 = vdwg.mxu0
  %4153 = vmatpush.msra.mxu0 0.0
  %4154 = vmatpush.msra.mxu0 0.0
  %4155 = vmatpush.msra.mxu0 0.0
  %4156 = vmatpush.msra.mxu0 0.0
  %4157 = vmatpush.msra.mxu0 0.0
  %4158 = vmatpush.msra.mxu0 0.0
  %4159 = vmatpush.msra.mxu0 0.0
  %4160 = vmatpush.msra.mxu0 0.0
  %4161 = vmatpush.msra.mxu0 0.0
  %4162 = vmatpush.msra.mxu0 0.0
  %4163 = vmatpush.msra.mxu0 0.0
  %4164 = vmatpush.msra.mxu0 0.0
  %4165 = vmatpush.msra.mxu0 %v3991
  %4166 = vmatpush.msra.mxu0 %v3970
  %4167 = vmatpush.msra.mxu0 %v3950
  %4168 = vmatpush.msra.mxu0 %v3921
  %4169 = vmatmul.f32.gmra.mxu0 %v3973
  %v4170 = vpop.f32.mrf.mxu0
  %v4171 = vadd.f32 0.0, %v4170
  %4172 = vdwg.mxu0
  %v4173 = vld [vmem:[%s12] sm:$0x7]
  %v4174 = vld [vmem:[%s13] sm:$0x7]
  %v4175 = vsel %vm1208, %v4011, 0.0
  %v4176 = vsel %vm1208, %v4031, 0.0
  %v4177 = vadd.f32 %v4175, %v4176
  %v4178 = vsel %vm1208, %v4051, 0.0
  %v4179 = vadd.f32 %v4177, %v4178
  %v4180 = vsel %vm1208, %v4071, 0.0
  %v4181 = vadd.f32 %v4179, %v4180
  %v4182 = vsel %vm1208, %v4091, 0.0
  %v4183 = vadd.f32 %v4181, %v4182
  %v4184 = vsel %vm1208, %v4111, 0.0
  %v4185 = vadd.f32 %v4183, %v4184
  %v4186 = vsel %vm1208, %v4131, 0.0
  %v4187 = vadd.f32 %v4185, %v4186
  %v4188 = vsel %vm1208, %v4151, 0.0
  %v4189 = vadd.f32 %v4187, %v4188
  %v4190 = vsel %vm1208, %v4171, 0.0
  %v4191 = vadd.f32 %v4189, %v4190
  %4192 = vadd.xlane.f32.xlu0 %v4191
  %v4193 = vpop.xlane.xlu0 %4192
  %v4194 = vmul.f32 %v4193, %v1234
  %v4195 = vsub.f32 %v4011, %v4194
  %v4196 = vsub.f32 %v4031, %v4194
  %v4197 = vsub.f32 %v4051, %v4194
  %v4198 = vsub.f32 %v4071, %v4194
  %v4199 = vsub.f32 %v4091, %v4194
  %v4200 = vsub.f32 %v4111, %v4194
  %v4201 = vsub.f32 %v4131, %v4194
  %v4202 = vsub.f32 %v4151, %v4194
  %v4203 = vsub.f32 %v4171, %v4194
  %v4204 = vmul.f32 %v4195, %v4195
  %v4205 = vmul.f32 %v4196, %v4196
  %v4206 = vmul.f32 %v4197, %v4197
  %v4207 = vmul.f32 %v4198, %v4198
  %v4208 = vmul.f32 %v4199, %v4199
  %v4209 = vmul.f32 %v4200, %v4200
  %v4210 = vmul.f32 %v4201, %v4201
  %v4211 = vmul.f32 %v4202, %v4202
  %v4212 = vmul.f32 %v4203, %v4203
  %v4213 = vsel %vm1208, %v4204, 0.0
  %v4214 = vsel %vm1208, %v4205, 0.0
  %v4215 = vadd.f32 %v4213, %v4214
  %v4216 = vsel %vm1208, %v4206, 0.0
  %v4217 = vadd.f32 %v4215, %v4216
  %v4218 = vsel %vm1208, %v4207, 0.0
  %v4219 = vadd.f32 %v4217, %v4218
  %v4220 = vsel %vm1208, %v4208, 0.0
  %v4221 = vadd.f32 %v4219, %v4220
  %v4222 = vsel %vm1208, %v4209, 0.0
  %v4223 = vadd.f32 %v4221, %v4222
  %v4224 = vsel %vm1208, %v4210, 0.0
  %v4225 = vadd.f32 %v4223, %v4224
  %v4226 = vsel %vm1208, %v4211, 0.0
  %v4227 = vadd.f32 %v4225, %v4226
  %v4228 = vsel %vm1208, %v4212, 0.0
  %v4229 = vadd.f32 %v4227, %v4228
  %4230 = vadd.xlane.f32.xlu0 %v4229
  %v4231 = vpop.xlane.xlu0 %4230
  %v4232 = vmul.f32 %v4231, %v1234
  %v4233 = vadd.f32 %v4232, 1e-05
  %v4234 = vrsqrt.pop %v4233
  %v4235 = vmul.f32 %v4234, %v4233
  %v4236 = vmul.f32 %v4235, %v4234
  %v4237 = vmul.f32 0.5, %v4236
  %v4238 = vsub.f32 1.5, %v4237
  %v4239 = vmul.f32 %v4234, %v4238
  %vm4240 = vweird.f32 %v4233
  %vm4241 = vweird.f32 %v4234
  %vm4242 = vmor %vm4240, %vm4241
  %v4243 = vsel %vm4242, %v4234, %v4239
  %v4244 = vmul.f32 %v4195, %v4243
  %v4245 = vmul.f32 %v4196, %v4243
  %v4246 = vmul.f32 %v4197, %v4243
  %v4247 = vmul.f32 %v4198, %v4243
  %v4248 = vmul.f32 %v4199, %v4243
  %v4249 = vmul.f32 %v4200, %v4243
  %v4250 = vmul.f32 %v4201, %v4243
  %v4251 = vmul.f32 %v4202, %v4243
  %v4252 = vmul.f32 %v4203, %v4243
  %4254 = vset.pattern.permute.xlu0 0
  %4255 = vperm.xlu0 %4254, %v4173
  %v4256 = vpop.permute.xlu0 %4255
  %v4258 = vmul.f32 %v4244, %v4256
  %v4259 = vmul.f32 %v4245, %v4256
  %v4260 = vmul.f32 %v4246, %v4256
  %v4261 = vmul.f32 %v4247, %v4256
  %v4262 = vmul.f32 %v4248, %v4256
  %v4263 = vmul.f32 %v4249, %v4256
  %v4264 = vmul.f32 %v4250, %v4256
  %v4265 = vmul.f32 %v4251, %v4256
  %v4266 = vmul.f32 %v4252, %v4256
  %4268 = vset.pattern.permute.xlu0 0
  %4269 = vperm.xlu0 %4268, %v4174
  %v4270 = vpop.permute.xlu0 %4269
  %v4272 = vadd.f32 %v4258, %v4270
  %v4273 = vadd.f32 %v4259, %v4270
  %v4274 = vadd.f32 %v4260, %v4270
  %v4275 = vadd.f32 %v4261, %v4270
  %v4276 = vadd.f32 %v4262, %v4270
  %v4277 = vadd.f32 %v4263, %v4270
  %v4278 = vadd.f32 %v4264, %v4270
  %v4279 = vadd.f32 %v4265, %v4270
  %v4280 = vadd.f32 %v4266, %v4270
  %v4281 = vld [vmem:[%s14] sm:$0x7]
  %4283 = vset.pattern.permute.xlu0 0
  %4284 = vperm.xlu0 %4283, %v4281
  %v4285 = vpop.permute.xlu0 %4284
  %v4287 = vmul.f32 %v4285, %v4272
  %v4288 = vmul.f32 %v4285, %v4273
  %v4289 = vmul.f32 %v4285, %v4274
  %v4290 = vmul.f32 %v4285, %v4275
  %v4291 = vmul.f32 %v4285, %v4276
  %v4292 = vmul.f32 %v4285, %v4277
  %v4293 = vmul.f32 %v4285, %v4278
  %v4294 = vmul.f32 %v4285, %v4279
  %v4295 = vmul.f32 %v4285, %v4280
  %v4296 = vsel %vm1208, %v4287, 0.0
  %v4297 = vrot.slane %v4296, 4
  %v4298 = vadd.f32 %v4296, %v4297
  %v4299 = vrot.slane %v4298, 2
  %v4300 = vadd.f32 %v4298, %v4299
  %v4301 = vrot.slane %v4300, 1
  %v4302 = vadd.f32 %v4300, %v4301
  %v4303 = vsel %vm1208, %v4288, 0.0
  %v4304 = vrot.slane %v4303, 4
  %v4305 = vadd.f32 %v4303, %v4304
  %v4306 = vrot.slane %v4305, 2
  %v4307 = vadd.f32 %v4305, %v4306
  %v4308 = vrot.slane %v4307, 1
  %v4309 = vadd.f32 %v4307, %v4308
  %v4310 = vsel %vm1208, %v4289, 0.0
  %v4311 = vrot.slane %v4310, 4
  %v4312 = vadd.f32 %v4310, %v4311
  %v4313 = vrot.slane %v4312, 2
  %v4314 = vadd.f32 %v4312, %v4313
  %v4315 = vrot.slane %v4314, 1
  %v4316 = vadd.f32 %v4314, %v4315
  %v4317 = vsel %vm1208, %v4290, 0.0
  %v4318 = vrot.slane %v4317, 4
  %v4319 = vadd.f32 %v4317, %v4318
  %v4320 = vrot.slane %v4319, 2
  %v4321 = vadd.f32 %v4319, %v4320
  %v4322 = vrot.slane %v4321, 1
  %v4323 = vadd.f32 %v4321, %v4322
  %v4324 = vsel %vm1208, %v4291, 0.0
  %v4325 = vrot.slane %v4324, 4
  %v4326 = vadd.f32 %v4324, %v4325
  %v4327 = vrot.slane %v4326, 2
  %v4328 = vadd.f32 %v4326, %v4327
  %v4329 = vrot.slane %v4328, 1
  %v4330 = vadd.f32 %v4328, %v4329
  %v4331 = vsel %vm1208, %v4292, 0.0
  %v4332 = vrot.slane %v4331, 4
  %v4333 = vadd.f32 %v4331, %v4332
  %v4334 = vrot.slane %v4333, 2
  %v4335 = vadd.f32 %v4333, %v4334
  %v4336 = vrot.slane %v4335, 1
  %v4337 = vadd.f32 %v4335, %v4336
  %v4338 = vsel %vm1208, %v4293, 0.0
  %v4339 = vrot.slane %v4338, 4
  %v4340 = vadd.f32 %v4338, %v4339
  %v4341 = vrot.slane %v4340, 2
  %v4342 = vadd.f32 %v4340, %v4341
  %v4343 = vrot.slane %v4342, 1
  %v4344 = vadd.f32 %v4342, %v4343
  %v4345 = vsel %vm1208, %v4294, 0.0
  %v4346 = vrot.slane %v4345, 4
  %v4347 = vadd.f32 %v4345, %v4346
  %v4348 = vrot.slane %v4347, 2
  %v4349 = vadd.f32 %v4347, %v4348
  %v4350 = vrot.slane %v4349, 1
  %v4351 = vadd.f32 %v4349, %v4350
  %v4352 = vsel %vm1208, %v4295, 0.0
  %v4353 = vrot.slane %v4352, 4
  %v4354 = vadd.f32 %v4352, %v4353
  %v4355 = vrot.slane %v4354, 2
  %v4356 = vadd.f32 %v4354, %v4355
  %v4357 = vrot.slane %v4356, 1
  %v4358 = vadd.f32 %v4356, %v4357
  %v4359 = vld [vmem:[#allocation2] sm:$0x1]
  %v4360 = vld [vmem:[#allocation3] sm:$0x1]
  %v4361 = vadd.f32 %v4302, %v4309
  %v4362 = vadd.f32 %v4361, %v4316
  %v4363 = vadd.f32 %v4362, %v4323
  %v4364 = vadd.f32 %v4363, %v4330
  %v4365 = vadd.f32 %v4364, %v4337
  %v4366 = vadd.f32 %v4365, %v4344
  %v4367 = vadd.f32 %v4366, %v4351
  %v4368 = vadd.f32 %v4367, %v4358
  %4369 = vadd.xlane.f32.xlu0 %v4368
  %v4370 = vpop.xlane.xlu0 %4369
  %v4371 = vmul.f32 %v4370, %v1234
  %v4372 = vsub.f32 %v4302, %v4371
  %v4373 = vsub.f32 %v4309, %v4371
  %v4374 = vsub.f32 %v4316, %v4371
  %v4375 = vsub.f32 %v4323, %v4371
  %v4376 = vsub.f32 %v4330, %v4371
  %v4377 = vsub.f32 %v4337, %v4371
  %v4378 = vsub.f32 %v4344, %v4371
  %v4379 = vsub.f32 %v4351, %v4371
  %v4380 = vsub.f32 %v4358, %v4371
  %v4381 = vmul.f32 %v4372, %v4372
  %v4382 = vmul.f32 %v4373, %v4373
  %v4383 = vmul.f32 %v4374, %v4374
  %v4384 = vmul.f32 %v4375, %v4375
  %v4385 = vmul.f32 %v4376, %v4376
  %v4386 = vmul.f32 %v4377, %v4377
  %v4387 = vmul.f32 %v4378, %v4378
  %v4388 = vmul.f32 %v4379, %v4379
  %v4389 = vmul.f32 %v4380, %v4380
  %v4390 = vadd.f32 %v4381, %v4382
  %v4391 = vadd.f32 %v4390, %v4383
  %v4392 = vadd.f32 %v4391, %v4384
  %v4393 = vadd.f32 %v4392, %v4385
  %v4394 = vadd.f32 %v4393, %v4386
  %v4395 = vadd.f32 %v4394, %v4387
  %v4396 = vadd.f32 %v4395, %v4388
  %v4397 = vadd.f32 %v4396, %v4389
  %4398 = vadd.xlane.f32.xlu0 %v4397
  %v4399 = vpop.xlane.xlu0 %4398
  %v4400 = vmul.f32 %v4399, %v1234
  %v4401 = vadd.f32 %v4400, 1e-05
  %v4402 = vrsqrt.pop %v4401
  %v4403 = vmul.f32 %v4402, %v4401
  %v4404 = vmul.f32 %v4403, %v4402
  %v4405 = vmul.f32 0.5, %v4404
  %v4406 = vsub.f32 1.5, %v4405
  %v4407 = vmul.f32 %v4402, %v4406
  %vm4408 = vweird.f32 %v4401
  %vm4409 = vweird.f32 %v4402
  %vm4410 = vmor %vm4408, %vm4409
  %v4411 = vsel %vm4410, %v4402, %v4407
  %v4412 = vmul.f32 %v4372, %v4411
  %v4413 = vmul.f32 %v4373, %v4411
  %v4414 = vmul.f32 %v4374, %v4411
  %v4415 = vmul.f32 %v4375, %v4411
  %v4416 = vmul.f32 %v4376, %v4411
  %v4417 = vmul.f32 %v4377, %v4411
  %v4418 = vmul.f32 %v4378, %v4411
  %v4419 = vmul.f32 %v4379, %v4411
  %v4420 = vmul.f32 %v4380, %v4411
  %4422 = vset.pattern.permute.xlu0 0
  %4423 = vperm.xlu0 %4422, %v4359
  %v4424 = vpop.permute.xlu0 %4423
  %v4426 = vperm.slane %v4424, 0
  %v4427 = vmul.f32 %v4412, %v4426
  %v4428 = vmul.f32 %v4413, %v4426
  %v4429 = vmul.f32 %v4414, %v4426
  %v4430 = vmul.f32 %v4415, %v4426
  %v4431 = vmul.f32 %v4416, %v4426
  %v4432 = vmul.f32 %v4417, %v4426
  %v4433 = vmul.f32 %v4418, %v4426
  %v4434 = vmul.f32 %v4419, %v4426
  %v4435 = vmul.f32 %v4420, %v4426
  %4437 = vset.pattern.permute.xlu0 0
  %4438 = vperm.xlu0 %4437, %v4360
  %v4439 = vpop.permute.xlu0 %4438
  %v4441 = vperm.slane %v4439, 0
  %v4442 = vadd.f32 %v4427, %v4441
  %v4443 = vadd.f32 %v4428, %v4441
  %v4444 = vadd.f32 %v4429, %v4441
  %v4445 = vadd.f32 %v4430, %v4441
  %v4446 = vadd.f32 %v4431, %v4441
  %v4447 = vadd.f32 %v4432, %v4441
  %v4448 = vadd.f32 %v4433, %v4441
  %v4449 = vadd.f32 %v4434, %v4441
  %v4450 = vadd.f32 %v4435, %v4441
  %v4459 = vrot.slane %v4443, 7
  %v4460 = vrot.slane %v4444, 6
  %v4461 = vrot.slane %v4445, 5
  %v4462 = vrot.slane %v4446, 4
  %v4463 = vrot.slane %v4447, 3
  %v4464 = vrot.slane %v4448, 2
  %v4465 = vrot.slane %v4449, 1
  %v4466 = vsel %vm3922, %v4442, %v4459
  %vm4467 = vcmask 1042434
  %v4468 = vsel %vm4467, %v4460, %v4461
  %v4469 = vsel %vm3951, %v4466, %v4468
  %vm4470 = vcmask 1044484
  %v4471 = vsel %vm4470, %v4462, %v4463
  %vm4472 = vcmask 1046534
  %v4473 = vsel %vm4472, %v4464, %v4465
  %vm4474 = vcmask 1045508
  %v4475 = vsel %vm4474, %v4471, %v4473
  %v4476 = vsel %vm1334, %v4469, %v4475
  %4478 = vst [vmem:[%s17] sm:$0xff] %v4476
  %v4479 = vlaneseq
  %vm4480 = vcmp.ge.s32.totalorder %v4479, 0
  %vm4481 = vcmp.lt.s32.totalorder %v4479, 128
  %vm4482 = vmand %vm4480, %vm4481
  %4483 = vst.msk [vmem:[%s17 + $0x8] sm:$0x1] %vm4482, %v4450
  // Predicated region
  $region70: #{generate_sparse_mask_forward.3} parent=0 // pred_check
    _
  $region71: #{generate_sparse_mask_forward.3} parent=0 // pred_check_branch
    %4485 = sbr.rel (0) target = $region73
  $region72: #{generate_sparse_mask_forward.3} parent=0 // pred_region
    _
  $region73: #{generate_sparse_mask_forward.3} parent=0 // pred_fallthru
    _
  // Predicated region
  $region74: #{generate_sparse_mask_forward.3} parent=0 // pred_check
    _
  $region75: #{generate_sparse_mask_forward.3} parent=0 // pred_check_branch
    %4487 = sbr.rel (0) target = $region77
  $region76: #{generate_sparse_mask_forward.3} parent=0 // pred_region
    _
  $region77: #{generate_sparse_mask_forward.3} parent=0 // pred_fallthru
    _
  // Predicated region
  $region78: #{generate_sparse_mask_forward.3} parent=0 // pred_check
    _
  $region79: #{generate_sparse_mask_forward.3} parent=0 // pred_check_branch
    %4489 = sbr.rel (0) target = $region81
  $region80: #{generate_sparse_mask_forward.3} parent=0 // pred_region
    _
  $region81: #{generate_sparse_mask_forward.3} parent=0 // pred_fallthru
    _
  // Predicated region
  $region82: #{generate_sparse_mask_forward.3} parent=0 // pred_check
    _
  $region83: #{generate_sparse_mask_forward.3} parent=0 // pred_check_branch
    %4491 = sbr.rel (0) target = $region85
  $region84: #{generate_sparse_mask_forward.3} parent=0 // pred_region
    _
  $region85: #{generate_sparse_mask_forward.3} parent=0 // pred_fallthru
    _
  // Predicated region
  $region86: #{generate_sparse_mask_forward.3} parent=0 // pred_check
    _
  $region87: #{generate_sparse_mask_forward.3} parent=0 // pred_check_branch
    %4493 = sbr.rel (0) target = $region89
  $region88: #{generate_sparse_mask_forward.3} parent=0 // pred_region
    _
  $region89: #{generate_sparse_mask_forward.3} parent=0 // pred_fallthru
    _
  // Predicated region
  $region90: #{generate_sparse_mask_forward.3} parent=0 // pred_check
    _
  $region91: #{generate_sparse_mask_forward.3} parent=0 // pred_check_branch
    %4495 = sbr.rel (0) target = $region93
  $region92: #{generate_sparse_mask_forward.3} parent=0 // pred_region
    _
  $region93: #{generate_sparse_mask_forward.3} parent=0 // pred_fallthru
    _

</llo_original>
